<compile_context>
chip_gen: v7x
topology: tpu7x:2x2x1
jax: 0.10.0
libtpu: 0.0.40
codegen_flags: <defaults>
</compile_context>

<pallas_src>
import functools

import jax
import jax.numpy as jnp
from jax.experimental import pallas as pl
from jax.experimental.pallas import tpu as pltpu


def _round_up(x, m):
    return ((x + m - 1) // m) * m


def _sublane_pack(dtype):
    # Rows per packed sublane tile: f32 -> 8, bf16 -> 16, int8/fp8 -> 32.
    return 8 * max(1, 4 // jnp.dtype(dtype).itemsize)


def _fused_mimo_kernel(n_stages, x_ref, y_ref, *refs):
    """All MIMO stages fused: (x, y) tile -> final (x, y) tile.

    refs = (wxT_0, bx_0, wyT_0, by_0, ..., wxT_{n-1}, ..., ox_ref, oy_ref)
    Weights are pre-transposed to [in, out] (lane-dense MXU feed, bf16 by
    default); biases are f32 [1, out].  Inter-stage activations live in
    vregs/VMEM only — they never touch HBM.
    """
    param_refs = refs[: 4 * n_stages]
    ox_ref, oy_ref = refs[4 * n_stages:]

    x = x_ref[...]
    y = y_ref[...]
    for s in range(n_stages):  # statically unrolled chain of stages
        wxT_ref, bx_ref, wyT_ref, by_ref = param_refs[4 * s: 4 * s + 4]
        mxu_dt = wxT_ref.dtype
        # Lane-dense MXU matmuls (bf16 operands by default), f32 accumulation.
        hx = jnp.dot(x.astype(mxu_dt), wxT_ref[...],
                     preferred_element_type=jnp.float32)
        hy = jnp.dot(y.astype(mxu_dt), wyT_ref[...],
                     preferred_element_type=jnp.float32)
        # f32 epilogue: bias broadcast over the batch (sublane) axis + ReLU.
        # v5e's VPU/EUP have no bf16 path, so keep this in f32 and only cast
        # down at the next matmul / final store.
        x = jnp.maximum(hx + bx_ref[...].astype(jnp.float32), 0.0)
        y = jnp.maximum(hy + by_ref[...].astype(jnp.float32), 0.0)

    ox_ref[...] = x.astype(ox_ref.dtype)
    oy_ref[...] = y.astype(oy_ref.dtype)


@functools.partial(jax.jit, static_argnames=("n_stages", "batch_tile"))
def mimo_sequential_fused(x, y, flat_params, *, n_stages, batch_tile):
    """Single pallas_call over batch tiles running every stage in VMEM."""
    B, d_in_x = x.shape
    _, d_in_y = y.shape
    out_x_dim = flat_params[4 * (n_stages - 1) + 0].shape[1]  # wxT: [in, out]
    out_y_dim = flat_params[4 * (n_stages - 1) + 2].shape[1]

    pack = _sublane_pack(x.dtype)

    # Batch tile selection: big tiles amortize the ~0.35 us per-grid-step
    # overhead; small batches run as a single grid step.  No host-side
    # jnp.pad / output slicing — grid = cdiv(B, TB) and the ragged last block
    # is handled by Pallas' masked output stores (garbage padded *input* rows
    # only feed garbage *output* rows, which are never written back).
    if B <= batch_tile:
        TB = _round_up(B, pack)
    else:
        TB = _round_up(batch_tile, pack)
        n_steps = pl.cdiv(B, TB)
        if n_steps > 1 and n_steps % 2 == 1:
            # Prefer an even number of grid steps so v7x's two TensorCores
            # (sharded via the "parallel" axis) stay balanced.
            TB = _round_up(pl.cdiv(B, n_steps + 1), pack)
    grid = (pl.cdiv(B, TB),)

    in_specs = [
        pl.BlockSpec((TB, d_in_x), lambda i: (i, 0)),
        pl.BlockSpec((TB, d_in_y), lambda i: (i, 0)),
    ]
    # Weights / biases: full-array blocks with a constant index map, so they
    # are DMA'd once and stay VMEM-resident across all batch-tile grid steps.
    # TODO(synk): when D / n_stages grow on v7x (64 MiB VMEM), single-buffer
    # these constant blocks (pipeline_mode=pl.Buffered(1)).
    for p in flat_params:
        in_specs.append(pl.BlockSpec(p.shape, lambda i: (0, 0)))

    out_specs = (
        pl.BlockSpec((TB, out_x_dim), lambda i: (i, 0)),
        pl.BlockSpec((TB, out_y_dim), lambda i: (i, 0)),
    )

    # Honest cost estimate for XLA's scheduler.
    act_itemsize = jnp.dtype(x.dtype).itemsize
    flops = 0
    param_bytes = 0
    for s in range(n_stages):
        wxT = flat_params[4 * s + 0]
        wyT = flat_params[4 * s + 2]
        flops += 2 * B * wxT.shape[0] * wxT.shape[1]
        flops += 2 * B * wyT.shape[0] * wyT.shape[1]
        param_bytes += sum(int(p.size) * jnp.dtype(p.dtype).itemsize
                           for p in flat_params[4 * s: 4 * s + 4])
    act_bytes = B * (d_in_x + d_in_y + out_x_dim + out_y_dim) * act_itemsize
    bytes_accessed = param_bytes + act_bytes

    # Explicit scoped-VMEM budget: resident params + double-buffered
    # activation tiles, with headroom; capped at v7x's 64 MiB per-TC VMEM.
    tile_bytes = TB * (d_in_x + d_in_y + out_x_dim + out_y_dim) * act_itemsize
    vmem_limit = min(max(2 * (2 * param_bytes + 2 * tile_bytes) + (4 << 20),
                         32 << 20),
                     64 << 20)

    ox, oy = pl.pallas_call(
        functools.partial(_fused_mimo_kernel, n_stages),
        grid=grid,
        out_shape=(
            jax.ShapeDtypeStruct((B, out_x_dim), x.dtype),
            jax.ShapeDtypeStruct((B, out_y_dim), y.dtype),
        ),
        in_specs=in_specs,
        out_specs=out_specs,
        compiler_params=pltpu.CompilerParams(
            dimension_semantics=("parallel",),
            vmem_limit_bytes=int(vmem_limit),
        ),
        cost_estimate=pl.CostEstimate(
            flops=int(flops), transcendentals=0,
            bytes_accessed=int(bytes_accessed)),
    )(x, y, *flat_params)
    return ox, oy


class MIMOSequentialPallas:
    """JAX/Pallas equivalent of MIMOSequential for linear+ReLU MIMO stages.

    Each stage is given in PyTorch nn.Linear layout:
        (wx [out, in], bx [out], wy [out, in], by [out])
    Weights are transposed once here to lane-dense [in, out] and stored in
    `mxu_dtype` (bf16 by default: higher MXU throughput on v6e/v7x and half
    the weight DMA); biases stay f32 [1, out] for the f32 epilogue.
    """

    # TODO(synk): MIMOSequential is a generic container for arbitrary child
    # modules; only the linear+ReLU MIMO stage family is fused here.

    def __init__(self, *stage_params, batch_tile=512, mxu_dtype=jnp.bfloat16):
        flat = []
        self.stages = []
        for (wx, bx, wy, by) in stage_params:
            wxT = jnp.asarray(wx).T.astype(mxu_dtype)       # [in, out]
            bx2 = jnp.asarray(bx).reshape(1, -1).astype(jnp.float32)
            wyT = jnp.asarray(wy).T.astype(mxu_dtype)
            by2 = jnp.asarray(by).reshape(1, -1).astype(jnp.float32)
            self.stages.append((wxT, bx2, wyT, by2))
            flat.extend((wxT, bx2, wyT, by2))
        self._flat_params = tuple(flat)
        self._batch_tile = int(batch_tile)

    def __getitem__(self, idx):
        return self.stages[idx]

    def __call__(self, *args):
        x, y = args
        return mimo_sequential_fused(
            x, y, self._flat_params,
            n_stages=len(self.stages),
            batch_tile=self._batch_tile,
        )


def _reference_forward(args, stages):
    """Pure-JAX f32 reference reproducing the PyTorch semantics exactly."""
    x, y = args
    for (wx, bx, wy, by) in stages:   # PyTorch layout: w [out, in], b [out]
        x = jnp.maximum(x @ wx.T + bx, 0.0)
        y = jnp.maximum(y @ wy.T + by, 0.0)
    return x, y


if __name__ == "__main__":
    key = jax.random.PRNGKey(0)
    # B not a multiple of the batch tile -> exercises the ragged (masked)
    # last grid block; D=128 keeps every matmul operand / store lane-dense.
    B, D = 600, 128
    n_stages = 3

    keys = jax.random.split(key, 2 + 4 * n_stages)
    x = jax.random.normal(keys[0], (B, D), dtype=jnp.float32)
    y = jax.random.normal(keys[1], (B, D), dtype=jnp.float32)

    torch_layout_stages = []
    for s in range(n_stages):
        k0, k1, k2, k3 = keys[2 + 4 * s: 6 + 4 * s]
        wx = jax.random.normal(k0, (D, D), dtype=jnp.float32) * 0.1
        bx = jax.random.normal(k1, (D,), dtype=jnp.float32) * 0.1
        wy = jax.random.normal(k2, (D, D), dtype=jnp.float32) * 0.1
        by = jax.random.normal(k3, (D,), dtype=jnp.float32) * 0.1
        torch_layout_stages.append((wx, bx, wy, by))

    model = MIMOSequentialPallas(*torch_layout_stages, batch_tile=512)

    out_x, out_y = model(x, y)
    out_x = jax.block_until_ready(out_x)
    out_y = jax.block_until_ready(out_y)

    ref_x, ref_y = _reference_forward((x, y), torch_layout_stages)
    assert out_x.shape == ref_x.shape and out_y.shape == ref_y.shape
    # bf16 MXU operands vs. the f32 reference -> relaxed tolerance.
    assert jnp.allclose(out_x, ref_x, atol=5e-2, rtol=5e-2), float(
        jnp.max(jnp.abs(out_x - ref_x)))
    assert jnp.allclose(out_y, ref_y, atol=5e-2, rtol=5e-2), float(
        jnp.max(jnp.abs(out_y - ref_y)))

    print("KERNEL_OK")
</pallas_src>

<mosaic_0001>
module attributes {stable_mosaic.version = 11 : i64} {
  func.func @_fused_mimo_kernel(%arg0: i32, %arg1: memref<512x128xf32, #tpu.memory_space<vmem>>, %arg2: memref<512x128xf32, #tpu.memory_space<vmem>>, %arg3: memref<128x128xbf16, #tpu.memory_space<vmem>>, %arg4: memref<1x128xf32, #tpu.memory_space<vmem>>, %arg5: memref<128x128xbf16, #tpu.memory_space<vmem>>, %arg6: memref<1x128xf32, #tpu.memory_space<vmem>>, %arg7: memref<128x128xbf16, #tpu.memory_space<vmem>>, %arg8: memref<1x128xf32, #tpu.memory_space<vmem>>, %arg9: memref<128x128xbf16, #tpu.memory_space<vmem>>, %arg10: memref<1x128xf32, #tpu.memory_space<vmem>>, %arg11: memref<128x128xbf16, #tpu.memory_space<vmem>>, %arg12: memref<1x128xf32, #tpu.memory_space<vmem>>, %arg13: memref<128x128xbf16, #tpu.memory_space<vmem>>, %arg14: memref<1x128xf32, #tpu.memory_space<vmem>>, %arg15: memref<512x128xf32, #tpu.memory_space<vmem>>, %arg16: memref<512x128xf32, #tpu.memory_space<vmem>>) attributes {dimension_semantics = [#tpu.dimension_semantics<parallel>], iteration_bounds = array<i64: 2>, scalar_prefetch = 0 : i64, scratch_operands = 0 : i64, tpu.core_type = #tpu.core_type<tc>, window_params = [{transform_indices = @transform_0, window_bounds = array<i64: 512, 128>}, {transform_indices = @transform_1, window_bounds = array<i64: 512, 128>}, {pipeline_mode = #tpu.pipeline_mode<synchronous>, transform_indices = @transform_2, window_bounds = array<i64: 128, 128>}, {pipeline_mode = #tpu.pipeline_mode<synchronous>, transform_indices = @transform_3, window_bounds = array<i64: 1, 128>}, {pipeline_mode = #tpu.pipeline_mode<synchronous>, transform_indices = @transform_4, window_bounds = array<i64: 128, 128>}, {pipeline_mode = #tpu.pipeline_mode<synchronous>, transform_indices = @transform_5, window_bounds = array<i64: 1, 128>}, {pipeline_mode = #tpu.pipeline_mode<synchronous>, transform_indices = @transform_6, window_bounds = array<i64: 128, 128>}, {pipeline_mode = #tpu.pipeline_mode<synchronous>, transform_indices = @transform_7, window_bounds = array<i64: 1, 128>}, {pipeline_mode = #tpu.pipeline_mode<synchronous>, transform_indices = @transform_8, window_bounds = array<i64: 128, 128>}, {pipeline_mode = #tpu.pipeline_mode<synchronous>, transform_indices = @transform_9, window_bounds = array<i64: 1, 128>}, {pipeline_mode = #tpu.pipeline_mode<synchronous>, transform_indices = @transform_10, window_bounds = array<i64: 128, 128>}, {pipeline_mode = #tpu.pipeline_mode<synchronous>, transform_indices = @transform_11, window_bounds = array<i64: 1, 128>}, {pipeline_mode = #tpu.pipeline_mode<synchronous>, transform_indices = @transform_12, window_bounds = array<i64: 128, 128>}, {pipeline_mode = #tpu.pipeline_mode<synchronous>, transform_indices = @transform_13, window_bounds = array<i64: 1, 128>}, {transform_indices = @transform_14, window_bounds = array<i64: 512, 128>}, {transform_indices = @transform_15, window_bounds = array<i64: 512, 128>}]} {
    %c0 = arith.constant 0 : index
    %c0_0 = arith.constant 0 : index
    %0 = vector.load %arg1[%c0, %c0_0] : memref<512x128xf32, #tpu.memory_space<vmem>>, vector<512x128xf32>
    %c0_1 = arith.constant 0 : index
    %c0_2 = arith.constant 0 : index
    %1 = vector.load %arg2[%c0_1, %c0_2] : memref<512x128xf32, #tpu.memory_space<vmem>>, vector<512x128xf32>
    %2 = arith.truncf %0 : vector<512x128xf32> to vector<512x128xbf16>
    %c0_3 = arith.constant 0 : index
    %c0_4 = arith.constant 0 : index
    %3 = vector.load %arg3[%c0_3, %c0_4] : memref<128x128xbf16, #tpu.memory_space<vmem>>, vector<128x128xbf16>
    %cst = arith.constant dense<0.000000e+00> : vector<512x128xf32>
    %4 = tpu.matmul %2, %3, %cst {dimension_numbers = #tpu.dot_dimension_numbers<[1], [0], [0], [1], [0, 0, 1, 1], [], []>} : vector<512x128xbf16>, vector<128x128xbf16>, vector<512x128xf32> -> vector<512x128xf32>
    %5 = arith.truncf %1 : vector<512x128xf32> to vector<512x128xbf16>
    %c0_5 = arith.constant 0 : index
    %c0_6 = arith.constant 0 : index
    %6 = vector.load %arg5[%c0_5, %c0_6] : memref<128x128xbf16, #tpu.memory_space<vmem>>, vector<128x128xbf16>
    %cst_7 = arith.constant dense<0.000000e+00> : vector<512x128xf32>
    %7 = tpu.matmul %5, %6, %cst_7 {dimension_numbers = #tpu.dot_dimension_numbers<[1], [0], [0], [1], [0, 0, 1, 1], [], []>} : vector<512x128xbf16>, vector<128x128xbf16>, vector<512x128xf32> -> vector<512x128xf32>
    %c0_8 = arith.constant 0 : index
    %c0_9 = arith.constant 0 : index
    %8 = vector.load %arg4[%c0_8, %c0_9] : memref<1x128xf32, #tpu.memory_space<vmem>>, vector<1x128xf32>
    %9 = vector.broadcast %8 : vector<1x128xf32> to vector<512x128xf32>
    %10 = arith.addf %4, %9 : vector<512x128xf32>
    %cst_10 = arith.constant 0.000000e+00 : f32
    %11 = vector.broadcast %cst_10 : f32 to vector<512x128xf32>
    %12 = arith.maximumf %10, %11 : vector<512x128xf32>
    %c0_11 = arith.constant 0 : index
    %c0_12 = arith.constant 0 : index
    %13 = vector.load %arg6[%c0_11, %c0_12] : memref<1x128xf32, #tpu.memory_space<vmem>>, vector<1x128xf32>
    %14 = vector.broadcast %13 : vector<1x128xf32> to vector<512x128xf32>
    %15 = arith.addf %7, %14 : vector<512x128xf32>
    %cst_13 = arith.constant 0.000000e+00 : f32
    %16 = vector.broadcast %cst_13 : f32 to vector<512x128xf32>
    %17 = arith.maximumf %15, %16 : vector<512x128xf32>
    %18 = arith.truncf %12 : vector<512x128xf32> to vector<512x128xbf16>
    %c0_14 = arith.constant 0 : index
    %c0_15 = arith.constant 0 : index
    %19 = vector.load %arg7[%c0_14, %c0_15] : memref<128x128xbf16, #tpu.memory_space<vmem>>, vector<128x128xbf16>
    %cst_16 = arith.constant dense<0.000000e+00> : vector<512x128xf32>
    %20 = tpu.matmul %18, %19, %cst_16 {dimension_numbers = #tpu.dot_dimension_numbers<[1], [0], [0], [1], [0, 0, 1, 1], [], []>} : vector<512x128xbf16>, vector<128x128xbf16>, vector<512x128xf32> -> vector<512x128xf32>
    %21 = arith.truncf %17 : vector<512x128xf32> to vector<512x128xbf16>
    %c0_17 = arith.constant 0 : index
    %c0_18 = arith.constant 0 : index
    %22 = vector.load %arg9[%c0_17, %c0_18] : memref<128x128xbf16, #tpu.memory_space<vmem>>, vector<128x128xbf16>
    %cst_19 = arith.constant dense<0.000000e+00> : vector<512x128xf32>
    %23 = tpu.matmul %21, %22, %cst_19 {dimension_numbers = #tpu.dot_dimension_numbers<[1], [0], [0], [1], [0, 0, 1, 1], [], []>} : vector<512x128xbf16>, vector<128x128xbf16>, vector<512x128xf32> -> vector<512x128xf32>
    %c0_20 = arith.constant 0 : index
    %c0_21 = arith.constant 0 : index
    %24 = vector.load %arg8[%c0_20, %c0_21] : memref<1x128xf32, #tpu.memory_space<vmem>>, vector<1x128xf32>
    %25 = vector.broadcast %24 : vector<1x128xf32> to vector<512x128xf32>
    %26 = arith.addf %20, %25 : vector<512x128xf32>
    %cst_22 = arith.constant 0.000000e+00 : f32
    %27 = vector.broadcast %cst_22 : f32 to vector<512x128xf32>
    %28 = arith.maximumf %26, %27 : vector<512x128xf32>
    %c0_23 = arith.constant 0 : index
    %c0_24 = arith.constant 0 : index
    %29 = vector.load %arg10[%c0_23, %c0_24] : memref<1x128xf32, #tpu.memory_space<vmem>>, vector<1x128xf32>
    %30 = vector.broadcast %29 : vector<1x128xf32> to vector<512x128xf32>
    %31 = arith.addf %23, %30 : vector<512x128xf32>
    %cst_25 = arith.constant 0.000000e+00 : f32
    %32 = vector.broadcast %cst_25 : f32 to vector<512x128xf32>
    %33 = arith.maximumf %31, %32 : vector<512x128xf32>
    %34 = arith.truncf %28 : vector<512x128xf32> to vector<512x128xbf16>
    %c0_26 = arith.constant 0 : index
    %c0_27 = arith.constant 0 : index
    %35 = vector.load %arg11[%c0_26, %c0_27] : memref<128x128xbf16, #tpu.memory_space<vmem>>, vector<128x128xbf16>
    %cst_28 = arith.constant dense<0.000000e+00> : vector<512x128xf32>
    %36 = tpu.matmul %34, %35, %cst_28 {dimension_numbers = #tpu.dot_dimension_numbers<[1], [0], [0], [1], [0, 0, 1, 1], [], []>} : vector<512x128xbf16>, vector<128x128xbf16>, vector<512x128xf32> -> vector<512x128xf32>
    %37 = arith.truncf %33 : vector<512x128xf32> to vector<512x128xbf16>
    %c0_29 = arith.constant 0 : index
    %c0_30 = arith.constant 0 : index
    %38 = vector.load %arg13[%c0_29, %c0_30] : memref<128x128xbf16, #tpu.memory_space<vmem>>, vector<128x128xbf16>
    %cst_31 = arith.constant dense<0.000000e+00> : vector<512x128xf32>
    %39 = tpu.matmul %37, %38, %cst_31 {dimension_numbers = #tpu.dot_dimension_numbers<[1], [0], [0], [1], [0, 0, 1, 1], [], []>} : vector<512x128xbf16>, vector<128x128xbf16>, vector<512x128xf32> -> vector<512x128xf32>
    %c0_32 = arith.constant 0 : index
    %c0_33 = arith.constant 0 : index
    %40 = vector.load %arg12[%c0_32, %c0_33] : memref<1x128xf32, #tpu.memory_space<vmem>>, vector<1x128xf32>
    %41 = vector.broadcast %40 : vector<1x128xf32> to vector<512x128xf32>
    %42 = arith.addf %36, %41 : vector<512x128xf32>
    %cst_34 = arith.constant 0.000000e+00 : f32
    %43 = vector.broadcast %cst_34 : f32 to vector<512x128xf32>
    %44 = arith.maximumf %42, %43 : vector<512x128xf32>
    %c0_35 = arith.constant 0 : index
    %c0_36 = arith.constant 0 : index
    %45 = vector.load %arg14[%c0_35, %c0_36] : memref<1x128xf32, #tpu.memory_space<vmem>>, vector<1x128xf32>
    %46 = vector.broadcast %45 : vector<1x128xf32> to vector<512x128xf32>
    %47 = arith.addf %39, %46 : vector<512x128xf32>
    %cst_37 = arith.constant 0.000000e+00 : f32
    %48 = vector.broadcast %cst_37 : f32 to vector<512x128xf32>
    %49 = arith.maximumf %47, %48 : vector<512x128xf32>
    %c0_38 = arith.constant 0 : index
    %c0_39 = arith.constant 0 : index
    %50 = vector.load %arg15[%c0_38, %c0_39] : memref<512x128xf32, #tpu.memory_space<vmem>>, vector<512x128xf32>
    tpu.vector_store %arg15[%c0_38, %c0_39], %44 {strides = array<i32>} : memref<512x128xf32, #tpu.memory_space<vmem>>, vector<512x128xf32>,
    %c0_40 = arith.constant 0 : index
    %c0_41 = arith.constant 0 : index
    %51 = vector.load %arg16[%c0_40, %c0_41] : memref<512x128xf32, #tpu.memory_space<vmem>>, vector<512x128xf32>
    tpu.vector_store %arg16[%c0_40, %c0_41], %49 {strides = array<i32>} : memref<512x128xf32, #tpu.memory_space<vmem>>, vector<512x128xf32>,
    return
  }
  func.func @transform_0(%arg0: i32) -> (i32, i32) {
    %c0_i32 = arith.constant 0 : i32
    %c0_i32_0 = arith.constant 0 : i32
    return %arg0, %c0_i32 : i32, i32
  }
  func.func @transform_1(%arg0: i32) -> (i32, i32) {
    %c0_i32 = arith.constant 0 : i32
    %c0_i32_0 = arith.constant 0 : i32
    return %arg0, %c0_i32 : i32, i32
  }
  func.func @transform_2(%arg0: i32) -> (i32, i32) {
    %c0_i32 = arith.constant 0 : i32
    %c0_i32_0 = arith.constant 0 : i32
    %c0_i32_1 = arith.constant 0 : i32
    return %c0_i32, %c0_i32_0 : i32, i32
  }
  func.func @transform_3(%arg0: i32) -> (i32, i32) {
    %c0_i32 = arith.constant 0 : i32
    %c0_i32_0 = arith.constant 0 : i32
    %c0_i32_1 = arith.constant 0 : i32
    return %c0_i32, %c0_i32_0 : i32, i32
  }
  func.func @transform_4(%arg0: i32) -> (i32, i32) {
    %c0_i32 = arith.constant 0 : i32
    %c0_i32_0 = arith.constant 0 : i32
    %c0_i32_1 = arith.constant 0 : i32
    return %c0_i32, %c0_i32_0 : i32, i32
  }
  func.func @transform_5(%arg0: i32) -> (i32, i32) {
    %c0_i32 = arith.constant 0 : i32
    %c0_i32_0 = arith.constant 0 : i32
    %c0_i32_1 = arith.constant 0 : i32
    return %c0_i32, %c0_i32_0 : i32, i32
  }
  func.func @transform_6(%arg0: i32) -> (i32, i32) {
    %c0_i32 = arith.constant 0 : i32
    %c0_i32_0 = arith.constant 0 : i32
    %c0_i32_1 = arith.constant 0 : i32
    return %c0_i32, %c0_i32_0 : i32, i32
  }
  func.func @transform_7(%arg0: i32) -> (i32, i32) {
    %c0_i32 = arith.constant 0 : i32
    %c0_i32_0 = arith.constant 0 : i32
    %c0_i32_1 = arith.constant 0 : i32
    return %c0_i32, %c0_i32_0 : i32, i32
  }
  func.func @transform_8(%arg0: i32) -> (i32, i32) {
    %c0_i32 = arith.constant 0 : i32
    %c0_i32_0 = arith.constant 0 : i32
    %c0_i32_1 = arith.constant 0 : i32
    return %c0_i32, %c0_i32_0 : i32, i32
  }
  func.func @transform_9(%arg0: i32) -> (i32, i32) {
    %c0_i32 = arith.constant 0 : i32
    %c0_i32_0 = arith.constant 0 : i32
    %c0_i32_1 = arith.constant 0 : i32
    return %c0_i32, %c0_i32_0 : i32, i32
  }
  func.func @transform_10(%arg0: i32) -> (i32, i32) {
    %c0_i32 = arith.constant 0 : i32
    %c0_i32_0 = arith.constant 0 : i32
    %c0_i32_1 = arith.constant 0 : i32
    return %c0_i32, %c0_i32_0 : i32, i32
  }
  func.func @transform_11(%arg0: i32) -> (i32, i32) {
    %c0_i32 = arith.constant 0 : i32
    %c0_i32_0 = arith.constant 0 : i32
    %c0_i32_1 = arith.constant 0 : i32
    return %c0_i32, %c0_i32_0 : i32, i32
  }
  func.func @transform_12(%arg0: i32) -> (i32, i32) {
    %c0_i32 = arith.constant 0 : i32
    %c0_i32_0 = arith.constant 0 : i32
    %c0_i32_1 = arith.constant 0 : i32
    return %c0_i32, %c0_i32_0 : i32, i32
  }
  func.func @transform_13(%arg0: i32) -> (i32, i32) {
    %c0_i32 = arith.constant 0 : i32
    %c0_i32_0 = arith.constant 0 : i32
    %c0_i32_1 = arith.constant 0 : i32
    return %c0_i32, %c0_i32_0 : i32, i32
  }
  func.func @transform_14(%arg0: i32) -> (i32, i32) {
    %c0_i32 = arith.constant 0 : i32
    %c0_i32_0 = arith.constant 0 : i32
    return %arg0, %c0_i32 : i32, i32
  }
  func.func @transform_15(%arg0: i32) -> (i32, i32) {
    %c0_i32 = arith.constant 0 : i32
    %c0_i32_0 = arith.constant 0 : i32
    return %arg0, %c0_i32 : i32, i32
  }
}

</mosaic_0001>

<llo_original>
// kernel: mimo_sequential_fused.1
$region0: #{mimo_sequential_fused.1}
  #allocation0 [shape = 'u32[]', space=smem, size = 0x4, offset = 0x4, fixed_abs, tag = 'smem constant byte address 0x4 - core index']
  #allocation1 [shape = 'u32[144,128]{1,0:T(1,128)}', space=vmem, size = 0x12000, scoped, tag = 'internal scratch']
  %s0 = inlined_call_operand.hbm [shape: f32[600,128], index: 0, kind: input, shape index: {}]
  %s1 = inlined_call_operand.hbm [shape: f32[600,128], index: 1, kind: input, shape index: {}]
  %s2 = inlined_call_operand.hbm [shape: bf16[128,128], index: 2, kind: input, shape index: {}]
  %s3 = inlined_call_operand.vmem [shape: f32[1,128], index: 3, kind: input, shape index: {}]
  %s4 = inlined_call_operand.hbm [shape: bf16[128,128], index: 4, kind: input, shape index: {}]
  %s5 = inlined_call_operand.vmem [shape: f32[1,128], index: 5, kind: input, shape index: {}]
  %s6 = inlined_call_operand.hbm [shape: bf16[128,128], index: 6, kind: input, shape index: {}]
  %s7 = inlined_call_operand.vmem [shape: f32[1,128], index: 7, kind: input, shape index: {}]
  %s8 = inlined_call_operand.hbm [shape: bf16[128,128], index: 8, kind: input, shape index: {}]
  %s9 = inlined_call_operand.vmem [shape: f32[1,128], index: 9, kind: input, shape index: {}]
  %s10 = inlined_call_operand.hbm [shape: bf16[128,128], index: 10, kind: input, shape index: {}]
  %s11 = inlined_call_operand.vmem [shape: f32[1,128], index: 11, kind: input, shape index: {}]
  %s12 = inlined_call_operand.hbm [shape: bf16[128,128], index: 12, kind: input, shape index: {}]
  %s13 = inlined_call_operand.vmem [shape: f32[1,128], index: 13, kind: input, shape index: {}]
  %s14 = inlined_call_operand.hbm [shape: f32[600,128], index: 14, kind: output, shape index: {0}]
  %s15 = inlined_call_operand.hbm [shape: f32[600,128], index: 15, kind: output, shape index: {1}]
  %16 = xla_tuple %s14, %s15
  %s17 = sld [smem:[#allocation0]]
  $region129: #{mimo_sequential_fused.1} parent=0
    _
  %s19 = ssub.s32 1, %s17
  %s20 = scalar_select 0, %s19, %s17
  $region1: #{mimo_sequential_fused.1} parent=0
    #allocation2 [shape = 'u8[524288]{0}', space=vmem, size = 0x80000, scoped, tag = 'input window, operand 0']
    #allocation3 [shape = 's32[2]{0}', space=sflag, size = 0x8, scoped, tag = 'scoped memory for mimo_sequential_fused.1']
    #allocation4 [shape = 's32[2]{0}', space=sflag, size = 0x8, scoped, tag = 'scoped memory for mimo_sequential_fused.1']
    #allocation5 [shape = 'u8[524288]{0}', space=vmem, size = 0x80000, scoped, tag = 'input window, operand 1']
    #allocation6 [shape = 's32[2]{0}', space=sflag, size = 0x8, scoped, tag = 'scoped memory for mimo_sequential_fused.1']
    #allocation7 [shape = 'u8[32768]{0}', space=vmem, size = 0x8000, scoped, tag = 'input window, operand 2, single buffered']
    #allocation8 [shape = 'u8[32768]{0}', space=vmem, size = 0x8000, scoped, tag = 'input window, operand 4, single buffered']
    #allocation9 [shape = 's32[1]{0}', space=sflag, size = 0x4, scoped, tag = 'scoped memory for mimo_sequential_fused.1']
    #allocation10 [shape = 'u8[32768]{0}', space=vmem, size = 0x8000, scoped, tag = 'input window, operand 6, single buffered']
    #allocation11 [shape = 'u8[32768]{0}', space=vmem, size = 0x8000, scoped, tag = 'input window, operand 8, single buffered']
    #allocation12 [shape = 's32[1]{0}', space=sflag, size = 0x4, scoped, tag = 'scoped memory for mimo_sequential_fused.1']
    #allocation13 [shape = 'u8[32768]{0}', space=vmem, size = 0x8000, scoped, tag = 'input window, operand 10, single buffered']
    #allocation14 [shape = 'u8[32768]{0}', space=vmem, size = 0x8000, scoped, tag = 'input window, operand 12, single buffered']
    #allocation15 [shape = 's32[1]{0}', space=sflag, size = 0x4, scoped, tag = 'scoped memory for mimo_sequential_fused.1']
    #allocation16 [shape = 'u8[524288]{0}', space=vmem, size = 0x80000, scoped, tag = 'output window, operand 0']
    #allocation17 [shape = 'u8[524288]{0}', space=vmem, size = 0x80000, scoped, tag = 'output window, operand 1']
    #allocation18 [shape = 's32[2]{0}', space=sflag, size = 0x8, scoped, tag = 'scoped memory for mimo_sequential_fused.1']
    %21 = vsyncpa [#allocation3], 0
    %s22 = scalar_lea.sflag [#allocation3], 1
    %23 = vsyncpa %s22, 0
    %24 = vsyncpa [#allocation6], 0
    %s25 = scalar_lea.sflag [#allocation6], 1
    %26 = vsyncpa %s25, 0
    %27 = vsyncpa [#allocation9], 0
    %28 = vsyncpa [#allocation12], 0
    %29 = vsyncpa [#allocation15], 0
    %30 = vsyncpa [#allocation4], 0
    %s31 = scalar_lea.sflag [#allocation4], 1
    %32 = vsyncpa %s31, 0
    %33 = vsyncpa [#allocation18], 0
    %s34 = scalar_lea.sflag [#allocation18], 1
    %35 = vsyncpa %s34, 0
    loop: start=0, step=1, limit=4
    $region2: #{mimo_sequential_fused.1} parent=1 // loop_pre_header
      _
    $region3: #{mimo_sequential_fused.1} parent=1 // loop_header
      %s37 = sphi 0, %s41
      %p38 = scmp.ge.s32.totalorder %s37, 4
      %s47 = sphi 0, %s49
      %s50 = sphi 0, %s47
      %s51 = sphi 0, %s50
      %s67 = sphi 0, %s51
      %s73 = sphi 0, %s75
      %s76 = sphi 0, %s73
      %s77 = sphi 0, %s76
      %s93 = sphi 0, %s77
      %s97 = sphi 0, %s97
      %s99 = sphi 0, %s97
      %s100 = sphi 0, %s99
      %s114 = sphi 0, %s100
      %s118 = sphi 0, %s118
      %s120 = sphi 0, %s118
      %s121 = sphi 0, %s120
      %s135 = sphi 0, %s121
      %s139 = sphi 0, %s139
      %s141 = sphi 0, %s139
      %s142 = sphi 0, %s141
      %s156 = sphi 0, %s142
      %s160 = sphi 0, %s160
      %s162 = sphi 0, %s160
      %s163 = sphi 0, %s162
      %s177 = sphi 0, %s163
      %s181 = sphi 0, %s181
      %s183 = sphi 0, %s181
      %s184 = sphi 0, %s183
      %s198 = sphi 0, %s184
      %s202 = sphi 0, %s202
      %s204 = sphi 0, %s202
      %s205 = sphi 0, %s204
      %s219 = sphi 0, %s205
      %s223 = sphi 0, %s223
      %s225 = sphi 0, %s223
      %s226 = sphi 0, %s225
      %s240 = sphi 0, %s226
      %s244 = sphi 0, %s244
      %s246 = sphi 0, %s244
      %s247 = sphi 0, %s246
      %s261 = sphi 0, %s247
      %s265 = sphi 0, %s265
      %s267 = sphi 0, %s265
      %s268 = sphi 0, %s267
      %s282 = sphi 0, %s268
      %s286 = sphi 0, %s286
      %s288 = sphi 0, %s286
      %s289 = sphi 0, %s288
      %s303 = sphi 0, %s289
      %s307 = sphi 0, %s307
      %s309 = sphi 0, %s307
      %s310 = sphi 0, %s309
      %s324 = sphi 0, %s310
      %s328 = sphi 0, %s328
      %s330 = sphi 0, %s328
      %s331 = sphi 0, %s330
      %s345 = sphi 0, %s331
      %s351 = sphi 0, %s353
      %s354 = sphi 0, %s351
      %s355 = sphi 0, %s354
      %s371 = sphi 0, %s355
      %s377 = sphi 0, %s379
      %s380 = sphi 0, %s377
      %s381 = sphi 0, %s380
      %s397 = sphi 0, %s381
    $region4: #{mimo_sequential_fused.1} parent=1 // loop_header_branch
      %40 = sbr.rel (%p38) target = $region8
    $region5: #{mimo_sequential_fused.1} parent=1 // loop_body
      %s42 = ssub.s32 %s37, 1
      %s43 = ssub.s32 %s37, 2
      %s44 = sadd.s32 %s37, 1
      %s45 = ssub.s32 %s37, %s44
      %p46 = scmp.eq.s32.totalorder %s45, 0
      %s48 = sadd.s32 %s47, 1
      %s49 = scalar_select %p46, %s47, %s48
      %p52 = pneg %p46
      %p53 = scmp.eq.s32.totalorder %s37, 1
      %p54 = por %p52, %p53
      %p55 = scmp.ne.s32.totalorder %s47, %s50
      %p56 = scmp.eq.s32.totalorder %s37, 0
      %p57 = por %p55, %p56
      %p58 = scmp.ne.s32.totalorder %s47, %s50
      %p59 = scmp.eq.s32.totalorder %s42, 1
      %p60 = por %p58, %p59
      %p61 = scmp.ne.s32.totalorder %s50, %s51
      %p62 = scmp.eq.s32.totalorder %s42, 0
      %p63 = por %p61, %p62
      %p64 = scmp.ne.s32.totalorder %s50, %s51
      %p65 = scmp.eq.s32.totalorder %s43, 1
      %p66 = por %p64, %p65
      %p68 = scmp.ne.s32.totalorder %s51, %s67
      %p69 = scmp.eq.s32.totalorder %s43, 0
      %p70 = por %p68, %p69
      %s71 = ssub.s32 %s37, %s44
      %p72 = scmp.eq.s32.totalorder %s71, 0
      %s74 = sadd.s32 %s73, 1
      %s75 = scalar_select %p72, %s73, %s74
      %p78 = pneg %p72
      %p79 = scmp.eq.s32.totalorder %s37, 1
      %p80 = por %p78, %p79
      %p81 = scmp.ne.s32.totalorder %s73, %s76
      %p82 = scmp.eq.s32.totalorder %s37, 0
      %p83 = por %p81, %p82
      %p84 = scmp.ne.s32.totalorder %s73, %s76
      %p85 = scmp.eq.s32.totalorder %s42, 1
      %p86 = por %p84, %p85
      %p87 = scmp.ne.s32.totalorder %s76, %s77
      %p88 = scmp.eq.s32.totalorder %s42, 0
      %p89 = por %p87, %p88
      %p90 = scmp.ne.s32.totalorder %s76, %s77
      %p91 = scmp.eq.s32.totalorder %s43, 1
      %p92 = por %p90, %p91
      %p94 = scmp.ne.s32.totalorder %s77, %s93
      %p95 = scmp.eq.s32.totalorder %s43, 0
      %p96 = por %p94, %p95
      %s98 = sadd.s32 %s97, 1
      %p101 = scmp.eq.s32.totalorder %s37, 1
      %p102 = scmp.ne.s32.totalorder %s97, %s99
      %p103 = scmp.eq.s32.totalorder %s37, 0
      %p104 = por %p102, %p103
      %p105 = scmp.ne.s32.totalorder %s97, %s99
      %p106 = scmp.eq.s32.totalorder %s42, 1
      %p107 = por %p105, %p106
      %p108 = scmp.ne.s32.totalorder %s99, %s100
      %p109 = scmp.eq.s32.totalorder %s42, 0
      %p110 = por %p108, %p109
      %p111 = scmp.ne.s32.totalorder %s99, %s100
      %p112 = scmp.eq.s32.totalorder %s43, 1
      %p113 = por %p111, %p112
      %p115 = scmp.ne.s32.totalorder %s100, %s114
      %p116 = scmp.eq.s32.totalorder %s43, 0
      %p117 = por %p115, %p116
      %s119 = sadd.s32 %s118, 1
      %p122 = scmp.eq.s32.totalorder %s37, 1
      %p123 = scmp.ne.s32.totalorder %s118, %s120
      %p124 = scmp.eq.s32.totalorder %s37, 0
      %p125 = por %p123, %p124
      %p126 = scmp.ne.s32.totalorder %s118, %s120
      %p127 = scmp.eq.s32.totalorder %s42, 1
      %p128 = por %p126, %p127
      %p129 = scmp.ne.s32.totalorder %s120, %s121
      %p130 = scmp.eq.s32.totalorder %s42, 0
      %p131 = por %p129, %p130
      %p132 = scmp.ne.s32.totalorder %s120, %s121
      %p133 = scmp.eq.s32.totalorder %s43, 1
      %p134 = por %p132, %p133
      %p136 = scmp.ne.s32.totalorder %s121, %s135
      %p137 = scmp.eq.s32.totalorder %s43, 0
      %p138 = por %p136, %p137
      %s140 = sadd.s32 %s139, 1
      %p143 = scmp.eq.s32.totalorder %s37, 1
      %p144 = scmp.ne.s32.totalorder %s139, %s141
      %p145 = scmp.eq.s32.totalorder %s37, 0
      %p146 = por %p144, %p145
      %p147 = scmp.ne.s32.totalorder %s139, %s141
      %p148 = scmp.eq.s32.totalorder %s42, 1
      %p149 = por %p147, %p148
      %p150 = scmp.ne.s32.totalorder %s141, %s142
      %p151 = scmp.eq.s32.totalorder %s42, 0
      %p152 = por %p150, %p151
      %p153 = scmp.ne.s32.totalorder %s141, %s142
      %p154 = scmp.eq.s32.totalorder %s43, 1
      %p155 = por %p153, %p154
      %p157 = scmp.ne.s32.totalorder %s142, %s156
      %p158 = scmp.eq.s32.totalorder %s43, 0
      %p159 = por %p157, %p158
      %s161 = sadd.s32 %s160, 1
      %p164 = scmp.eq.s32.totalorder %s37, 1
      %p165 = scmp.ne.s32.totalorder %s160, %s162
      %p166 = scmp.eq.s32.totalorder %s37, 0
      %p167 = por %p165, %p166
      %p168 = scmp.ne.s32.totalorder %s160, %s162
      %p169 = scmp.eq.s32.totalorder %s42, 1
      %p170 = por %p168, %p169
      %p171 = scmp.ne.s32.totalorder %s162, %s163
      %p172 = scmp.eq.s32.totalorder %s42, 0
      %p173 = por %p171, %p172
      %p174 = scmp.ne.s32.totalorder %s162, %s163
      %p175 = scmp.eq.s32.totalorder %s43, 1
      %p176 = por %p174, %p175
      %p178 = scmp.ne.s32.totalorder %s163, %s177
      %p179 = scmp.eq.s32.totalorder %s43, 0
      %p180 = por %p178, %p179
      %s182 = sadd.s32 %s181, 1
      %p185 = scmp.eq.s32.totalorder %s37, 1
      %p186 = scmp.ne.s32.totalorder %s181, %s183
      %p187 = scmp.eq.s32.totalorder %s37, 0
      %p188 = por %p186, %p187
      %p189 = scmp.ne.s32.totalorder %s181, %s183
      %p190 = scmp.eq.s32.totalorder %s42, 1
      %p191 = por %p189, %p190
      %p192 = scmp.ne.s32.totalorder %s183, %s184
      %p193 = scmp.eq.s32.totalorder %s42, 0
      %p194 = por %p192, %p193
      %p195 = scmp.ne.s32.totalorder %s183, %s184
      %p196 = scmp.eq.s32.totalorder %s43, 1
      %p197 = por %p195, %p196
      %p199 = scmp.ne.s32.totalorder %s184, %s198
      %p200 = scmp.eq.s32.totalorder %s43, 0
      %p201 = por %p199, %p200
      %s203 = sadd.s32 %s202, 1
      %p206 = scmp.eq.s32.totalorder %s37, 1
      %p207 = scmp.ne.s32.totalorder %s202, %s204
      %p208 = scmp.eq.s32.totalorder %s37, 0
      %p209 = por %p207, %p208
      %p210 = scmp.ne.s32.totalorder %s202, %s204
      %p211 = scmp.eq.s32.totalorder %s42, 1
      %p212 = por %p210, %p211
      %p213 = scmp.ne.s32.totalorder %s204, %s205
      %p214 = scmp.eq.s32.totalorder %s42, 0
      %p215 = por %p213, %p214
      %p216 = scmp.ne.s32.totalorder %s204, %s205
      %p217 = scmp.eq.s32.totalorder %s43, 1
      %p218 = por %p216, %p217
      %p220 = scmp.ne.s32.totalorder %s205, %s219
      %p221 = scmp.eq.s32.totalorder %s43, 0
      %p222 = por %p220, %p221
      %s224 = sadd.s32 %s223, 1
      %p227 = scmp.eq.s32.totalorder %s37, 1
      %p228 = scmp.ne.s32.totalorder %s223, %s225
      %p229 = scmp.eq.s32.totalorder %s37, 0
      %p230 = por %p228, %p229
      %p231 = scmp.ne.s32.totalorder %s223, %s225
      %p232 = scmp.eq.s32.totalorder %s42, 1
      %p233 = por %p231, %p232
      %p234 = scmp.ne.s32.totalorder %s225, %s226
      %p235 = scmp.eq.s32.totalorder %s42, 0
      %p236 = por %p234, %p235
      %p237 = scmp.ne.s32.totalorder %s225, %s226
      %p238 = scmp.eq.s32.totalorder %s43, 1
      %p239 = por %p237, %p238
      %p241 = scmp.ne.s32.totalorder %s226, %s240
      %p242 = scmp.eq.s32.totalorder %s43, 0
      %p243 = por %p241, %p242
      %s245 = sadd.s32 %s244, 1
      %p248 = scmp.eq.s32.totalorder %s37, 1
      %p249 = scmp.ne.s32.totalorder %s244, %s246
      %p250 = scmp.eq.s32.totalorder %s37, 0
      %p251 = por %p249, %p250
      %p252 = scmp.ne.s32.totalorder %s244, %s246
      %p253 = scmp.eq.s32.totalorder %s42, 1
      %p254 = por %p252, %p253
      %p255 = scmp.ne.s32.totalorder %s246, %s247
      %p256 = scmp.eq.s32.totalorder %s42, 0
      %p257 = por %p255, %p256
      %p258 = scmp.ne.s32.totalorder %s246, %s247
      %p259 = scmp.eq.s32.totalorder %s43, 1
      %p260 = por %p258, %p259
      %p262 = scmp.ne.s32.totalorder %s247, %s261
      %p263 = scmp.eq.s32.totalorder %s43, 0
      %p264 = por %p262, %p263
      %s266 = sadd.s32 %s265, 1
      %p269 = scmp.eq.s32.totalorder %s37, 1
      %p270 = scmp.ne.s32.totalorder %s265, %s267
      %p271 = scmp.eq.s32.totalorder %s37, 0
      %p272 = por %p270, %p271
      %p273 = scmp.ne.s32.totalorder %s265, %s267
      %p274 = scmp.eq.s32.totalorder %s42, 1
      %p275 = por %p273, %p274
      %p276 = scmp.ne.s32.totalorder %s267, %s268
      %p277 = scmp.eq.s32.totalorder %s42, 0
      %p278 = por %p276, %p277
      %p279 = scmp.ne.s32.totalorder %s267, %s268
      %p280 = scmp.eq.s32.totalorder %s43, 1
      %p281 = por %p279, %p280
      %p283 = scmp.ne.s32.totalorder %s268, %s282
      %p284 = scmp.eq.s32.totalorder %s43, 0
      %p285 = por %p283, %p284
      %s287 = sadd.s32 %s286, 1
      %p290 = scmp.eq.s32.totalorder %s37, 1
      %p291 = scmp.ne.s32.totalorder %s286, %s288
      %p292 = scmp.eq.s32.totalorder %s37, 0
      %p293 = por %p291, %p292
      %p294 = scmp.ne.s32.totalorder %s286, %s288
      %p295 = scmp.eq.s32.totalorder %s42, 1
      %p296 = por %p294, %p295
      %p297 = scmp.ne.s32.totalorder %s288, %s289
      %p298 = scmp.eq.s32.totalorder %s42, 0
      %p299 = por %p297, %p298
      %p300 = scmp.ne.s32.totalorder %s288, %s289
      %p301 = scmp.eq.s32.totalorder %s43, 1
      %p302 = por %p300, %p301
      %p304 = scmp.ne.s32.totalorder %s289, %s303
      %p305 = scmp.eq.s32.totalorder %s43, 0
      %p306 = por %p304, %p305
      %s308 = sadd.s32 %s307, 1
      %p311 = scmp.eq.s32.totalorder %s37, 1
      %p312 = scmp.ne.s32.totalorder %s307, %s309
      %p313 = scmp.eq.s32.totalorder %s37, 0
      %p314 = por %p312, %p313
      %p315 = scmp.ne.s32.totalorder %s307, %s309
      %p316 = scmp.eq.s32.totalorder %s42, 1
      %p317 = por %p315, %p316
      %p318 = scmp.ne.s32.totalorder %s309, %s310
      %p319 = scmp.eq.s32.totalorder %s42, 0
      %p320 = por %p318, %p319
      %p321 = scmp.ne.s32.totalorder %s309, %s310
      %p322 = scmp.eq.s32.totalorder %s43, 1
      %p323 = por %p321, %p322
      %p325 = scmp.ne.s32.totalorder %s310, %s324
      %p326 = scmp.eq.s32.totalorder %s43, 0
      %p327 = por %p325, %p326
      %s329 = sadd.s32 %s328, 1
      %p332 = scmp.eq.s32.totalorder %s37, 1
      %p333 = scmp.ne.s32.totalorder %s328, %s330
      %p334 = scmp.eq.s32.totalorder %s37, 0
      %p335 = por %p333, %p334
      %p336 = scmp.ne.s32.totalorder %s328, %s330
      %p337 = scmp.eq.s32.totalorder %s42, 1
      %p338 = por %p336, %p337
      %p339 = scmp.ne.s32.totalorder %s330, %s331
      %p340 = scmp.eq.s32.totalorder %s42, 0
      %p341 = por %p339, %p340
      %p342 = scmp.ne.s32.totalorder %s330, %s331
      %p343 = scmp.eq.s32.totalorder %s43, 1
      %p344 = por %p342, %p343
      %p346 = scmp.ne.s32.totalorder %s331, %s345
      %p347 = scmp.eq.s32.totalorder %s43, 0
      %p348 = por %p346, %p347
      %s349 = ssub.s32 %s37, %s44
      %p350 = scmp.eq.s32.totalorder %s349, 0
      %s352 = sadd.s32 %s351, 1
      %s353 = scalar_select %p350, %s351, %s352
      %p356 = pneg %p350
      %p357 = scmp.eq.s32.totalorder %s37, 1
      %p358 = por %p356, %p357
      %p359 = scmp.ne.s32.totalorder %s351, %s354
      %p360 = scmp.eq.s32.totalorder %s37, 0
      %p361 = por %p359, %p360
      %p362 = scmp.ne.s32.totalorder %s351, %s354
      %p363 = scmp.eq.s32.totalorder %s42, 1
      %p364 = por %p362, %p363
      %p365 = scmp.ne.s32.totalorder %s354, %s355
      %p366 = scmp.eq.s32.totalorder %s42, 0
      %p367 = por %p365, %p366
      %p368 = scmp.ne.s32.totalorder %s354, %s355
      %p369 = scmp.eq.s32.totalorder %s43, 1
      %p370 = por %p368, %p369
      %p372 = scmp.ne.s32.totalorder %s355, %s371
      %p373 = scmp.eq.s32.totalorder %s43, 0
      %p374 = por %p372, %p373
      %s375 = ssub.s32 %s37, %s44
      %p376 = scmp.eq.s32.totalorder %s375, 0
      %s378 = sadd.s32 %s377, 1
      %s379 = scalar_select %p376, %s377, %s378
      %p382 = pneg %p376
      %p383 = scmp.eq.s32.totalorder %s37, 1
      %p384 = por %p382, %p383
      %p385 = scmp.ne.s32.totalorder %s377, %s380
      %p386 = scmp.eq.s32.totalorder %s37, 0
      %p387 = por %p385, %p386
      %p388 = scmp.ne.s32.totalorder %s377, %s380
      %p389 = scmp.eq.s32.totalorder %s42, 1
      %p390 = por %p388, %p389
      %p391 = scmp.ne.s32.totalorder %s380, %s381
      %p392 = scmp.eq.s32.totalorder %s42, 0
      %p393 = por %p391, %p392
      %p394 = scmp.ne.s32.totalorder %s380, %s381
      %p395 = scmp.eq.s32.totalorder %s43, 1
      %p396 = por %p394, %p395
      %p398 = scmp.ne.s32.totalorder %s381, %s397
      %p399 = scmp.eq.s32.totalorder %s43, 0
      %p400 = por %p398, %p399
      %p401 = scmp.le.s32.totalorder 1, %s37
      %p402 = scmp.lt.s32.totalorder %s37, 3
      %p403 = pnand %p401, %p402
      %p404 = pneg %p403
      // Predicated region
      $region9: #{mimo_sequential_fused.1} parent=5 // pred_check
        _
      $region10: #{mimo_sequential_fused.1} parent=5 // pred_check_branch
        %406 = sbr.rel (%p403) target = $region12
      $region11: #{mimo_sequential_fused.1} parent=5 // pred_region
        %s407 = ssub.s32 %s37, 1
        // Predicated region
        $region13: #{mimo_sequential_fused.1} parent=11 // pred_check
          %p408 = pneg %p110
        $region14: #{mimo_sequential_fused.1} parent=11 // pred_check_branch
          %410 = sbr.rel (%p408) target = $region16
        $region15: #{mimo_sequential_fused.1} parent=11 // pred_region
          %s412 = ssub.s32 1024, 1024
          %413 = vsyncadd [#allocation6], %s412
          %s414 = sshll.u32 [#allocation7], 4
          %s415 = int_to_ptr.vmem [resolvable:$true] %s414
          %420 = dma.hbm_to_vmem [thread:$0]  %s2, 1024, %s415, [#allocation6], 64, 64, 4
        $region16: #{mimo_sequential_fused.1} parent=11 // pred_fallthru
          _
        // Predicated region
        $region17: #{mimo_sequential_fused.1} parent=11 // pred_check
          %p421 = pneg %p131
        $region18: #{mimo_sequential_fused.1} parent=11 // pred_check_branch
          %423 = sbr.rel (%p421) target = $region20
        $region19: #{mimo_sequential_fused.1} parent=11 // pred_region
          _
        $region20: #{mimo_sequential_fused.1} parent=11 // pred_fallthru
          _
        // Predicated region
        $region21: #{mimo_sequential_fused.1} parent=11 // pred_check
          %p424 = pneg %p152
        $region22: #{mimo_sequential_fused.1} parent=11 // pred_check_branch
          %426 = sbr.rel (%p424) target = $region24
        $region23: #{mimo_sequential_fused.1} parent=11 // pred_region
          %s428 = ssub.s32 1024, 1024
          %429 = vsyncadd [#allocation9], %s428
          %s430 = sshll.u32 [#allocation8], 4
          %s431 = int_to_ptr.vmem [resolvable:$true] %s430
          %436 = dma.hbm_to_vmem [thread:$0]  %s4, 1024, %s431, [#allocation9], 64, 64, 4
        $region24: #{mimo_sequential_fused.1} parent=11 // pred_fallthru
          _
        // Predicated region
        $region25: #{mimo_sequential_fused.1} parent=11 // pred_check
          %p437 = pneg %p173
        $region26: #{mimo_sequential_fused.1} parent=11 // pred_check_branch
          %439 = sbr.rel (%p437) target = $region28
        $region27: #{mimo_sequential_fused.1} parent=11 // pred_region
          _
        $region28: #{mimo_sequential_fused.1} parent=11 // pred_fallthru
          _
        // Predicated region
        $region29: #{mimo_sequential_fused.1} parent=11 // pred_check
          %p440 = pneg %p194
        $region30: #{mimo_sequential_fused.1} parent=11 // pred_check_branch
          %442 = sbr.rel (%p440) target = $region32
        $region31: #{mimo_sequential_fused.1} parent=11 // pred_region
          %s444 = ssub.s32 1024, 1024
          %445 = vsyncadd [#allocation9], %s444
          %s446 = sshll.u32 [#allocation10], 4
          %s447 = int_to_ptr.vmem [resolvable:$true] %s446
          %452 = dma.hbm_to_vmem [thread:$0]  %s6, 1024, %s447, [#allocation9], 64, 64, 4
        $region32: #{mimo_sequential_fused.1} parent=11 // pred_fallthru
          _
        // Predicated region
        $region33: #{mimo_sequential_fused.1} parent=11 // pred_check
          %p453 = pneg %p215
        $region34: #{mimo_sequential_fused.1} parent=11 // pred_check_branch
          %455 = sbr.rel (%p453) target = $region36
        $region35: #{mimo_sequential_fused.1} parent=11 // pred_region
          _
        $region36: #{mimo_sequential_fused.1} parent=11 // pred_fallthru
          _
        // Predicated region
        $region37: #{mimo_sequential_fused.1} parent=11 // pred_check
          %p456 = pneg %p236
        $region38: #{mimo_sequential_fused.1} parent=11 // pred_check_branch
          %458 = sbr.rel (%p456) target = $region40
        $region39: #{mimo_sequential_fused.1} parent=11 // pred_region
          %s460 = ssub.s32 1024, 1024
          %461 = vsyncadd [#allocation12], %s460
          %s462 = sshll.u32 [#allocation11], 4
          %s463 = int_to_ptr.vmem [resolvable:$true] %s462
          %468 = dma.hbm_to_vmem [thread:$0]  %s8, 1024, %s463, [#allocation12], 64, 64, 4
        $region40: #{mimo_sequential_fused.1} parent=11 // pred_fallthru
          _
        // Predicated region
        $region41: #{mimo_sequential_fused.1} parent=11 // pred_check
          %p469 = pneg %p257
        $region42: #{mimo_sequential_fused.1} parent=11 // pred_check_branch
          %471 = sbr.rel (%p469) target = $region44
        $region43: #{mimo_sequential_fused.1} parent=11 // pred_region
          _
        $region44: #{mimo_sequential_fused.1} parent=11 // pred_fallthru
          _
        // Predicated region
        $region45: #{mimo_sequential_fused.1} parent=11 // pred_check
          %p472 = pneg %p278
        $region46: #{mimo_sequential_fused.1} parent=11 // pred_check_branch
          %474 = sbr.rel (%p472) target = $region48
        $region47: #{mimo_sequential_fused.1} parent=11 // pred_region
          %s476 = ssub.s32 1024, 1024
          %477 = vsyncadd [#allocation12], %s476
          %s478 = sshll.u32 [#allocation13], 4
          %s479 = int_to_ptr.vmem [resolvable:$true] %s478
          %484 = dma.hbm_to_vmem [thread:$0]  %s10, 1024, %s479, [#allocation12], 64, 64, 4
        $region48: #{mimo_sequential_fused.1} parent=11 // pred_fallthru
          _
        // Predicated region
        $region49: #{mimo_sequential_fused.1} parent=11 // pred_check
          %p485 = pneg %p299
        $region50: #{mimo_sequential_fused.1} parent=11 // pred_check_branch
          %487 = sbr.rel (%p485) target = $region52
        $region51: #{mimo_sequential_fused.1} parent=11 // pred_region
          _
        $region52: #{mimo_sequential_fused.1} parent=11 // pred_fallthru
          _
        // Predicated region
        $region53: #{mimo_sequential_fused.1} parent=11 // pred_check
          %p488 = pneg %p320
        $region54: #{mimo_sequential_fused.1} parent=11 // pred_check_branch
          %490 = sbr.rel (%p488) target = $region56
        $region55: #{mimo_sequential_fused.1} parent=11 // pred_region
          %s492 = ssub.s32 1024, 1024
          %493 = vsyncadd [#allocation15], %s492
          %s494 = sshll.u32 [#allocation14], 4
          %s495 = int_to_ptr.vmem [resolvable:$true] %s494
          %500 = dma.hbm_to_vmem [thread:$0]  %s12, 1024, %s495, [#allocation15], 64, 64, 4
        $region56: #{mimo_sequential_fused.1} parent=11 // pred_fallthru
          _
        // Predicated region
        $region57: #{mimo_sequential_fused.1} parent=11 // pred_check
          %p501 = pneg %p341
        $region58: #{mimo_sequential_fused.1} parent=11 // pred_check_branch
          %503 = sbr.rel (%p501) target = $region60
        $region59: #{mimo_sequential_fused.1} parent=11 // pred_region
          _
        $region60: #{mimo_sequential_fused.1} parent=11 // pred_fallthru
          _
      $region12: #{mimo_sequential_fused.1} parent=5 // pred_fallthru
        _
      %p504 = scmp.lt.s32.totalorder %s37, 2
      // Predicated region
      $region61: #{mimo_sequential_fused.1} parent=5 // pred_check
        %p505 = pneg %p504
      $region62: #{mimo_sequential_fused.1} parent=5 // pred_check_branch
        %507 = sbr.rel (%p505) target = $region64
      $region63: #{mimo_sequential_fused.1} parent=5 // pred_region
        // Predicated region
        $region65: #{mimo_sequential_fused.1} parent=63 // pred_check
          %p508 = pneg %p57
        $region66: #{mimo_sequential_fused.1} parent=63 // pred_check_branch
          %510 = sbr.rel (%p508) target = $region68
        $region67: #{mimo_sequential_fused.1} parent=63 // pred_region
          %s511 = sand.u32 %s47, 1
          %s512 = scalar_lea.sflag [#allocation3], %s511
          %s513 = sand.u32 %s47, 1
          %s514 = smul.addr %s513, 512
          %s515 = scalar_lea.vmem [#allocation2], %s514
          %s516 = smul.u32 64, %s37
          %s517 = ssub.s32 75, %s516
          %p518 = scmp.lt.s32.totalorder %s517, 64
          %s519 = scalar_select %p518, %s517, 64
          %s520 = smul.u32 128, %s519
          %s522 = ssub.s32 8192, %s520
          %523 = vsyncadd %s512, %s522
          %p524 = scmp.ne.s32.totalorder 0, %s520
          %s525 = smul.addr %s516, 128
          %s526 = scalar_lea.hbm %s0, %s525
          %s527 = smul.u32 8, %s519
          %s528 = sshll.u32 %s515, 4
          %s529 = int_to_ptr.vmem [resolvable:$true] %s528
          %s530 = sshll.u32 %s527, 4
          %534 = dma.hbm_to_vmem [thread:$0]  (%p524), %s526, %s530, %s529, %s512, 128, 128, 8
        $region68: #{mimo_sequential_fused.1} parent=63 // pred_fallthru
          _
        // Predicated region
        $region69: #{mimo_sequential_fused.1} parent=63 // pred_check
          %p535 = pneg %p83
        $region70: #{mimo_sequential_fused.1} parent=63 // pred_check_branch
          %537 = sbr.rel (%p535) target = $region72
        $region71: #{mimo_sequential_fused.1} parent=63 // pred_region
          %s538 = sand.u32 %s37, 1
          %s539 = scalar_lea.sflag [#allocation6], %s538
          %s540 = sand.u32 %s73, 1
          %s541 = smul.addr %s540, 512
          %s542 = scalar_lea.vmem [#allocation5], %s541
          %s543 = smul.u32 64, %s37
          %s544 = ssub.s32 75, %s543
          %p545 = scmp.lt.s32.totalorder %s544, 64
          %s546 = scalar_select %p545, %s544, 64
          %s547 = smul.u32 128, %s546
          %s549 = ssub.s32 8192, %s547
          %550 = vsyncadd %s539, %s549
          %p551 = scmp.ne.s32.totalorder 0, %s547
          %s552 = smul.addr %s543, 128
          %s553 = scalar_lea.hbm %s1, %s552
          %s554 = smul.u32 8, %s546
          %s555 = sshll.u32 %s542, 4
          %s556 = int_to_ptr.vmem [resolvable:$true] %s555
          %s557 = sshll.u32 %s554, 4
          %561 = dma.hbm_to_vmem [thread:$0]  (%p551), %s553, %s557, %s556, %s539, 128, 128, 8
        $region72: #{mimo_sequential_fused.1} parent=63 // pred_fallthru
          _
      $region64: #{mimo_sequential_fused.1} parent=5 // pred_fallthru
        _
      %p562 = scmp.le.s32.totalorder 1, %s37
      %p563 = scmp.lt.s32.totalorder %s37, 3
      %p564 = pnand %p562, %p563
      %p565 = pneg %p564
      // Predicated region
      $region73: #{mimo_sequential_fused.1} parent=5 // pred_check
        _
      $region74: #{mimo_sequential_fused.1} parent=5 // pred_check_branch
        %567 = sbr.rel (%p564) target = $region76
      $region75: #{mimo_sequential_fused.1} parent=5 // pred_region
        %s568 = ssub.s32 %s37, 1
        %s569 = sand.u32 %s50, 1
        %s570 = scalar_lea.sflag [#allocation3], %s569
        %s571 = sand.u32 %s50, 1
        %s572 = smul.addr %s571, 512
        %s573 = scalar_lea.vmem [#allocation2], %s572
        // Predicated region
        $region77: #{mimo_sequential_fused.1} parent=75 // pred_check
          %p574 = pneg %p63
        $region78: #{mimo_sequential_fused.1} parent=75 // pred_check_branch
          %576 = sbr.rel (%p574) target = $region80
        $region79: #{mimo_sequential_fused.1} parent=75 // pred_region
          %577 = dma.done %s570, 8192
        $region80: #{mimo_sequential_fused.1} parent=75 // pred_fallthru
          _
        %s578 = sand.u32 %s42, 1
        %s579 = scalar_lea.sflag [#allocation6], %s578
        %s580 = sand.u32 %s76, 1
        %s581 = smul.addr %s580, 512
        %s582 = scalar_lea.vmem [#allocation5], %s581
        // Predicated region
        $region81: #{mimo_sequential_fused.1} parent=75 // pred_check
          %p583 = pneg %p89
        $region82: #{mimo_sequential_fused.1} parent=75 // pred_check_branch
          %585 = sbr.rel (%p583) target = $region84
        $region83: #{mimo_sequential_fused.1} parent=75 // pred_region
          %586 = dma.done %s579, 8192
        $region84: #{mimo_sequential_fused.1} parent=75 // pred_fallthru
          _
        // Predicated region
        $region85: #{mimo_sequential_fused.1} parent=75 // pred_check
          %p587 = pneg %p110
        $region86: #{mimo_sequential_fused.1} parent=75 // pred_check_branch
          %589 = sbr.rel (%p587) target = $region88
        $region87: #{mimo_sequential_fused.1} parent=75 // pred_region
          %590 = dma.done [#allocation6], 1024
        $region88: #{mimo_sequential_fused.1} parent=75 // pred_fallthru
          _
        // Predicated region
        $region89: #{mimo_sequential_fused.1} parent=75 // pred_check
          %p591 = pneg %p152
        $region90: #{mimo_sequential_fused.1} parent=75 // pred_check_branch
          %593 = sbr.rel (%p591) target = $region92
        $region91: #{mimo_sequential_fused.1} parent=75 // pred_region
          %594 = dma.done [#allocation9], 1024
        $region92: #{mimo_sequential_fused.1} parent=75 // pred_fallthru
          _
        // Predicated region
        $region93: #{mimo_sequential_fused.1} parent=75 // pred_check
          %p595 = pneg %p194
        $region94: #{mimo_sequential_fused.1} parent=75 // pred_check_branch
          %597 = sbr.rel (%p595) target = $region96
        $region95: #{mimo_sequential_fused.1} parent=75 // pred_region
          %598 = dma.done [#allocation9], 1024
        $region96: #{mimo_sequential_fused.1} parent=75 // pred_fallthru
          _
        // Predicated region
        $region97: #{mimo_sequential_fused.1} parent=75 // pred_check
          %p599 = pneg %p236
        $region98: #{mimo_sequential_fused.1} parent=75 // pred_check_branch
          %601 = sbr.rel (%p599) target = $region100
        $region99: #{mimo_sequential_fused.1} parent=75 // pred_region
          %602 = dma.done [#allocation12], 1024
        $region100: #{mimo_sequential_fused.1} parent=75 // pred_fallthru
          _
        // Predicated region
        $region101: #{mimo_sequential_fused.1} parent=75 // pred_check
          %p603 = pneg %p278
        $region102: #{mimo_sequential_fused.1} parent=75 // pred_check_branch
          %605 = sbr.rel (%p603) target = $region104
        $region103: #{mimo_sequential_fused.1} parent=75 // pred_region
          %606 = dma.done [#allocation12], 1024
        $region104: #{mimo_sequential_fused.1} parent=75 // pred_fallthru
          _
        // Predicated region
        $region105: #{mimo_sequential_fused.1} parent=75 // pred_check
          %p607 = pneg %p320
        $region106: #{mimo_sequential_fused.1} parent=75 // pred_check_branch
          %609 = sbr.rel (%p607) target = $region108
        $region107: #{mimo_sequential_fused.1} parent=75 // pred_region
          %610 = dma.done [#allocation15], 1024
        $region108: #{mimo_sequential_fused.1} parent=75 // pred_fallthru
          _
        %s611 = sand.u32 %s50, 1
        %s612 = scalar_lea.sflag [#allocation3], %s611
        %s613 = sand.u32 %s50, 1
        %s614 = smul.addr %s613, 512
        %s615 = scalar_lea.vmem [#allocation2], %s614
        %p616 = pneg %p63
        %p617 = pneg %p60
        %s618 = sand.u32 %s42, 1
        %s619 = scalar_lea.sflag [#allocation6], %s618
        %s620 = sand.u32 %s76, 1
        %s621 = smul.addr %s620, 512
        %s622 = scalar_lea.vmem [#allocation5], %s621
        %p623 = pneg %p89
        %p624 = pneg %p86
        %p625 = pneg %p110
        %p626 = pneg %p107
        %p627 = pneg %p131
        %p628 = pneg %p128
        %p629 = pneg %p152
        %p630 = pneg %p149
        %p631 = pneg %p173
        %p632 = pneg %p170
        %p633 = pneg %p194
        %p634 = pneg %p191
        %p635 = pneg %p215
        %p636 = pneg %p212
        %p637 = pneg %p236
        %p638 = pneg %p233
        %p639 = pneg %p257
        %p640 = pneg %p254
        %p641 = pneg %p278
        %p642 = pneg %p275
        %p643 = pneg %p299
        %p644 = pneg %p296
        %p645 = pneg %p320
        %p646 = pneg %p317
        %p647 = pneg %p341
        %p648 = pneg %p338
        %p649 = pneg %p367
        %p650 = pneg %p364
        %s651 = sand.u32 %s354, 1
        %s652 = scalar_lea.sflag [#allocation4], %s651
        %s653 = sand.u32 %s354, 1
        %s654 = smul.addr %s653, 512
        %s655 = scalar_lea.vmem [#allocation16], %s654
        %p656 = pneg %p393
        %p657 = pneg %p390
        %s658 = sand.u32 %s380, 1
        %s659 = scalar_lea.sflag [#allocation18], %s658
        %s660 = sand.u32 %s380, 1
        %s661 = smul.addr %s660, 512
        %s662 = scalar_lea.vmem [#allocation17], %s661
        %s663 = smul.u32 64, %s42
        %s664 = ssub.s32 75, %s663
        %p665 = scmp.lt.s32.totalorder %s664, 64
        %s666 = scalar_select %p665, %s664, 64
        %s667 = smul.u32 128, %s666
        %s668 = smul.u32 64, %s42
        %s669 = ssub.s32 75, %s668
        %p670 = scmp.lt.s32.totalorder %s669, 64
        %s671 = scalar_select %p670, %s669, 64
        %s672 = smul.u32 128, %s671
        %s673 = smul.u32 64, %s42
        %s674 = ssub.s32 75, %s673
        %p675 = scmp.lt.s32.totalorder %s674, 64
        %s676 = scalar_select %p675, %s674, 64
        %s677 = smul.u32 128, %s676
        %s678 = smul.u32 64, %s42
        %s679 = ssub.s32 75, %s678
        %p680 = scmp.lt.s32.totalorder %s679, 64
        %s681 = scalar_select %p680, %s679, 64
        %s682 = smul.u32 128, %s681
        %v684 = vld [vmem:[%s573] sm:$0xff]
        %v685 = vld [vmem:[%s573 + $0x8] sm:$0xff]
        %v686 = vld [vmem:[%s573 + $0x10] sm:$0xff]
        %v687 = vld [vmem:[%s573 + $0x18] sm:$0xff]
        %v688 = vld [vmem:[%s573 + $0x20] sm:$0xff]
        %v689 = vld [vmem:[%s573 + $0x28] sm:$0xff]
        %v690 = vld [vmem:[%s573 + $0x30] sm:$0xff]
        %v691 = vld [vmem:[%s573 + $0x38] sm:$0xff]
        %v692 = vld [vmem:[%s573 + $0x40] sm:$0xff]
        %v693 = vld [vmem:[%s573 + $0x48] sm:$0xff]
        %v694 = vld [vmem:[%s573 + $0x50] sm:$0xff]
        %v695 = vld [vmem:[%s573 + $0x58] sm:$0xff]
        %v696 = vld [vmem:[%s573 + $0x60] sm:$0xff]
        %v697 = vld [vmem:[%s573 + $0x68] sm:$0xff]
        %v698 = vld [vmem:[%s573 + $0x70] sm:$0xff]
        %v699 = vld [vmem:[%s573 + $0x78] sm:$0xff]
        %v700 = vld [vmem:[%s573 + $0x80] sm:$0xff]
        %v701 = vld [vmem:[%s573 + $0x88] sm:$0xff]
        %v702 = vld [vmem:[%s573 + $0x90] sm:$0xff]
        %v703 = vld [vmem:[%s573 + $0x98] sm:$0xff]
        %v704 = vld [vmem:[%s573 + $0xa0] sm:$0xff]
        %v705 = vld [vmem:[%s573 + $0xa8] sm:$0xff]
        %v706 = vld [vmem:[%s573 + $0xb0] sm:$0xff]
        %v707 = vld [vmem:[%s573 + $0xb8] sm:$0xff]
        %v708 = vld [vmem:[%s573 + $0xc0] sm:$0xff]
        %v709 = vld [vmem:[%s573 + $0xc8] sm:$0xff]
        %v710 = vld [vmem:[%s573 + $0xd0] sm:$0xff]
        %v711 = vld [vmem:[%s573 + $0xd8] sm:$0xff]
        %v712 = vld [vmem:[%s573 + $0xe0] sm:$0xff]
        %v713 = vld [vmem:[%s573 + $0xe8] sm:$0xff]
        %v714 = vld [vmem:[%s573 + $0xf0] sm:$0xff]
        %v715 = vld [vmem:[%s573 + $0xf8] sm:$0xff]
        %v716 = vld [vmem:[%s573 + $0x100] sm:$0xff]
        %v717 = vld [vmem:[%s573 + $0x108] sm:$0xff]
        %v718 = vld [vmem:[%s573 + $0x110] sm:$0xff]
        %v719 = vld [vmem:[%s573 + $0x118] sm:$0xff]
        %v720 = vld [vmem:[%s573 + $0x120] sm:$0xff]
        %v721 = vld [vmem:[%s573 + $0x128] sm:$0xff]
        %v722 = vld [vmem:[%s573 + $0x130] sm:$0xff]
        %v723 = vld [vmem:[%s573 + $0x138] sm:$0xff]
        %v724 = vld [vmem:[%s573 + $0x140] sm:$0xff]
        %v725 = vld [vmem:[%s573 + $0x148] sm:$0xff]
        %v726 = vld [vmem:[%s573 + $0x150] sm:$0xff]
        %v727 = vld [vmem:[%s573 + $0x158] sm:$0xff]
        %v728 = vld [vmem:[%s573 + $0x160] sm:$0xff]
        %v729 = vld [vmem:[%s573 + $0x168] sm:$0xff]
        %v730 = vld [vmem:[%s573 + $0x170] sm:$0xff]
        %v731 = vld [vmem:[%s573 + $0x178] sm:$0xff]
        %v732 = vld [vmem:[%s573 + $0x180] sm:$0xff]
        %v733 = vld [vmem:[%s573 + $0x188] sm:$0xff]
        %v734 = vld [vmem:[%s573 + $0x190] sm:$0xff]
        %v735 = vld [vmem:[%s573 + $0x198] sm:$0xff]
        %v736 = vld [vmem:[%s573 + $0x1a0] sm:$0xff]
        %v737 = vld [vmem:[%s573 + $0x1a8] sm:$0xff]
        %v738 = vld [vmem:[%s573 + $0x1b0] sm:$0xff]
        %v739 = vld [vmem:[%s573 + $0x1b8] sm:$0xff]
        %v740 = vld [vmem:[%s573 + $0x1c0] sm:$0xff]
        %v741 = vld [vmem:[%s573 + $0x1c8] sm:$0xff]
        %v742 = vld [vmem:[%s573 + $0x1d0] sm:$0xff]
        %v743 = vld [vmem:[%s573 + $0x1d8] sm:$0xff]
        %v744 = vld [vmem:[%s573 + $0x1e0] sm:$0xff]
        %v745 = vld [vmem:[%s573 + $0x1e8] sm:$0xff]
        %v746 = vld [vmem:[%s573 + $0x1f0] sm:$0xff]
        %v747 = vld [vmem:[%s573 + $0x1f8] sm:$0xff]
        %v748 = vld [vmem:[%s582] sm:$0xff]
        %v749 = vld [vmem:[%s582 + $0x8] sm:$0xff]
        %v750 = vld [vmem:[%s582 + $0x10] sm:$0xff]
        %v751 = vld [vmem:[%s582 + $0x18] sm:$0xff]
        %v752 = vld [vmem:[%s582 + $0x20] sm:$0xff]
        %v753 = vld [vmem:[%s582 + $0x28] sm:$0xff]
        %v754 = vld [vmem:[%s582 + $0x30] sm:$0xff]
        %v755 = vld [vmem:[%s582 + $0x38] sm:$0xff]
        %v756 = vld [vmem:[%s582 + $0x40] sm:$0xff]
        %v757 = vld [vmem:[%s582 + $0x48] sm:$0xff]
        %v758 = vld [vmem:[%s582 + $0x50] sm:$0xff]
        %v759 = vld [vmem:[%s582 + $0x58] sm:$0xff]
        %v760 = vld [vmem:[%s582 + $0x60] sm:$0xff]
        %v761 = vld [vmem:[%s582 + $0x68] sm:$0xff]
        %v762 = vld [vmem:[%s582 + $0x70] sm:$0xff]
        %v763 = vld [vmem:[%s582 + $0x78] sm:$0xff]
        %v764 = vld [vmem:[%s582 + $0x80] sm:$0xff]
        %v765 = vld [vmem:[%s582 + $0x88] sm:$0xff]
        %v766 = vld [vmem:[%s582 + $0x90] sm:$0xff]
        %v767 = vld [vmem:[%s582 + $0x98] sm:$0xff]
        %v768 = vld [vmem:[%s582 + $0xa0] sm:$0xff]
        %v769 = vld [vmem:[%s582 + $0xa8] sm:$0xff]
        %v770 = vld [vmem:[%s582 + $0xb0] sm:$0xff]
        %v771 = vld [vmem:[%s582 + $0xb8] sm:$0xff]
        %v772 = vld [vmem:[%s582 + $0xc0] sm:$0xff]
        %v773 = vld [vmem:[%s582 + $0xc8] sm:$0xff]
        %v774 = vld [vmem:[%s582 + $0xd0] sm:$0xff]
        %v775 = vld [vmem:[%s582 + $0xd8] sm:$0xff]
        %v776 = vld [vmem:[%s582 + $0xe0] sm:$0xff]
        %v777 = vld [vmem:[%s582 + $0xe8] sm:$0xff]
        %v778 = vld [vmem:[%s582 + $0xf0] sm:$0xff]
        %v779 = vld [vmem:[%s582 + $0xf8] sm:$0xff]
        %v780 = vld [vmem:[%s582 + $0x100] sm:$0xff]
        %v781 = vld [vmem:[%s582 + $0x108] sm:$0xff]
        %v782 = vld [vmem:[%s582 + $0x110] sm:$0xff]
        %v783 = vld [vmem:[%s582 + $0x118] sm:$0xff]
        %v784 = vld [vmem:[%s582 + $0x120] sm:$0xff]
        %v785 = vld [vmem:[%s582 + $0x128] sm:$0xff]
        %v786 = vld [vmem:[%s582 + $0x130] sm:$0xff]
        %v787 = vld [vmem:[%s582 + $0x138] sm:$0xff]
        %v788 = vld [vmem:[%s582 + $0x140] sm:$0xff]
        %v789 = vld [vmem:[%s582 + $0x148] sm:$0xff]
        %v790 = vld [vmem:[%s582 + $0x150] sm:$0xff]
        %v791 = vld [vmem:[%s582 + $0x158] sm:$0xff]
        %v792 = vld [vmem:[%s582 + $0x160] sm:$0xff]
        %v793 = vld [vmem:[%s582 + $0x168] sm:$0xff]
        %v794 = vld [vmem:[%s582 + $0x170] sm:$0xff]
        %v795 = vld [vmem:[%s582 + $0x178] sm:$0xff]
        %v796 = vld [vmem:[%s582 + $0x180] sm:$0xff]
        %v797 = vld [vmem:[%s582 + $0x188] sm:$0xff]
        %v798 = vld [vmem:[%s582 + $0x190] sm:$0xff]
        %v799 = vld [vmem:[%s582 + $0x198] sm:$0xff]
        %v800 = vld [vmem:[%s582 + $0x1a0] sm:$0xff]
        %v801 = vld [vmem:[%s582 + $0x1a8] sm:$0xff]
        %v802 = vld [vmem:[%s582 + $0x1b0] sm:$0xff]
        %v803 = vld [vmem:[%s582 + $0x1b8] sm:$0xff]
        %v804 = vld [vmem:[%s582 + $0x1c0] sm:$0xff]
        %v805 = vld [vmem:[%s582 + $0x1c8] sm:$0xff]
        %v806 = vld [vmem:[%s582 + $0x1d0] sm:$0xff]
        %v807 = vld [vmem:[%s582 + $0x1d8] sm:$0xff]
        %v808 = vld [vmem:[%s582 + $0x1e0] sm:$0xff]
        %v809 = vld [vmem:[%s582 + $0x1e8] sm:$0xff]
        %v810 = vld [vmem:[%s582 + $0x1f0] sm:$0xff]
        %v811 = vld [vmem:[%s582 + $0x1f8] sm:$0xff]
        %v812 = vpack.c.bf16 %v685, %v684
        %v813 = vpack.c.bf16 %v687, %v686
        %v814 = vpack.c.bf16 %v689, %v688
        %v815 = vpack.c.bf16 %v691, %v690
        %v816 = vpack.c.bf16 %v693, %v692
        %v817 = vpack.c.bf16 %v695, %v694
        %v818 = vpack.c.bf16 %v697, %v696
        %v819 = vpack.c.bf16 %v699, %v698
        %v820 = vpack.c.bf16 %v701, %v700
        %v821 = vpack.c.bf16 %v703, %v702
        %v822 = vpack.c.bf16 %v705, %v704
        %v823 = vpack.c.bf16 %v707, %v706
        %v824 = vpack.c.bf16 %v709, %v708
        %v825 = vpack.c.bf16 %v711, %v710
        %v826 = vpack.c.bf16 %v713, %v712
        %v827 = vpack.c.bf16 %v715, %v714
        %v828 = vpack.c.bf16 %v717, %v716
        %v829 = vpack.c.bf16 %v719, %v718
        %v830 = vpack.c.bf16 %v721, %v720
        %v831 = vpack.c.bf16 %v723, %v722
        %v832 = vpack.c.bf16 %v725, %v724
        %v833 = vpack.c.bf16 %v727, %v726
        %v834 = vpack.c.bf16 %v729, %v728
        %v835 = vpack.c.bf16 %v731, %v730
        %v836 = vpack.c.bf16 %v733, %v732
        %v837 = vpack.c.bf16 %v735, %v734
        %v838 = vpack.c.bf16 %v737, %v736
        %v839 = vpack.c.bf16 %v739, %v738
        %v840 = vpack.c.bf16 %v741, %v740
        %v841 = vpack.c.bf16 %v743, %v742
        %v842 = vpack.c.bf16 %v745, %v744
        %v843 = vpack.c.bf16 %v747, %v746
        %v844 = vld [vmem:[#allocation7] sm:$0xf]
        %v845 = vld [vmem:[#allocation7 + $0x4] sm:$0xf]
        %v846 = vld [vmem:[#allocation7 + $0x8] sm:$0xf]
        %v847 = vld [vmem:[#allocation7 + $0xc] sm:$0xf]
        %v848 = vld [vmem:[#allocation7 + $0x10] sm:$0xf]
        %v849 = vld [vmem:[#allocation7 + $0x14] sm:$0xf]
        %v850 = vld [vmem:[#allocation7 + $0x18] sm:$0xf]
        %v851 = vld [vmem:[#allocation7 + $0x1c] sm:$0xf]
        %v852 = vld [vmem:[#allocation7 + $0x20] sm:$0xf]
        %v853 = vld [vmem:[#allocation7 + $0x24] sm:$0xf]
        %v854 = vld [vmem:[#allocation7 + $0x28] sm:$0xf]
        %v855 = vld [vmem:[#allocation7 + $0x2c] sm:$0xf]
        %v856 = vld [vmem:[#allocation7 + $0x30] sm:$0xf]
        %v857 = vld [vmem:[#allocation7 + $0x34] sm:$0xf]
        %v858 = vld [vmem:[#allocation7 + $0x38] sm:$0xf]
        %v859 = vld [vmem:[#allocation7 + $0x3c] sm:$0xf]
        %v860 = vpack.c.bf16 %v749, %v748
        %v861 = vpack.c.bf16 %v751, %v750
        %v862 = vpack.c.bf16 %v753, %v752
        %v863 = vpack.c.bf16 %v755, %v754
        %v864 = vpack.c.bf16 %v757, %v756
        %v865 = vpack.c.bf16 %v759, %v758
        %v866 = vpack.c.bf16 %v761, %v760
        %v867 = vpack.c.bf16 %v763, %v762
        %v868 = vpack.c.bf16 %v765, %v764
        %v869 = vpack.c.bf16 %v767, %v766
        %v870 = vpack.c.bf16 %v769, %v768
        %v871 = vpack.c.bf16 %v771, %v770
        %v872 = vpack.c.bf16 %v773, %v772
        %v873 = vpack.c.bf16 %v775, %v774
        %v874 = vpack.c.bf16 %v777, %v776
        %v875 = vpack.c.bf16 %v779, %v778
        %v876 = vpack.c.bf16 %v781, %v780
        %v877 = vpack.c.bf16 %v783, %v782
        %v878 = vpack.c.bf16 %v785, %v784
        %v879 = vpack.c.bf16 %v787, %v786
        %v880 = vpack.c.bf16 %v789, %v788
        %v881 = vpack.c.bf16 %v791, %v790
        %v882 = vpack.c.bf16 %v793, %v792
        %v883 = vpack.c.bf16 %v795, %v794
        %v884 = vpack.c.bf16 %v797, %v796
        %v885 = vpack.c.bf16 %v799, %v798
        %v886 = vpack.c.bf16 %v801, %v800
        %v887 = vpack.c.bf16 %v803, %v802
        %v888 = vpack.c.bf16 %v805, %v804
        %v889 = vpack.c.bf16 %v807, %v806
        %v890 = vpack.c.bf16 %v809, %v808
        %v891 = vpack.c.bf16 %v811, %v810
        %v892 = vld [vmem:[#allocation8] sm:$0xf]
        %v893 = vld [vmem:[#allocation8 + $0x4] sm:$0xf]
        %v894 = vld [vmem:[#allocation8 + $0x8] sm:$0xf]
        %v895 = vld [vmem:[#allocation8 + $0xc] sm:$0xf]
        %v896 = vld [vmem:[#allocation8 + $0x10] sm:$0xf]
        %v897 = vld [vmem:[#allocation8 + $0x14] sm:$0xf]
        %v898 = vld [vmem:[#allocation8 + $0x18] sm:$0xf]
        %v899 = vld [vmem:[#allocation8 + $0x1c] sm:$0xf]
        %v900 = vld [vmem:[#allocation8 + $0x20] sm:$0xf]
        %v901 = vld [vmem:[#allocation8 + $0x24] sm:$0xf]
        %v902 = vld [vmem:[#allocation8 + $0x28] sm:$0xf]
        %v903 = vld [vmem:[#allocation8 + $0x2c] sm:$0xf]
        %v904 = vld [vmem:[#allocation8 + $0x30] sm:$0xf]
        %v905 = vld [vmem:[#allocation8 + $0x34] sm:$0xf]
        %v906 = vld [vmem:[#allocation8 + $0x38] sm:$0xf]
        %v907 = vld [vmem:[#allocation8 + $0x3c] sm:$0xf]
        %v908 = vld [vmem:[%s3] sm:$0x1]
        %v910 = vlaneseq
        %v911 = vshrl.u32 %v910, 7
        %v912 = vsub.s32 0, %v911
        %v913 = vrot.slane %v908, %v912
        %v931 = vunpack.c.l.b16 %v844
        %v932 = vunpack.c.l.b16 %v845
        %v933 = vunpack.c.l.b16 %v846
        %v934 = vunpack.c.l.b16 %v847
        %v935 = vunpack.c.l.b16 %v848
        %v936 = vunpack.c.l.b16 %v849
        %v937 = vunpack.c.l.b16 %v850
        %v938 = vunpack.c.l.b16 %v851
        %v939 = vunpack.c.l.b16 %v852
        %v940 = vunpack.c.l.b16 %v853
        %v941 = vunpack.c.l.b16 %v854
        %v942 = vunpack.c.l.b16 %v855
        %v943 = vunpack.c.l.b16 %v856
        %v944 = vunpack.c.l.b16 %v857
        %v945 = vunpack.c.l.b16 %v858
        %v946 = vunpack.c.l.b16 %v859
        %v947 = vpack.c.b16 %v932, %v931
        %v948 = vpack.c.b16 %v934, %v933
        %v949 = vpack.c.b16 %v936, %v935
        %v950 = vpack.c.b16 %v938, %v937
        %v951 = vpack.c.b16 %v940, %v939
        %v952 = vpack.c.b16 %v942, %v941
        %v953 = vpack.c.b16 %v944, %v943
        %v954 = vpack.c.b16 %v946, %v945
        %963 = vmatprep.subr.bf16.mxu0 0
        %964 = vmatpush1.bf16.msra.mxu0 %v947
        %965 = vmatprep.subr.bf16.mxu0 0
        %966 = vmatpush1.bf16.msra.mxu0 %v948
        %967 = vmatprep.subr.bf16.mxu0 0
        %968 = vmatpush1.bf16.msra.mxu0 %v949
        %969 = vmatprep.subr.bf16.mxu0 0
        %970 = vmatpush1.bf16.msra.mxu0 %v950
        %971 = vmatprep.subr.bf16.mxu0 0
        %972 = vmatpush1.bf16.msra.mxu0 %v951
        %973 = vmatprep.subr.bf16.mxu0 0
        %974 = vmatpush1.bf16.msra.mxu0 %v952
        %975 = vmatprep.subr.bf16.mxu0 0
        %976 = vmatpush1.bf16.msra.mxu0 %v953
        %977 = vmatprep.subr.bf16.mxu0 0
        %978 = vmatpush1.bf16.msra.mxu0 %v954
        %979 = vmatprep.subr.bf16.mxu0 0
        %980 = vmatpush1.bf16.msra.mxu0 0
        %981 = vmatprep.subr.bf16.mxu0 0
        %982 = vmatpush1.bf16.msra.mxu0 0
        %983 = vmatprep.subr.bf16.mxu0 0
        %984 = vmatpush1.bf16.msra.mxu0 0
        %985 = vmatprep.subr.bf16.mxu0 0
        %986 = vmatpush1.bf16.msra.mxu0 0
        %987 = vmatprep.subr.bf16.mxu0 0
        %988 = vmatpush1.bf16.msra.mxu0 0
        %989 = vmatprep.subr.bf16.mxu0 0
        %990 = vmatpush1.bf16.msra.mxu0 0
        %991 = vmatprep.subr.bf16.mxu0 0
        %992 = vmatpush1.bf16.msra.mxu0 0
        %993 = vmatprep.subr.bf16.mxu0 0
        %994 = vmatpush1.bf16.msra.mxu0 0
        %995 = vmatprep.mubr.bf16.mxu0 0
        %996 = vmatmul.mubr.bf16.gmra.mrb[0].mxu0 %v812
        %v997 = vpop.f32.mrb[0].mxu0
        %v998 = vadd.f32 %v913, %v997
        %v999 = vpop.f32.mrb[0].mxu0
        %v1000 = vpop.f32.mrb[0].mxu0
        %v1001 = vadd.f32 %v913, %v1000
        %v1002 = vpop.f32.mrb[0].mxu0
        %1003 = vmatprep.mubr.bf16.mxu0 0
        %1004 = vmatmul.mubr.bf16.gmra.mrb[0].mxu0 %v813
        %v1005 = vpop.f32.mrb[0].mxu0
        %v1006 = vadd.f32 %v913, %v1005
        %v1007 = vpop.f32.mrb[0].mxu0
        %v1008 = vpop.f32.mrb[0].mxu0
        %v1009 = vadd.f32 %v913, %v1008
        %v1010 = vpop.f32.mrb[0].mxu0
        %1011 = vmatprep.mubr.bf16.mxu0 0
        %1012 = vmatmul.mubr.bf16.gmra.mrb[0].mxu0 %v814
        %v1013 = vpop.f32.mrb[0].mxu0
        %v1014 = vadd.f32 %v913, %v1013
        %v1015 = vpop.f32.mrb[0].mxu0
        %v1016 = vpop.f32.mrb[0].mxu0
        %v1017 = vadd.f32 %v913, %v1016
        %v1018 = vpop.f32.mrb[0].mxu0
        %1019 = vmatprep.mubr.bf16.mxu0 0
        %1020 = vmatmul.mubr.bf16.gmra.mrb[0].mxu0 %v815
        %v1021 = vpop.f32.mrb[0].mxu0
        %v1022 = vadd.f32 %v913, %v1021
        %v1023 = vpop.f32.mrb[0].mxu0
        %v1024 = vpop.f32.mrb[0].mxu0
        %v1025 = vadd.f32 %v913, %v1024
        %v1026 = vpop.f32.mrb[0].mxu0
        %1027 = vmatprep.mubr.bf16.mxu0 0
        %1028 = vmatmul.mubr.bf16.gmra.mrb[0].mxu0 %v816
        %v1029 = vpop.f32.mrb[0].mxu0
        %v1030 = vadd.f32 %v913, %v1029
        %v1031 = vpop.f32.mrb[0].mxu0
        %v1032 = vpop.f32.mrb[0].mxu0
        %v1033 = vadd.f32 %v913, %v1032
        %v1034 = vpop.f32.mrb[0].mxu0
        %1035 = vmatprep.mubr.bf16.mxu0 0
        %1036 = vmatmul.mubr.bf16.gmra.mrb[0].mxu0 %v817
        %v1037 = vpop.f32.mrb[0].mxu0
        %v1038 = vadd.f32 %v913, %v1037
        %v1039 = vpop.f32.mrb[0].mxu0
        %v1040 = vpop.f32.mrb[0].mxu0
        %v1041 = vadd.f32 %v913, %v1040
        %v1042 = vpop.f32.mrb[0].mxu0
        %1043 = vmatprep.mubr.bf16.mxu0 0
        %1044 = vmatmul.mubr.bf16.gmra.mrb[0].mxu0 %v818
        %v1045 = vpop.f32.mrb[0].mxu0
        %v1046 = vadd.f32 %v913, %v1045
        %v1047 = vpop.f32.mrb[0].mxu0
        %v1048 = vpop.f32.mrb[0].mxu0
        %v1049 = vadd.f32 %v913, %v1048
        %v1050 = vpop.f32.mrb[0].mxu0
        %1051 = vmatprep.mubr.bf16.mxu0 0
        %1052 = vmatmul.mubr.bf16.gmra.mrb[0].mxu0 %v819
        %v1053 = vpop.f32.mrb[0].mxu0
        %v1054 = vadd.f32 %v913, %v1053
        %v1055 = vpop.f32.mrb[0].mxu0
        %v1056 = vpop.f32.mrb[0].mxu0
        %v1057 = vadd.f32 %v913, %v1056
        %v1058 = vpop.f32.mrb[0].mxu0
        %1059 = vmatprep.mubr.bf16.mxu0 0
        %1060 = vmatmul.mubr.bf16.gmra.mrb[0].mxu0 %v820
        %v1061 = vpop.f32.mrb[0].mxu0
        %v1062 = vadd.f32 %v913, %v1061
        %v1063 = vpop.f32.mrb[0].mxu0
        %v1064 = vpop.f32.mrb[0].mxu0
        %v1065 = vadd.f32 %v913, %v1064
        %v1066 = vpop.f32.mrb[0].mxu0
        %1067 = vmatprep.mubr.bf16.mxu0 0
        %1068 = vmatmul.mubr.bf16.gmra.mrb[0].mxu0 %v821
        %v1069 = vpop.f32.mrb[0].mxu0
        %v1070 = vadd.f32 %v913, %v1069
        %v1071 = vpop.f32.mrb[0].mxu0
        %v1072 = vpop.f32.mrb[0].mxu0
        %v1073 = vadd.f32 %v913, %v1072
        %v1074 = vpop.f32.mrb[0].mxu0
        %1075 = vmatprep.mubr.bf16.mxu0 0
        %1076 = vmatmul.mubr.bf16.gmra.mrb[0].mxu0 %v822
        %v1077 = vpop.f32.mrb[0].mxu0
        %v1078 = vadd.f32 %v913, %v1077
        %v1079 = vpop.f32.mrb[0].mxu0
        %v1080 = vpop.f32.mrb[0].mxu0
        %v1081 = vadd.f32 %v913, %v1080
        %v1082 = vpop.f32.mrb[0].mxu0
        %1083 = vmatprep.mubr.bf16.mxu0 0
        %1084 = vmatmul.mubr.bf16.gmra.mrb[0].mxu0 %v823
        %v1085 = vpop.f32.mrb[0].mxu0
        %v1086 = vadd.f32 %v913, %v1085
        %v1087 = vpop.f32.mrb[0].mxu0
        %v1088 = vpop.f32.mrb[0].mxu0
        %v1089 = vadd.f32 %v913, %v1088
        %v1090 = vpop.f32.mrb[0].mxu0
        %1091 = vmatprep.mubr.bf16.mxu0 0
        %1092 = vmatmul.mubr.bf16.gmra.mrb[0].mxu0 %v824
        %v1093 = vpop.f32.mrb[0].mxu0
        %v1094 = vadd.f32 %v913, %v1093
        %v1095 = vpop.f32.mrb[0].mxu0
        %v1096 = vpop.f32.mrb[0].mxu0
        %v1097 = vadd.f32 %v913, %v1096
        %v1098 = vpop.f32.mrb[0].mxu0
        %1099 = vmatprep.mubr.bf16.mxu0 0
        %1100 = vmatmul.mubr.bf16.gmra.mrb[0].mxu0 %v825
        %v1101 = vpop.f32.mrb[0].mxu0
        %v1102 = vadd.f32 %v913, %v1101
        %v1103 = vpop.f32.mrb[0].mxu0
        %v1104 = vpop.f32.mrb[0].mxu0
        %v1105 = vadd.f32 %v913, %v1104
        %v1106 = vpop.f32.mrb[0].mxu0
        %1107 = vmatprep.mubr.bf16.mxu0 0
        %1108 = vmatmul.mubr.bf16.gmra.mrb[0].mxu0 %v826
        %v1109 = vpop.f32.mrb[0].mxu0
        %v1110 = vadd.f32 %v913, %v1109
        %v1111 = vpop.f32.mrb[0].mxu0
        %v1112 = vpop.f32.mrb[0].mxu0
        %v1113 = vadd.f32 %v913, %v1112
        %v1114 = vpop.f32.mrb[0].mxu0
        %1115 = vmatprep.mubr.bf16.mxu0 0
        %1116 = vmatmul.mubr.bf16.gmra.mrb[0].mxu0 %v827
        %v1117 = vpop.f32.mrb[0].mxu0
        %v1118 = vadd.f32 %v913, %v1117
        %v1119 = vpop.f32.mrb[0].mxu0
        %v1120 = vpop.f32.mrb[0].mxu0
        %v1121 = vadd.f32 %v913, %v1120
        %v1122 = vpop.f32.mrb[0].mxu0
        %1123 = vmatprep.mubr.bf16.mxu0 0
        %1124 = vmatmul.mubr.bf16.gmra.mrb[0].mxu0 %v828
        %v1125 = vpop.f32.mrb[0].mxu0
        %v1126 = vadd.f32 %v913, %v1125
        %v1127 = vpop.f32.mrb[0].mxu0
        %v1128 = vpop.f32.mrb[0].mxu0
        %v1129 = vadd.f32 %v913, %v1128
        %v1130 = vpop.f32.mrb[0].mxu0
        %1131 = vmatprep.mubr.bf16.mxu0 0
        %1132 = vmatmul.mubr.bf16.gmra.mrb[0].mxu0 %v829
        %v1133 = vpop.f32.mrb[0].mxu0
        %v1134 = vadd.f32 %v913, %v1133
        %v1135 = vpop.f32.mrb[0].mxu0
        %v1136 = vpop.f32.mrb[0].mxu0
        %v1137 = vadd.f32 %v913, %v1136
        %v1138 = vpop.f32.mrb[0].mxu0
        %1139 = vmatprep.mubr.bf16.mxu0 0
        %1140 = vmatmul.mubr.bf16.gmra.mrb[0].mxu0 %v830
        %v1141 = vpop.f32.mrb[0].mxu0
        %v1142 = vadd.f32 %v913, %v1141
        %v1143 = vpop.f32.mrb[0].mxu0
        %v1144 = vpop.f32.mrb[0].mxu0
        %v1145 = vadd.f32 %v913, %v1144
        %v1146 = vpop.f32.mrb[0].mxu0
        %1147 = vmatprep.mubr.bf16.mxu0 0
        %1148 = vmatmul.mubr.bf16.gmra.mrb[0].mxu0 %v831
        %v1149 = vpop.f32.mrb[0].mxu0
        %v1150 = vadd.f32 %v913, %v1149
        %v1151 = vpop.f32.mrb[0].mxu0
        %v1152 = vpop.f32.mrb[0].mxu0
        %v1153 = vadd.f32 %v913, %v1152
        %v1154 = vpop.f32.mrb[0].mxu0
        %1155 = vmatprep.mubr.bf16.mxu0 0
        %1156 = vmatmul.mubr.bf16.gmra.mrb[0].mxu0 %v832
        %v1157 = vpop.f32.mrb[0].mxu0
        %v1158 = vadd.f32 %v913, %v1157
        %v1159 = vpop.f32.mrb[0].mxu0
        %v1160 = vpop.f32.mrb[0].mxu0
        %v1161 = vadd.f32 %v913, %v1160
        %v1162 = vpop.f32.mrb[0].mxu0
        %1163 = vmatprep.mubr.bf16.mxu0 0
        %1164 = vmatmul.mubr.bf16.gmra.mrb[0].mxu0 %v833
        %v1165 = vpop.f32.mrb[0].mxu0
        %v1166 = vadd.f32 %v913, %v1165
        %v1167 = vpop.f32.mrb[0].mxu0
        %v1168 = vpop.f32.mrb[0].mxu0
        %v1169 = vadd.f32 %v913, %v1168
        %v1170 = vpop.f32.mrb[0].mxu0
        %1171 = vmatprep.mubr.bf16.mxu0 0
        %1172 = vmatmul.mubr.bf16.gmra.mrb[0].mxu0 %v834
        %v1173 = vpop.f32.mrb[0].mxu0
        %v1174 = vadd.f32 %v913, %v1173
        %v1175 = vpop.f32.mrb[0].mxu0
        %v1176 = vpop.f32.mrb[0].mxu0
        %v1177 = vadd.f32 %v913, %v1176
        %v1178 = vpop.f32.mrb[0].mxu0
        %1179 = vmatprep.mubr.bf16.mxu0 0
        %1180 = vmatmul.mubr.bf16.gmra.mrb[0].mxu0 %v835
        %v1181 = vpop.f32.mrb[0].mxu0
        %v1182 = vadd.f32 %v913, %v1181
        %v1183 = vpop.f32.mrb[0].mxu0
        %v1184 = vpop.f32.mrb[0].mxu0
        %v1185 = vadd.f32 %v913, %v1184
        %v1186 = vpop.f32.mrb[0].mxu0
        %1187 = vmatprep.mubr.bf16.mxu0 0
        %1188 = vmatmul.mubr.bf16.gmra.mrb[0].mxu0 %v836
        %v1189 = vpop.f32.mrb[0].mxu0
        %v1190 = vadd.f32 %v913, %v1189
        %v1191 = vpop.f32.mrb[0].mxu0
        %v1192 = vpop.f32.mrb[0].mxu0
        %v1193 = vadd.f32 %v913, %v1192
        %v1194 = vpop.f32.mrb[0].mxu0
        %1195 = vmatprep.mubr.bf16.mxu0 0
        %1196 = vmatmul.mubr.bf16.gmra.mrb[0].mxu0 %v837
        %v1197 = vpop.f32.mrb[0].mxu0
        %v1198 = vadd.f32 %v913, %v1197
        %v1199 = vpop.f32.mrb[0].mxu0
        %v1200 = vpop.f32.mrb[0].mxu0
        %v1201 = vadd.f32 %v913, %v1200
        %v1202 = vpop.f32.mrb[0].mxu0
        %1203 = vmatprep.mubr.bf16.mxu0 0
        %1204 = vmatmul.mubr.bf16.gmra.mrb[0].mxu0 %v838
        %v1205 = vpop.f32.mrb[0].mxu0
        %v1206 = vadd.f32 %v913, %v1205
        %v1207 = vpop.f32.mrb[0].mxu0
        %v1208 = vpop.f32.mrb[0].mxu0
        %v1209 = vadd.f32 %v913, %v1208
        %v1210 = vpop.f32.mrb[0].mxu0
        %1211 = vmatprep.mubr.bf16.mxu0 0
        %1212 = vmatmul.mubr.bf16.gmra.mrb[0].mxu0 %v839
        %v1213 = vpop.f32.mrb[0].mxu0
        %v1214 = vadd.f32 %v913, %v1213
        %v1215 = vpop.f32.mrb[0].mxu0
        %v1216 = vpop.f32.mrb[0].mxu0
        %v1217 = vadd.f32 %v913, %v1216
        %v1218 = vpop.f32.mrb[0].mxu0
        %1219 = vmatprep.mubr.bf16.mxu0 0
        %1220 = vmatmul.mubr.bf16.gmra.mrb[0].mxu0 %v840
        %v1221 = vpop.f32.mrb[0].mxu0
        %v1222 = vadd.f32 %v913, %v1221
        %v1223 = vpop.f32.mrb[0].mxu0
        %v1224 = vpop.f32.mrb[0].mxu0
        %v1225 = vadd.f32 %v913, %v1224
        %v1226 = vpop.f32.mrb[0].mxu0
        %1227 = vmatprep.mubr.bf16.mxu0 0
        %1228 = vmatmul.mubr.bf16.gmra.mrb[0].mxu0 %v841
        %v1229 = vpop.f32.mrb[0].mxu0
        %v1230 = vadd.f32 %v913, %v1229
        %v1231 = vpop.f32.mrb[0].mxu0
        %v1232 = vpop.f32.mrb[0].mxu0
        %v1233 = vadd.f32 %v913, %v1232
        %v1234 = vpop.f32.mrb[0].mxu0
        %1235 = vmatprep.mubr.bf16.mxu0 0
        %1236 = vmatmul.mubr.bf16.gmra.mrb[0].mxu0 %v842
        %v1237 = vpop.f32.mrb[0].mxu0
        %v1238 = vadd.f32 %v913, %v1237
        %v1239 = vpop.f32.mrb[0].mxu0
        %v1240 = vpop.f32.mrb[0].mxu0
        %v1241 = vadd.f32 %v913, %v1240
        %v1242 = vpop.f32.mrb[0].mxu0
        %1243 = vmatprep.mubr.bf16.mxu0 0
        %1244 = vmatmul.mubr.bf16.gmra.mrb[0].mxu0 %v843
        %v1245 = vpop.f32.mrb[0].mxu0
        %v1246 = vadd.f32 %v913, %v1245
        %v1247 = vpop.f32.mrb[0].mxu0
        %v1248 = vpop.f32.mrb[0].mxu0
        %v1249 = vadd.f32 %v913, %v1248
        %v1250 = vpop.f32.mrb[0].mxu0
        %1251 = vdwg.mxu0
        %v1252 = vmax.f32 %v998, 0.0
        %v1253 = vmax.f32 %v1001, 0.0
        %v1254 = vmax.f32 %v1006, 0.0
        %v1255 = vmax.f32 %v1009, 0.0
        %v1256 = vmax.f32 %v1014, 0.0
        %v1257 = vmax.f32 %v1017, 0.0
        %v1258 = vmax.f32 %v1022, 0.0
        %v1259 = vmax.f32 %v1025, 0.0
        %v1260 = vmax.f32 %v1030, 0.0
        %v1261 = vmax.f32 %v1033, 0.0
        %v1262 = vmax.f32 %v1038, 0.0
        %v1263 = vmax.f32 %v1041, 0.0
        %v1264 = vmax.f32 %v1046, 0.0
        %v1265 = vmax.f32 %v1049, 0.0
        %v1266 = vmax.f32 %v1054, 0.0
        %v1267 = vmax.f32 %v1057, 0.0
        %v1268 = vmax.f32 %v1062, 0.0
        %v1269 = vmax.f32 %v1065, 0.0
        %v1270 = vmax.f32 %v1070, 0.0
        %v1271 = vmax.f32 %v1073, 0.0
        %v1272 = vmax.f32 %v1078, 0.0
        %v1273 = vmax.f32 %v1081, 0.0
        %v1274 = vmax.f32 %v1086, 0.0
        %v1275 = vmax.f32 %v1089, 0.0
        %v1276 = vmax.f32 %v1094, 0.0
        %v1277 = vmax.f32 %v1097, 0.0
        %v1278 = vmax.f32 %v1102, 0.0
        %v1279 = vmax.f32 %v1105, 0.0
        %v1280 = vmax.f32 %v1110, 0.0
        %v1281 = vmax.f32 %v1113, 0.0
        %v1282 = vmax.f32 %v1118, 0.0
        %v1283 = vmax.f32 %v1121, 0.0
        %v1284 = vmax.f32 %v1126, 0.0
        %v1285 = vmax.f32 %v1129, 0.0
        %v1286 = vmax.f32 %v1134, 0.0
        %v1287 = vmax.f32 %v1137, 0.0
        %v1288 = vmax.f32 %v1142, 0.0
        %v1289 = vmax.f32 %v1145, 0.0
        %v1290 = vmax.f32 %v1150, 0.0
        %v1291 = vmax.f32 %v1153, 0.0
        %v1292 = vmax.f32 %v1158, 0.0
        %v1293 = vmax.f32 %v1161, 0.0
        %v1294 = vmax.f32 %v1166, 0.0
        %v1295 = vmax.f32 %v1169, 0.0
        %v1296 = vmax.f32 %v1174, 0.0
        %v1297 = vmax.f32 %v1177, 0.0
        %v1298 = vmax.f32 %v1182, 0.0
        %v1299 = vmax.f32 %v1185, 0.0
        %v1300 = vmax.f32 %v1190, 0.0
        %v1301 = vmax.f32 %v1193, 0.0
        %v1302 = vmax.f32 %v1198, 0.0
        %v1303 = vmax.f32 %v1201, 0.0
        %v1304 = vmax.f32 %v1206, 0.0
        %v1305 = vmax.f32 %v1209, 0.0
        %v1306 = vmax.f32 %v1214, 0.0
        %v1307 = vmax.f32 %v1217, 0.0
        %v1308 = vmax.f32 %v1222, 0.0
        %v1309 = vmax.f32 %v1225, 0.0
        %v1310 = vmax.f32 %v1230, 0.0
        %v1311 = vmax.f32 %v1233, 0.0
        %v1312 = vmax.f32 %v1238, 0.0
        %v1313 = vmax.f32 %v1241, 0.0
        %v1314 = vmax.f32 %v1246, 0.0
        %v1315 = vmax.f32 %v1249, 0.0
        %v1316 = vld [vmem:[%s5] sm:$0x1]
        %v1318 = vlaneseq
        %v1319 = vshrl.u32 %v1318, 7
        %v1320 = vsub.s32 0, %v1319
        %v1321 = vrot.slane %v1316, %v1320
        %v1339 = vunpack.c.l.b16 %v892
        %v1340 = vunpack.c.l.b16 %v893
        %v1341 = vunpack.c.l.b16 %v894
        %v1342 = vunpack.c.l.b16 %v895
        %v1343 = vunpack.c.l.b16 %v896
        %v1344 = vunpack.c.l.b16 %v897
        %v1345 = vunpack.c.l.b16 %v898
        %v1346 = vunpack.c.l.b16 %v899
        %v1347 = vunpack.c.l.b16 %v900
        %v1348 = vunpack.c.l.b16 %v901
        %v1349 = vunpack.c.l.b16 %v902
        %v1350 = vunpack.c.l.b16 %v903
        %v1351 = vunpack.c.l.b16 %v904
        %v1352 = vunpack.c.l.b16 %v905
        %v1353 = vunpack.c.l.b16 %v906
        %v1354 = vunpack.c.l.b16 %v907
        %v1355 = vpack.c.b16 %v1340, %v1339
        %v1356 = vpack.c.b16 %v1342, %v1341
        %v1357 = vpack.c.b16 %v1344, %v1343
        %v1358 = vpack.c.b16 %v1346, %v1345
        %v1359 = vpack.c.b16 %v1348, %v1347
        %v1360 = vpack.c.b16 %v1350, %v1349
        %v1361 = vpack.c.b16 %v1352, %v1351
        %v1362 = vpack.c.b16 %v1354, %v1353
        %1371 = vmatprep.subr.bf16.mxu0 0
        %1372 = vmatpush1.bf16.msra.mxu0 %v1355
        %1373 = vmatprep.subr.bf16.mxu0 0
        %1374 = vmatpush1.bf16.msra.mxu0 %v1356
        %1375 = vmatprep.subr.bf16.mxu0 0
        %1376 = vmatpush1.bf16.msra.mxu0 %v1357
        %1377 = vmatprep.subr.bf16.mxu0 0
        %1378 = vmatpush1.bf16.msra.mxu0 %v1358
        %1379 = vmatprep.subr.bf16.mxu0 0
        %1380 = vmatpush1.bf16.msra.mxu0 %v1359
        %1381 = vmatprep.subr.bf16.mxu0 0
        %1382 = vmatpush1.bf16.msra.mxu0 %v1360
        %1383 = vmatprep.subr.bf16.mxu0 0
        %1384 = vmatpush1.bf16.msra.mxu0 %v1361
        %1385 = vmatprep.subr.bf16.mxu0 0
        %1386 = vmatpush1.bf16.msra.mxu0 %v1362
        %1387 = vmatprep.subr.bf16.mxu0 0
        %1388 = vmatpush1.bf16.msra.mxu0 0
        %1389 = vmatprep.subr.bf16.mxu0 0
        %1390 = vmatpush1.bf16.msra.mxu0 0
        %1391 = vmatprep.subr.bf16.mxu0 0
        %1392 = vmatpush1.bf16.msra.mxu0 0
        %1393 = vmatprep.subr.bf16.mxu0 0
        %1394 = vmatpush1.bf16.msra.mxu0 0
        %1395 = vmatprep.subr.bf16.mxu0 0
        %1396 = vmatpush1.bf16.msra.mxu0 0
        %1397 = vmatprep.subr.bf16.mxu0 0
        %1398 = vmatpush1.bf16.msra.mxu0 0
        %1399 = vmatprep.subr.bf16.mxu0 0
        %1400 = vmatpush1.bf16.msra.mxu0 0
        %1401 = vmatprep.subr.bf16.mxu0 0
        %1402 = vmatpush1.bf16.msra.mxu0 0
        %1403 = vmatprep.mubr.bf16.mxu0 0
        %1404 = vmatmul.mubr.bf16.gmra.mrb[0].mxu0 %v860
        %v1405 = vpop.f32.mrb[0].mxu0
        %v1406 = vadd.f32 %v1321, %v1405
        %v1407 = vpop.f32.mrb[0].mxu0
        %v1408 = vpop.f32.mrb[0].mxu0
        %v1409 = vadd.f32 %v1321, %v1408
        %v1410 = vpop.f32.mrb[0].mxu0
        %1411 = vmatprep.mubr.bf16.mxu0 0
        %1412 = vmatmul.mubr.bf16.gmra.mrb[0].mxu0 %v861
        %v1413 = vpop.f32.mrb[0].mxu0
        %v1414 = vadd.f32 %v1321, %v1413
        %v1415 = vpop.f32.mrb[0].mxu0
        %v1416 = vpop.f32.mrb[0].mxu0
        %v1417 = vadd.f32 %v1321, %v1416
        %v1418 = vpop.f32.mrb[0].mxu0
        %1419 = vmatprep.mubr.bf16.mxu0 0
        %1420 = vmatmul.mubr.bf16.gmra.mrb[0].mxu0 %v862
        %v1421 = vpop.f32.mrb[0].mxu0
        %v1422 = vadd.f32 %v1321, %v1421
        %v1423 = vpop.f32.mrb[0].mxu0
        %v1424 = vpop.f32.mrb[0].mxu0
        %v1425 = vadd.f32 %v1321, %v1424
        %v1426 = vpop.f32.mrb[0].mxu0
        %1427 = vmatprep.mubr.bf16.mxu0 0
        %1428 = vmatmul.mubr.bf16.gmra.mrb[0].mxu0 %v863
        %v1429 = vpop.f32.mrb[0].mxu0
        %v1430 = vadd.f32 %v1321, %v1429
        %v1431 = vpop.f32.mrb[0].mxu0
        %v1432 = vpop.f32.mrb[0].mxu0
        %v1433 = vadd.f32 %v1321, %v1432
        %v1434 = vpop.f32.mrb[0].mxu0
        %1435 = vmatprep.mubr.bf16.mxu0 0
        %1436 = vmatmul.mubr.bf16.gmra.mrb[0].mxu0 %v864
        %v1437 = vpop.f32.mrb[0].mxu0
        %v1438 = vadd.f32 %v1321, %v1437
        %v1439 = vpop.f32.mrb[0].mxu0
        %v1440 = vpop.f32.mrb[0].mxu0
        %v1441 = vadd.f32 %v1321, %v1440
        %v1442 = vpop.f32.mrb[0].mxu0
        %1443 = vmatprep.mubr.bf16.mxu0 0
        %1444 = vmatmul.mubr.bf16.gmra.mrb[0].mxu0 %v865
        %v1445 = vpop.f32.mrb[0].mxu0
        %v1446 = vadd.f32 %v1321, %v1445
        %v1447 = vpop.f32.mrb[0].mxu0
        %v1448 = vpop.f32.mrb[0].mxu0
        %v1449 = vadd.f32 %v1321, %v1448
        %v1450 = vpop.f32.mrb[0].mxu0
        %1451 = vmatprep.mubr.bf16.mxu0 0
        %1452 = vmatmul.mubr.bf16.gmra.mrb[0].mxu0 %v866
        %v1453 = vpop.f32.mrb[0].mxu0
        %v1454 = vadd.f32 %v1321, %v1453
        %v1455 = vpop.f32.mrb[0].mxu0
        %v1456 = vpop.f32.mrb[0].mxu0
        %v1457 = vadd.f32 %v1321, %v1456
        %v1458 = vpop.f32.mrb[0].mxu0
        %1459 = vmatprep.mubr.bf16.mxu0 0
        %1460 = vmatmul.mubr.bf16.gmra.mrb[0].mxu0 %v867
        %v1461 = vpop.f32.mrb[0].mxu0
        %v1462 = vadd.f32 %v1321, %v1461
        %v1463 = vpop.f32.mrb[0].mxu0
        %v1464 = vpop.f32.mrb[0].mxu0
        %v1465 = vadd.f32 %v1321, %v1464
        %v1466 = vpop.f32.mrb[0].mxu0
        %1467 = vmatprep.mubr.bf16.mxu0 0
        %1468 = vmatmul.mubr.bf16.gmra.mrb[0].mxu0 %v868
        %v1469 = vpop.f32.mrb[0].mxu0
        %v1470 = vadd.f32 %v1321, %v1469
        %v1471 = vpop.f32.mrb[0].mxu0
        %v1472 = vpop.f32.mrb[0].mxu0
        %v1473 = vadd.f32 %v1321, %v1472
        %v1474 = vpop.f32.mrb[0].mxu0
        %1475 = vmatprep.mubr.bf16.mxu0 0
        %1476 = vmatmul.mubr.bf16.gmra.mrb[0].mxu0 %v869
        %v1477 = vpop.f32.mrb[0].mxu0
        %v1478 = vadd.f32 %v1321, %v1477
        %v1479 = vpop.f32.mrb[0].mxu0
        %v1480 = vpop.f32.mrb[0].mxu0
        %v1481 = vadd.f32 %v1321, %v1480
        %v1482 = vpop.f32.mrb[0].mxu0
        %1483 = vmatprep.mubr.bf16.mxu0 0
        %1484 = vmatmul.mubr.bf16.gmra.mrb[0].mxu0 %v870
        %v1485 = vpop.f32.mrb[0].mxu0
        %v1486 = vadd.f32 %v1321, %v1485
        %v1487 = vpop.f32.mrb[0].mxu0
        %v1488 = vpop.f32.mrb[0].mxu0
        %v1489 = vadd.f32 %v1321, %v1488
        %v1490 = vpop.f32.mrb[0].mxu0
        %1491 = vmatprep.mubr.bf16.mxu0 0
        %1492 = vmatmul.mubr.bf16.gmra.mrb[0].mxu0 %v871
        %v1493 = vpop.f32.mrb[0].mxu0
        %v1494 = vadd.f32 %v1321, %v1493
        %v1495 = vpop.f32.mrb[0].mxu0
        %v1496 = vpop.f32.mrb[0].mxu0
        %v1497 = vadd.f32 %v1321, %v1496
        %v1498 = vpop.f32.mrb[0].mxu0
        %1499 = vmatprep.mubr.bf16.mxu0 0
        %1500 = vmatmul.mubr.bf16.gmra.mrb[0].mxu0 %v872
        %v1501 = vpop.f32.mrb[0].mxu0
        %v1502 = vadd.f32 %v1321, %v1501
        %v1503 = vpop.f32.mrb[0].mxu0
        %v1504 = vpop.f32.mrb[0].mxu0
        %v1505 = vadd.f32 %v1321, %v1504
        %v1506 = vpop.f32.mrb[0].mxu0
        %1507 = vmatprep.mubr.bf16.mxu0 0
        %1508 = vmatmul.mubr.bf16.gmra.mrb[0].mxu0 %v873
        %v1509 = vpop.f32.mrb[0].mxu0
        %v1510 = vadd.f32 %v1321, %v1509
        %v1511 = vpop.f32.mrb[0].mxu0
        %v1512 = vpop.f32.mrb[0].mxu0
        %v1513 = vadd.f32 %v1321, %v1512
        %v1514 = vpop.f32.mrb[0].mxu0
        %1515 = vmatprep.mubr.bf16.mxu0 0
        %1516 = vmatmul.mubr.bf16.gmra.mrb[0].mxu0 %v874
        %v1517 = vpop.f32.mrb[0].mxu0
        %v1518 = vadd.f32 %v1321, %v1517
        %v1519 = vpop.f32.mrb[0].mxu0
        %v1520 = vpop.f32.mrb[0].mxu0
        %v1521 = vadd.f32 %v1321, %v1520
        %v1522 = vpop.f32.mrb[0].mxu0
        %1523 = vmatprep.mubr.bf16.mxu0 0
        %1524 = vmatmul.mubr.bf16.gmra.mrb[0].mxu0 %v875
        %v1525 = vpop.f32.mrb[0].mxu0
        %v1526 = vadd.f32 %v1321, %v1525
        %v1527 = vpop.f32.mrb[0].mxu0
        %v1528 = vpop.f32.mrb[0].mxu0
        %v1529 = vadd.f32 %v1321, %v1528
        %v1530 = vpop.f32.mrb[0].mxu0
        %1531 = vmatprep.mubr.bf16.mxu0 0
        %1532 = vmatmul.mubr.bf16.gmra.mrb[0].mxu0 %v876
        %v1533 = vpop.f32.mrb[0].mxu0
        %v1534 = vadd.f32 %v1321, %v1533
        %v1535 = vpop.f32.mrb[0].mxu0
        %v1536 = vpop.f32.mrb[0].mxu0
        %v1537 = vadd.f32 %v1321, %v1536
        %v1538 = vpop.f32.mrb[0].mxu0
        %1539 = vmatprep.mubr.bf16.mxu0 0
        %1540 = vmatmul.mubr.bf16.gmra.mrb[0].mxu0 %v877
        %v1541 = vpop.f32.mrb[0].mxu0
        %v1542 = vadd.f32 %v1321, %v1541
        %v1543 = vpop.f32.mrb[0].mxu0
        %v1544 = vpop.f32.mrb[0].mxu0
        %v1545 = vadd.f32 %v1321, %v1544
        %v1546 = vpop.f32.mrb[0].mxu0
        %1547 = vmatprep.mubr.bf16.mxu0 0
        %1548 = vmatmul.mubr.bf16.gmra.mrb[0].mxu0 %v878
        %v1549 = vpop.f32.mrb[0].mxu0
        %v1550 = vadd.f32 %v1321, %v1549
        %v1551 = vpop.f32.mrb[0].mxu0
        %v1552 = vpop.f32.mrb[0].mxu0
        %v1553 = vadd.f32 %v1321, %v1552
        %v1554 = vpop.f32.mrb[0].mxu0
        %1555 = vmatprep.mubr.bf16.mxu0 0
        %1556 = vmatmul.mubr.bf16.gmra.mrb[0].mxu0 %v879
        %v1557 = vpop.f32.mrb[0].mxu0
        %v1558 = vadd.f32 %v1321, %v1557
        %v1559 = vpop.f32.mrb[0].mxu0
        %v1560 = vpop.f32.mrb[0].mxu0
        %v1561 = vadd.f32 %v1321, %v1560
        %v1562 = vpop.f32.mrb[0].mxu0
        %1563 = vmatprep.mubr.bf16.mxu0 0
        %1564 = vmatmul.mubr.bf16.gmra.mrb[0].mxu0 %v880
        %v1565 = vpop.f32.mrb[0].mxu0
        %v1566 = vadd.f32 %v1321, %v1565
        %v1567 = vpop.f32.mrb[0].mxu0
        %v1568 = vpop.f32.mrb[0].mxu0
        %v1569 = vadd.f32 %v1321, %v1568
        %v1570 = vpop.f32.mrb[0].mxu0
        %1571 = vmatprep.mubr.bf16.mxu0 0
        %1572 = vmatmul.mubr.bf16.gmra.mrb[0].mxu0 %v881
        %v1573 = vpop.f32.mrb[0].mxu0
        %v1574 = vadd.f32 %v1321, %v1573
        %v1575 = vpop.f32.mrb[0].mxu0
        %v1576 = vpop.f32.mrb[0].mxu0
        %v1577 = vadd.f32 %v1321, %v1576
        %v1578 = vpop.f32.mrb[0].mxu0
        %1579 = vmatprep.mubr.bf16.mxu0 0
        %1580 = vmatmul.mubr.bf16.gmra.mrb[0].mxu0 %v882
        %v1581 = vpop.f32.mrb[0].mxu0
        %v1582 = vadd.f32 %v1321, %v1581
        %v1583 = vpop.f32.mrb[0].mxu0
        %v1584 = vpop.f32.mrb[0].mxu0
        %v1585 = vadd.f32 %v1321, %v1584
        %v1586 = vpop.f32.mrb[0].mxu0
        %1587 = vmatprep.mubr.bf16.mxu0 0
        %1588 = vmatmul.mubr.bf16.gmra.mrb[0].mxu0 %v883
        %v1589 = vpop.f32.mrb[0].mxu0
        %v1590 = vadd.f32 %v1321, %v1589
        %v1591 = vpop.f32.mrb[0].mxu0
        %v1592 = vpop.f32.mrb[0].mxu0
        %v1593 = vadd.f32 %v1321, %v1592
        %v1594 = vpop.f32.mrb[0].mxu0
        %1595 = vmatprep.mubr.bf16.mxu0 0
        %1596 = vmatmul.mubr.bf16.gmra.mrb[0].mxu0 %v884
        %v1597 = vpop.f32.mrb[0].mxu0
        %v1598 = vadd.f32 %v1321, %v1597
        %v1599 = vpop.f32.mrb[0].mxu0
        %v1600 = vpop.f32.mrb[0].mxu0
        %v1601 = vadd.f32 %v1321, %v1600
        %v1602 = vpop.f32.mrb[0].mxu0
        %1603 = vmatprep.mubr.bf16.mxu0 0
        %1604 = vmatmul.mubr.bf16.gmra.mrb[0].mxu0 %v885
        %v1605 = vpop.f32.mrb[0].mxu0
        %v1606 = vadd.f32 %v1321, %v1605
        %v1607 = vpop.f32.mrb[0].mxu0
        %v1608 = vpop.f32.mrb[0].mxu0
        %v1609 = vadd.f32 %v1321, %v1608
        %v1610 = vpop.f32.mrb[0].mxu0
        %1611 = vmatprep.mubr.bf16.mxu0 0
        %1612 = vmatmul.mubr.bf16.gmra.mrb[0].mxu0 %v886
        %v1613 = vpop.f32.mrb[0].mxu0
        %v1614 = vadd.f32 %v1321, %v1613
        %v1615 = vpop.f32.mrb[0].mxu0
        %v1616 = vpop.f32.mrb[0].mxu0
        %v1617 = vadd.f32 %v1321, %v1616
        %v1618 = vpop.f32.mrb[0].mxu0
        %1619 = vmatprep.mubr.bf16.mxu0 0
        %1620 = vmatmul.mubr.bf16.gmra.mrb[0].mxu0 %v887
        %v1621 = vpop.f32.mrb[0].mxu0
        %v1622 = vadd.f32 %v1321, %v1621
        %v1623 = vpop.f32.mrb[0].mxu0
        %v1624 = vpop.f32.mrb[0].mxu0
        %v1625 = vadd.f32 %v1321, %v1624
        %v1626 = vpop.f32.mrb[0].mxu0
        %1627 = vmatprep.mubr.bf16.mxu0 0
        %1628 = vmatmul.mubr.bf16.gmra.mrb[0].mxu0 %v888
        %v1629 = vpop.f32.mrb[0].mxu0
        %v1630 = vadd.f32 %v1321, %v1629
        %v1631 = vpop.f32.mrb[0].mxu0
        %v1632 = vpop.f32.mrb[0].mxu0
        %v1633 = vadd.f32 %v1321, %v1632
        %v1634 = vpop.f32.mrb[0].mxu0
        %1635 = vmatprep.mubr.bf16.mxu0 0
        %1636 = vmatmul.mubr.bf16.gmra.mrb[0].mxu0 %v889
        %v1637 = vpop.f32.mrb[0].mxu0
        %v1638 = vadd.f32 %v1321, %v1637
        %v1639 = vpop.f32.mrb[0].mxu0
        %v1640 = vpop.f32.mrb[0].mxu0
        %v1641 = vadd.f32 %v1321, %v1640
        %v1642 = vpop.f32.mrb[0].mxu0
        %1643 = vmatprep.mubr.bf16.mxu0 0
        %1644 = vmatmul.mubr.bf16.gmra.mrb[0].mxu0 %v890
        %v1645 = vpop.f32.mrb[0].mxu0
        %v1646 = vadd.f32 %v1321, %v1645
        %v1647 = vpop.f32.mrb[0].mxu0
        %v1648 = vpop.f32.mrb[0].mxu0
        %v1649 = vadd.f32 %v1321, %v1648
        %v1650 = vpop.f32.mrb[0].mxu0
        %1651 = vmatprep.mubr.bf16.mxu0 0
        %1652 = vmatmul.mubr.bf16.gmra.mrb[0].mxu0 %v891
        %v1653 = vpop.f32.mrb[0].mxu0
        %v1654 = vadd.f32 %v1321, %v1653
        %v1655 = vpop.f32.mrb[0].mxu0
        %v1656 = vpop.f32.mrb[0].mxu0
        %v1657 = vadd.f32 %v1321, %v1656
        %v1658 = vpop.f32.mrb[0].mxu0
        %1659 = vdwg.mxu0
        %v1660 = vmax.f32 %v1406, 0.0
        %v1661 = vmax.f32 %v1409, 0.0
        %v1662 = vmax.f32 %v1414, 0.0
        %v1663 = vmax.f32 %v1417, 0.0
        %v1664 = vmax.f32 %v1422, 0.0
        %v1665 = vmax.f32 %v1425, 0.0
        %v1666 = vmax.f32 %v1430, 0.0
        %v1667 = vmax.f32 %v1433, 0.0
        %v1668 = vmax.f32 %v1438, 0.0
        %v1669 = vmax.f32 %v1441, 0.0
        %v1670 = vmax.f32 %v1446, 0.0
        %v1671 = vmax.f32 %v1449, 0.0
        %v1672 = vmax.f32 %v1454, 0.0
        %v1673 = vmax.f32 %v1457, 0.0
        %v1674 = vmax.f32 %v1462, 0.0
        %v1675 = vmax.f32 %v1465, 0.0
        %v1676 = vmax.f32 %v1470, 0.0
        %v1677 = vmax.f32 %v1473, 0.0
        %v1678 = vmax.f32 %v1478, 0.0
        %v1679 = vmax.f32 %v1481, 0.0
        %v1680 = vmax.f32 %v1486, 0.0
        %v1681 = vmax.f32 %v1489, 0.0
        %v1682 = vmax.f32 %v1494, 0.0
        %v1683 = vmax.f32 %v1497, 0.0
        %v1684 = vmax.f32 %v1502, 0.0
        %v1685 = vmax.f32 %v1505, 0.0
        %v1686 = vmax.f32 %v1510, 0.0
        %v1687 = vmax.f32 %v1513, 0.0
        %v1688 = vmax.f32 %v1518, 0.0
        %v1689 = vmax.f32 %v1521, 0.0
        %v1690 = vmax.f32 %v1526, 0.0
        %v1691 = vmax.f32 %v1529, 0.0
        %v1692 = vmax.f32 %v1534, 0.0
        %v1693 = vmax.f32 %v1537, 0.0
        %v1694 = vmax.f32 %v1542, 0.0
        %v1695 = vmax.f32 %v1545, 0.0
        %v1696 = vmax.f32 %v1550, 0.0
        %v1697 = vmax.f32 %v1553, 0.0
        %v1698 = vmax.f32 %v1558, 0.0
        %v1699 = vmax.f32 %v1561, 0.0
        %v1700 = vmax.f32 %v1566, 0.0
        %v1701 = vmax.f32 %v1569, 0.0
        %v1702 = vmax.f32 %v1574, 0.0
        %v1703 = vmax.f32 %v1577, 0.0
        %v1704 = vmax.f32 %v1582, 0.0
        %v1705 = vmax.f32 %v1585, 0.0
        %v1706 = vmax.f32 %v1590, 0.0
        %v1707 = vmax.f32 %v1593, 0.0
        %v1708 = vmax.f32 %v1598, 0.0
        %v1709 = vmax.f32 %v1601, 0.0
        %v1710 = vmax.f32 %v1606, 0.0
        %v1711 = vmax.f32 %v1609, 0.0
        %v1712 = vmax.f32 %v1614, 0.0
        %v1713 = vmax.f32 %v1617, 0.0
        %v1714 = vmax.f32 %v1622, 0.0
        %v1715 = vmax.f32 %v1625, 0.0
        %v1716 = vmax.f32 %v1630, 0.0
        %v1717 = vmax.f32 %v1633, 0.0
        %v1718 = vmax.f32 %v1638, 0.0
        %v1719 = vmax.f32 %v1641, 0.0
        %v1720 = vmax.f32 %v1646, 0.0
        %v1721 = vmax.f32 %v1649, 0.0
        %v1722 = vmax.f32 %v1654, 0.0
        %v1723 = vmax.f32 %v1657, 0.0
        %v1724 = vpack.c.bf16 %v1253, %v1252
        %v1725 = vpack.c.bf16 %v1255, %v1254
        %v1726 = vpack.c.bf16 %v1257, %v1256
        %v1727 = vpack.c.bf16 %v1259, %v1258
        %v1728 = vpack.c.bf16 %v1261, %v1260
        %v1729 = vpack.c.bf16 %v1263, %v1262
        %v1730 = vpack.c.bf16 %v1265, %v1264
        %v1731 = vpack.c.bf16 %v1267, %v1266
        %v1732 = vpack.c.bf16 %v1269, %v1268
        %v1733 = vpack.c.bf16 %v1271, %v1270
        %v1734 = vpack.c.bf16 %v1273, %v1272
        %v1735 = vpack.c.bf16 %v1275, %v1274
        %v1736 = vpack.c.bf16 %v1277, %v1276
        %v1737 = vpack.c.bf16 %v1279, %v1278
        %v1738 = vpack.c.bf16 %v1281, %v1280
        %v1739 = vpack.c.bf16 %v1283, %v1282
        %v1740 = vpack.c.bf16 %v1285, %v1284
        %v1741 = vpack.c.bf16 %v1287, %v1286
        %v1742 = vpack.c.bf16 %v1289, %v1288
        %v1743 = vpack.c.bf16 %v1291, %v1290
        %v1744 = vpack.c.bf16 %v1293, %v1292
        %v1745 = vpack.c.bf16 %v1295, %v1294
        %v1746 = vpack.c.bf16 %v1297, %v1296
        %v1747 = vpack.c.bf16 %v1299, %v1298
        %v1748 = vpack.c.bf16 %v1301, %v1300
        %v1749 = vpack.c.bf16 %v1303, %v1302
        %v1750 = vpack.c.bf16 %v1305, %v1304
        %v1751 = vpack.c.bf16 %v1307, %v1306
        %v1752 = vpack.c.bf16 %v1309, %v1308
        %v1753 = vpack.c.bf16 %v1311, %v1310
        %v1754 = vpack.c.bf16 %v1313, %v1312
        %v1755 = vpack.c.bf16 %v1315, %v1314
        %v1756 = vld [vmem:[#allocation10] sm:$0xf]
        %v1757 = vld [vmem:[#allocation10 + $0x4] sm:$0xf]
        %v1758 = vld [vmem:[#allocation10 + $0x8] sm:$0xf]
        %v1759 = vld [vmem:[#allocation10 + $0xc] sm:$0xf]
        %v1760 = vld [vmem:[#allocation10 + $0x10] sm:$0xf]
        %v1761 = vld [vmem:[#allocation10 + $0x14] sm:$0xf]
        %v1762 = vld [vmem:[#allocation10 + $0x18] sm:$0xf]
        %v1763 = vld [vmem:[#allocation10 + $0x1c] sm:$0xf]
        %v1764 = vld [vmem:[#allocation10 + $0x20] sm:$0xf]
        %v1765 = vld [vmem:[#allocation10 + $0x24] sm:$0xf]
        %v1766 = vld [vmem:[#allocation10 + $0x28] sm:$0xf]
        %v1767 = vld [vmem:[#allocation10 + $0x2c] sm:$0xf]
        %v1768 = vld [vmem:[#allocation10 + $0x30] sm:$0xf]
        %v1769 = vld [vmem:[#allocation10 + $0x34] sm:$0xf]
        %v1770 = vld [vmem:[#allocation10 + $0x38] sm:$0xf]
        %v1771 = vld [vmem:[#allocation10 + $0x3c] sm:$0xf]
        %v1772 = vpack.c.bf16 %v1661, %v1660
        %v1773 = vpack.c.bf16 %v1663, %v1662
        %v1774 = vpack.c.bf16 %v1665, %v1664
        %v1775 = vpack.c.bf16 %v1667, %v1666
        %v1776 = vpack.c.bf16 %v1669, %v1668
        %v1777 = vpack.c.bf16 %v1671, %v1670
        %v1778 = vpack.c.bf16 %v1673, %v1672
        %v1779 = vpack.c.bf16 %v1675, %v1674
        %v1780 = vpack.c.bf16 %v1677, %v1676
        %v1781 = vpack.c.bf16 %v1679, %v1678
        %v1782 = vpack.c.bf16 %v1681, %v1680
        %v1783 = vpack.c.bf16 %v1683, %v1682
        %v1784 = vpack.c.bf16 %v1685, %v1684
        %v1785 = vpack.c.bf16 %v1687, %v1686
        %v1786 = vpack.c.bf16 %v1689, %v1688
        %v1787 = vpack.c.bf16 %v1691, %v1690
        %v1788 = vpack.c.bf16 %v1693, %v1692
        %v1789 = vpack.c.bf16 %v1695, %v1694
        %v1790 = vpack.c.bf16 %v1697, %v1696
        %v1791 = vpack.c.bf16 %v1699, %v1698
        %v1792 = vpack.c.bf16 %v1701, %v1700
        %v1793 = vpack.c.bf16 %v1703, %v1702
        %v1794 = vpack.c.bf16 %v1705, %v1704
        %v1795 = vpack.c.bf16 %v1707, %v1706
        %v1796 = vpack.c.bf16 %v1709, %v1708
        %v1797 = vpack.c.bf16 %v1711, %v1710
        %v1798 = vpack.c.bf16 %v1713, %v1712
        %v1799 = vpack.c.bf16 %v1715, %v1714
        %v1800 = vpack.c.bf16 %v1717, %v1716
        %v1801 = vpack.c.bf16 %v1719, %v1718
        %v1802 = vpack.c.bf16 %v1721, %v1720
        %v1803 = vpack.c.bf16 %v1723, %v1722
        %v1804 = vld [vmem:[#allocation11] sm:$0xf]
        %v1805 = vld [vmem:[#allocation11 + $0x4] sm:$0xf]
        %v1806 = vld [vmem:[#allocation11 + $0x8] sm:$0xf]
        %v1807 = vld [vmem:[#allocation11 + $0xc] sm:$0xf]
        %v1808 = vld [vmem:[#allocation11 + $0x10] sm:$0xf]
        %v1809 = vld [vmem:[#allocation11 + $0x14] sm:$0xf]
        %v1810 = vld [vmem:[#allocation11 + $0x18] sm:$0xf]
        %v1811 = vld [vmem:[#allocation11 + $0x1c] sm:$0xf]
        %v1812 = vld [vmem:[#allocation11 + $0x20] sm:$0xf]
        %v1813 = vld [vmem:[#allocation11 + $0x24] sm:$0xf]
        %v1814 = vld [vmem:[#allocation11 + $0x28] sm:$0xf]
        %v1815 = vld [vmem:[#allocation11 + $0x2c] sm:$0xf]
        %v1816 = vld [vmem:[#allocation11 + $0x30] sm:$0xf]
        %v1817 = vld [vmem:[#allocation11 + $0x34] sm:$0xf]
        %v1818 = vld [vmem:[#allocation11 + $0x38] sm:$0xf]
        %v1819 = vld [vmem:[#allocation11 + $0x3c] sm:$0xf]
        %v1820 = vld [vmem:[%s7] sm:$0x1]
        %v1822 = vlaneseq
        %v1823 = vshrl.u32 %v1822, 7
        %v1824 = vsub.s32 0, %v1823
        %v1825 = vrot.slane %v1820, %v1824
        %v1843 = vunpack.c.l.b16 %v1756
        %v1844 = vunpack.c.l.b16 %v1757
        %v1845 = vunpack.c.l.b16 %v1758
        %v1846 = vunpack.c.l.b16 %v1759
        %v1847 = vunpack.c.l.b16 %v1760
        %v1848 = vunpack.c.l.b16 %v1761
        %v1849 = vunpack.c.l.b16 %v1762
        %v1850 = vunpack.c.l.b16 %v1763
        %v1851 = vunpack.c.l.b16 %v1764
        %v1852 = vunpack.c.l.b16 %v1765
        %v1853 = vunpack.c.l.b16 %v1766
        %v1854 = vunpack.c.l.b16 %v1767
        %v1855 = vunpack.c.l.b16 %v1768
        %v1856 = vunpack.c.l.b16 %v1769
        %v1857 = vunpack.c.l.b16 %v1770
        %v1858 = vunpack.c.l.b16 %v1771
        %v1859 = vpack.c.b16 %v1844, %v1843
        %v1860 = vpack.c.b16 %v1846, %v1845
        %v1861 = vpack.c.b16 %v1848, %v1847
        %v1862 = vpack.c.b16 %v1850, %v1849
        %v1863 = vpack.c.b16 %v1852, %v1851
        %v1864 = vpack.c.b16 %v1854, %v1853
        %v1865 = vpack.c.b16 %v1856, %v1855
        %v1866 = vpack.c.b16 %v1858, %v1857
        %1875 = vmatprep.subr.bf16.mxu0 0
        %1876 = vmatpush1.bf16.msra.mxu0 %v1859
        %1877 = vmatprep.subr.bf16.mxu0 0
        %1878 = vmatpush1.bf16.msra.mxu0 %v1860
        %1879 = vmatprep.subr.bf16.mxu0 0
        %1880 = vmatpush1.bf16.msra.mxu0 %v1861
        %1881 = vmatprep.subr.bf16.mxu0 0
        %1882 = vmatpush1.bf16.msra.mxu0 %v1862
        %1883 = vmatprep.subr.bf16.mxu0 0
        %1884 = vmatpush1.bf16.msra.mxu0 %v1863
        %1885 = vmatprep.subr.bf16.mxu0 0
        %1886 = vmatpush1.bf16.msra.mxu0 %v1864
        %1887 = vmatprep.subr.bf16.mxu0 0
        %1888 = vmatpush1.bf16.msra.mxu0 %v1865
        %1889 = vmatprep.subr.bf16.mxu0 0
        %1890 = vmatpush1.bf16.msra.mxu0 %v1866
        %1891 = vmatprep.subr.bf16.mxu0 0
        %1892 = vmatpush1.bf16.msra.mxu0 0
        %1893 = vmatprep.subr.bf16.mxu0 0
        %1894 = vmatpush1.bf16.msra.mxu0 0
        %1895 = vmatprep.subr.bf16.mxu0 0
        %1896 = vmatpush1.bf16.msra.mxu0 0
        %1897 = vmatprep.subr.bf16.mxu0 0
        %1898 = vmatpush1.bf16.msra.mxu0 0
        %1899 = vmatprep.subr.bf16.mxu0 0
        %1900 = vmatpush1.bf16.msra.mxu0 0
        %1901 = vmatprep.subr.bf16.mxu0 0
        %1902 = vmatpush1.bf16.msra.mxu0 0
        %1903 = vmatprep.subr.bf16.mxu0 0
        %1904 = vmatpush1.bf16.msra.mxu0 0
        %1905 = vmatprep.subr.bf16.mxu0 0
        %1906 = vmatpush1.bf16.msra.mxu0 0
        %1907 = vmatprep.mubr.bf16.mxu0 0
        %1908 = vmatmul.mubr.bf16.gmra.mrb[0].mxu0 %v1724
        %v1909 = vpop.f32.mrb[0].mxu0
        %v1910 = vadd.f32 %v1825, %v1909
        %v1911 = vpop.f32.mrb[0].mxu0
        %v1912 = vpop.f32.mrb[0].mxu0
        %v1913 = vadd.f32 %v1825, %v1912
        %v1914 = vpop.f32.mrb[0].mxu0
        %1915 = vmatprep.mubr.bf16.mxu0 0
        %1916 = vmatmul.mubr.bf16.gmra.mrb[0].mxu0 %v1725
        %v1917 = vpop.f32.mrb[0].mxu0
        %v1918 = vadd.f32 %v1825, %v1917
        %v1919 = vpop.f32.mrb[0].mxu0
        %v1920 = vpop.f32.mrb[0].mxu0
        %v1921 = vadd.f32 %v1825, %v1920
        %v1922 = vpop.f32.mrb[0].mxu0
        %1923 = vmatprep.mubr.bf16.mxu0 0
        %1924 = vmatmul.mubr.bf16.gmra.mrb[0].mxu0 %v1726
        %v1925 = vpop.f32.mrb[0].mxu0
        %v1926 = vadd.f32 %v1825, %v1925
        %v1927 = vpop.f32.mrb[0].mxu0
        %v1928 = vpop.f32.mrb[0].mxu0
        %v1929 = vadd.f32 %v1825, %v1928
        %v1930 = vpop.f32.mrb[0].mxu0
        %1931 = vmatprep.mubr.bf16.mxu0 0
        %1932 = vmatmul.mubr.bf16.gmra.mrb[0].mxu0 %v1727
        %v1933 = vpop.f32.mrb[0].mxu0
        %v1934 = vadd.f32 %v1825, %v1933
        %v1935 = vpop.f32.mrb[0].mxu0
        %v1936 = vpop.f32.mrb[0].mxu0
        %v1937 = vadd.f32 %v1825, %v1936
        %v1938 = vpop.f32.mrb[0].mxu0
        %1939 = vmatprep.mubr.bf16.mxu0 0
        %1940 = vmatmul.mubr.bf16.gmra.mrb[0].mxu0 %v1728
        %v1941 = vpop.f32.mrb[0].mxu0
        %v1942 = vadd.f32 %v1825, %v1941
        %v1943 = vpop.f32.mrb[0].mxu0
        %v1944 = vpop.f32.mrb[0].mxu0
        %v1945 = vadd.f32 %v1825, %v1944
        %v1946 = vpop.f32.mrb[0].mxu0
        %1947 = vmatprep.mubr.bf16.mxu0 0
        %1948 = vmatmul.mubr.bf16.gmra.mrb[0].mxu0 %v1729
        %v1949 = vpop.f32.mrb[0].mxu0
        %v1950 = vadd.f32 %v1825, %v1949
        %v1951 = vpop.f32.mrb[0].mxu0
        %v1952 = vpop.f32.mrb[0].mxu0
        %v1953 = vadd.f32 %v1825, %v1952
        %v1954 = vpop.f32.mrb[0].mxu0
        %1955 = vmatprep.mubr.bf16.mxu0 0
        %1956 = vmatmul.mubr.bf16.gmra.mrb[0].mxu0 %v1730
        %v1957 = vpop.f32.mrb[0].mxu0
        %v1958 = vadd.f32 %v1825, %v1957
        %v1959 = vpop.f32.mrb[0].mxu0
        %v1960 = vpop.f32.mrb[0].mxu0
        %v1961 = vadd.f32 %v1825, %v1960
        %v1962 = vpop.f32.mrb[0].mxu0
        %1963 = vmatprep.mubr.bf16.mxu0 0
        %1964 = vmatmul.mubr.bf16.gmra.mrb[0].mxu0 %v1731
        %v1965 = vpop.f32.mrb[0].mxu0
        %v1966 = vadd.f32 %v1825, %v1965
        %v1967 = vpop.f32.mrb[0].mxu0
        %v1968 = vpop.f32.mrb[0].mxu0
        %v1969 = vadd.f32 %v1825, %v1968
        %v1970 = vpop.f32.mrb[0].mxu0
        %1971 = vmatprep.mubr.bf16.mxu0 0
        %1972 = vmatmul.mubr.bf16.gmra.mrb[0].mxu0 %v1732
        %v1973 = vpop.f32.mrb[0].mxu0
        %v1974 = vadd.f32 %v1825, %v1973
        %v1975 = vpop.f32.mrb[0].mxu0
        %v1976 = vpop.f32.mrb[0].mxu0
        %v1977 = vadd.f32 %v1825, %v1976
        %v1978 = vpop.f32.mrb[0].mxu0
        %1979 = vmatprep.mubr.bf16.mxu0 0
        %1980 = vmatmul.mubr.bf16.gmra.mrb[0].mxu0 %v1733
        %v1981 = vpop.f32.mrb[0].mxu0
        %v1982 = vadd.f32 %v1825, %v1981
        %v1983 = vpop.f32.mrb[0].mxu0
        %v1984 = vpop.f32.mrb[0].mxu0
        %v1985 = vadd.f32 %v1825, %v1984
        %v1986 = vpop.f32.mrb[0].mxu0
        %1987 = vmatprep.mubr.bf16.mxu0 0
        %1988 = vmatmul.mubr.bf16.gmra.mrb[0].mxu0 %v1734
        %v1989 = vpop.f32.mrb[0].mxu0
        %v1990 = vadd.f32 %v1825, %v1989
        %v1991 = vpop.f32.mrb[0].mxu0
        %v1992 = vpop.f32.mrb[0].mxu0
        %v1993 = vadd.f32 %v1825, %v1992
        %v1994 = vpop.f32.mrb[0].mxu0
        %1995 = vmatprep.mubr.bf16.mxu0 0
        %1996 = vmatmul.mubr.bf16.gmra.mrb[0].mxu0 %v1735
        %v1997 = vpop.f32.mrb[0].mxu0
        %v1998 = vadd.f32 %v1825, %v1997
        %v1999 = vpop.f32.mrb[0].mxu0
        %v2000 = vpop.f32.mrb[0].mxu0
        %v2001 = vadd.f32 %v1825, %v2000
        %v2002 = vpop.f32.mrb[0].mxu0
        %2003 = vmatprep.mubr.bf16.mxu0 0
        %2004 = vmatmul.mubr.bf16.gmra.mrb[0].mxu0 %v1736
        %v2005 = vpop.f32.mrb[0].mxu0
        %v2006 = vadd.f32 %v1825, %v2005
        %v2007 = vpop.f32.mrb[0].mxu0
        %v2008 = vpop.f32.mrb[0].mxu0
        %v2009 = vadd.f32 %v1825, %v2008
        %v2010 = vpop.f32.mrb[0].mxu0
        %2011 = vmatprep.mubr.bf16.mxu0 0
        %2012 = vmatmul.mubr.bf16.gmra.mrb[0].mxu0 %v1737
        %v2013 = vpop.f32.mrb[0].mxu0
        %v2014 = vadd.f32 %v1825, %v2013
        %v2015 = vpop.f32.mrb[0].mxu0
        %v2016 = vpop.f32.mrb[0].mxu0
        %v2017 = vadd.f32 %v1825, %v2016
        %v2018 = vpop.f32.mrb[0].mxu0
        %2019 = vmatprep.mubr.bf16.mxu0 0
        %2020 = vmatmul.mubr.bf16.gmra.mrb[0].mxu0 %v1738
        %v2021 = vpop.f32.mrb[0].mxu0
        %v2022 = vadd.f32 %v1825, %v2021
        %v2023 = vpop.f32.mrb[0].mxu0
        %v2024 = vpop.f32.mrb[0].mxu0
        %v2025 = vadd.f32 %v1825, %v2024
        %v2026 = vpop.f32.mrb[0].mxu0
        %2027 = vmatprep.mubr.bf16.mxu0 0
        %2028 = vmatmul.mubr.bf16.gmra.mrb[0].mxu0 %v1739
        %v2029 = vpop.f32.mrb[0].mxu0
        %v2030 = vadd.f32 %v1825, %v2029
        %v2031 = vpop.f32.mrb[0].mxu0
        %v2032 = vpop.f32.mrb[0].mxu0
        %v2033 = vadd.f32 %v1825, %v2032
        %v2034 = vpop.f32.mrb[0].mxu0
        %2035 = vmatprep.mubr.bf16.mxu0 0
        %2036 = vmatmul.mubr.bf16.gmra.mrb[0].mxu0 %v1740
        %v2037 = vpop.f32.mrb[0].mxu0
        %v2038 = vadd.f32 %v1825, %v2037
        %v2039 = vpop.f32.mrb[0].mxu0
        %v2040 = vpop.f32.mrb[0].mxu0
        %v2041 = vadd.f32 %v1825, %v2040
        %v2042 = vpop.f32.mrb[0].mxu0
        %2043 = vmatprep.mubr.bf16.mxu0 0
        %2044 = vmatmul.mubr.bf16.gmra.mrb[0].mxu0 %v1741
        %v2045 = vpop.f32.mrb[0].mxu0
        %v2046 = vadd.f32 %v1825, %v2045
        %v2047 = vpop.f32.mrb[0].mxu0
        %v2048 = vpop.f32.mrb[0].mxu0
        %v2049 = vadd.f32 %v1825, %v2048
        %v2050 = vpop.f32.mrb[0].mxu0
        %2051 = vmatprep.mubr.bf16.mxu0 0
        %2052 = vmatmul.mubr.bf16.gmra.mrb[0].mxu0 %v1742
        %v2053 = vpop.f32.mrb[0].mxu0
        %v2054 = vadd.f32 %v1825, %v2053
        %v2055 = vpop.f32.mrb[0].mxu0
        %v2056 = vpop.f32.mrb[0].mxu0
        %v2057 = vadd.f32 %v1825, %v2056
        %v2058 = vpop.f32.mrb[0].mxu0
        %2059 = vmatprep.mubr.bf16.mxu0 0
        %2060 = vmatmul.mubr.bf16.gmra.mrb[0].mxu0 %v1743
        %v2061 = vpop.f32.mrb[0].mxu0
        %v2062 = vadd.f32 %v1825, %v2061
        %v2063 = vpop.f32.mrb[0].mxu0
        %v2064 = vpop.f32.mrb[0].mxu0
        %v2065 = vadd.f32 %v1825, %v2064
        %v2066 = vpop.f32.mrb[0].mxu0
        %2067 = vmatprep.mubr.bf16.mxu0 0
        %2068 = vmatmul.mubr.bf16.gmra.mrb[0].mxu0 %v1744
        %v2069 = vpop.f32.mrb[0].mxu0
        %v2070 = vadd.f32 %v1825, %v2069
        %v2071 = vpop.f32.mrb[0].mxu0
        %v2072 = vpop.f32.mrb[0].mxu0
        %v2073 = vadd.f32 %v1825, %v2072
        %v2074 = vpop.f32.mrb[0].mxu0
        %2075 = vmatprep.mubr.bf16.mxu0 0
        %2076 = vmatmul.mubr.bf16.gmra.mrb[0].mxu0 %v1745
        %v2077 = vpop.f32.mrb[0].mxu0
        %v2078 = vadd.f32 %v1825, %v2077
        %v2079 = vpop.f32.mrb[0].mxu0
        %v2080 = vpop.f32.mrb[0].mxu0
        %v2081 = vadd.f32 %v1825, %v2080
        %v2082 = vpop.f32.mrb[0].mxu0
        %2083 = vmatprep.mubr.bf16.mxu0 0
        %2084 = vmatmul.mubr.bf16.gmra.mrb[0].mxu0 %v1746
        %v2085 = vpop.f32.mrb[0].mxu0
        %v2086 = vadd.f32 %v1825, %v2085
        %v2087 = vpop.f32.mrb[0].mxu0
        %v2088 = vpop.f32.mrb[0].mxu0
        %v2089 = vadd.f32 %v1825, %v2088
        %v2090 = vpop.f32.mrb[0].mxu0
        %2091 = vmatprep.mubr.bf16.mxu0 0
        %2092 = vmatmul.mubr.bf16.gmra.mrb[0].mxu0 %v1747
        %v2093 = vpop.f32.mrb[0].mxu0
        %v2094 = vadd.f32 %v1825, %v2093
        %v2095 = vpop.f32.mrb[0].mxu0
        %v2096 = vpop.f32.mrb[0].mxu0
        %v2097 = vadd.f32 %v1825, %v2096
        %v2098 = vpop.f32.mrb[0].mxu0
        %2099 = vmatprep.mubr.bf16.mxu0 0
        %2100 = vmatmul.mubr.bf16.gmra.mrb[0].mxu0 %v1748
        %v2101 = vpop.f32.mrb[0].mxu0
        %v2102 = vadd.f32 %v1825, %v2101
        %v2103 = vpop.f32.mrb[0].mxu0
        %v2104 = vpop.f32.mrb[0].mxu0
        %v2105 = vadd.f32 %v1825, %v2104
        %v2106 = vpop.f32.mrb[0].mxu0
        %2107 = vmatprep.mubr.bf16.mxu0 0
        %2108 = vmatmul.mubr.bf16.gmra.mrb[0].mxu0 %v1749
        %v2109 = vpop.f32.mrb[0].mxu0
        %v2110 = vadd.f32 %v1825, %v2109
        %v2111 = vpop.f32.mrb[0].mxu0
        %v2112 = vpop.f32.mrb[0].mxu0
        %v2113 = vadd.f32 %v1825, %v2112
        %v2114 = vpop.f32.mrb[0].mxu0
        %2115 = vmatprep.mubr.bf16.mxu0 0
        %2116 = vmatmul.mubr.bf16.gmra.mrb[0].mxu0 %v1750
        %v2117 = vpop.f32.mrb[0].mxu0
        %v2118 = vadd.f32 %v1825, %v2117
        %v2119 = vpop.f32.mrb[0].mxu0
        %v2120 = vpop.f32.mrb[0].mxu0
        %v2121 = vadd.f32 %v1825, %v2120
        %v2122 = vpop.f32.mrb[0].mxu0
        %2123 = vmatprep.mubr.bf16.mxu0 0
        %2124 = vmatmul.mubr.bf16.gmra.mrb[0].mxu0 %v1751
        %v2125 = vpop.f32.mrb[0].mxu0
        %v2126 = vadd.f32 %v1825, %v2125
        %v2127 = vpop.f32.mrb[0].mxu0
        %v2128 = vpop.f32.mrb[0].mxu0
        %v2129 = vadd.f32 %v1825, %v2128
        %v2130 = vpop.f32.mrb[0].mxu0
        %2131 = vmatprep.mubr.bf16.mxu0 0
        %2132 = vmatmul.mubr.bf16.gmra.mrb[0].mxu0 %v1752
        %v2133 = vpop.f32.mrb[0].mxu0
        %v2134 = vadd.f32 %v1825, %v2133
        %v2135 = vpop.f32.mrb[0].mxu0
        %v2136 = vpop.f32.mrb[0].mxu0
        %v2137 = vadd.f32 %v1825, %v2136
        %v2138 = vpop.f32.mrb[0].mxu0
        %2139 = vmatprep.mubr.bf16.mxu0 0
        %2140 = vmatmul.mubr.bf16.gmra.mrb[0].mxu0 %v1753
        %v2141 = vpop.f32.mrb[0].mxu0
        %v2142 = vadd.f32 %v1825, %v2141
        %v2143 = vpop.f32.mrb[0].mxu0
        %v2144 = vpop.f32.mrb[0].mxu0
        %v2145 = vadd.f32 %v1825, %v2144
        %v2146 = vpop.f32.mrb[0].mxu0
        %2147 = vmatprep.mubr.bf16.mxu0 0
        %2148 = vmatmul.mubr.bf16.gmra.mrb[0].mxu0 %v1754
        %v2149 = vpop.f32.mrb[0].mxu0
        %v2150 = vadd.f32 %v1825, %v2149
        %v2151 = vpop.f32.mrb[0].mxu0
        %v2152 = vpop.f32.mrb[0].mxu0
        %v2153 = vadd.f32 %v1825, %v2152
        %v2154 = vpop.f32.mrb[0].mxu0
        %2155 = vmatprep.mubr.bf16.mxu0 0
        %2156 = vmatmul.mubr.bf16.gmra.mrb[0].mxu0 %v1755
        %v2157 = vpop.f32.mrb[0].mxu0
        %v2158 = vadd.f32 %v1825, %v2157
        %v2159 = vpop.f32.mrb[0].mxu0
        %v2160 = vpop.f32.mrb[0].mxu0
        %v2161 = vadd.f32 %v1825, %v2160
        %v2162 = vpop.f32.mrb[0].mxu0
        %2163 = vdwg.mxu0
        %v2164 = vmax.f32 %v1910, 0.0
        %v2165 = vmax.f32 %v1913, 0.0
        %v2166 = vmax.f32 %v1918, 0.0
        %v2167 = vmax.f32 %v1921, 0.0
        %v2168 = vmax.f32 %v1926, 0.0
        %v2169 = vmax.f32 %v1929, 0.0
        %v2170 = vmax.f32 %v1934, 0.0
        %v2171 = vmax.f32 %v1937, 0.0
        %v2172 = vmax.f32 %v1942, 0.0
        %v2173 = vmax.f32 %v1945, 0.0
        %v2174 = vmax.f32 %v1950, 0.0
        %v2175 = vmax.f32 %v1953, 0.0
        %v2176 = vmax.f32 %v1958, 0.0
        %v2177 = vmax.f32 %v1961, 0.0
        %v2178 = vmax.f32 %v1966, 0.0
        %v2179 = vmax.f32 %v1969, 0.0
        %v2180 = vmax.f32 %v1974, 0.0
        %v2181 = vmax.f32 %v1977, 0.0
        %v2182 = vmax.f32 %v1982, 0.0
        %v2183 = vmax.f32 %v1985, 0.0
        %v2184 = vmax.f32 %v1990, 0.0
        %v2185 = vmax.f32 %v1993, 0.0
        %v2186 = vmax.f32 %v1998, 0.0
        %v2187 = vmax.f32 %v2001, 0.0
        %v2188 = vmax.f32 %v2006, 0.0
        %v2189 = vmax.f32 %v2009, 0.0
        %v2190 = vmax.f32 %v2014, 0.0
        %v2191 = vmax.f32 %v2017, 0.0
        %v2192 = vmax.f32 %v2022, 0.0
        %v2193 = vmax.f32 %v2025, 0.0
        %v2194 = vmax.f32 %v2030, 0.0
        %v2195 = vmax.f32 %v2033, 0.0
        %v2196 = vmax.f32 %v2038, 0.0
        %v2197 = vmax.f32 %v2041, 0.0
        %v2198 = vmax.f32 %v2046, 0.0
        %v2199 = vmax.f32 %v2049, 0.0
        %v2200 = vmax.f32 %v2054, 0.0
        %v2201 = vmax.f32 %v2057, 0.0
        %v2202 = vmax.f32 %v2062, 0.0
        %v2203 = vmax.f32 %v2065, 0.0
        %v2204 = vmax.f32 %v2070, 0.0
        %v2205 = vmax.f32 %v2073, 0.0
        %v2206 = vmax.f32 %v2078, 0.0
        %v2207 = vmax.f32 %v2081, 0.0
        %v2208 = vmax.f32 %v2086, 0.0
        %v2209 = vmax.f32 %v2089, 0.0
        %v2210 = vmax.f32 %v2094, 0.0
        %v2211 = vmax.f32 %v2097, 0.0
        %v2212 = vmax.f32 %v2102, 0.0
        %v2213 = vmax.f32 %v2105, 0.0
        %v2214 = vmax.f32 %v2110, 0.0
        %v2215 = vmax.f32 %v2113, 0.0
        %v2216 = vmax.f32 %v2118, 0.0
        %v2217 = vmax.f32 %v2121, 0.0
        %v2218 = vmax.f32 %v2126, 0.0
        %v2219 = vmax.f32 %v2129, 0.0
        %v2220 = vmax.f32 %v2134, 0.0
        %v2221 = vmax.f32 %v2137, 0.0
        %v2222 = vmax.f32 %v2142, 0.0
        %v2223 = vmax.f32 %v2145, 0.0
        %v2224 = vmax.f32 %v2150, 0.0
        %v2225 = vmax.f32 %v2153, 0.0
        %v2226 = vmax.f32 %v2158, 0.0
        %v2227 = vmax.f32 %v2161, 0.0
        %v2228 = vld [vmem:[%s9] sm:$0x1]
        %v2230 = vlaneseq
        %v2231 = vshrl.u32 %v2230, 7
        %v2232 = vsub.s32 0, %v2231
        %v2233 = vrot.slane %v2228, %v2232
        %v2251 = vunpack.c.l.b16 %v1804
        %v2252 = vunpack.c.l.b16 %v1805
        %v2253 = vunpack.c.l.b16 %v1806
        %v2254 = vunpack.c.l.b16 %v1807
        %v2255 = vunpack.c.l.b16 %v1808
        %v2256 = vunpack.c.l.b16 %v1809
        %v2257 = vunpack.c.l.b16 %v1810
        %v2258 = vunpack.c.l.b16 %v1811
        %v2259 = vunpack.c.l.b16 %v1812
        %v2260 = vunpack.c.l.b16 %v1813
        %v2261 = vunpack.c.l.b16 %v1814
        %v2262 = vunpack.c.l.b16 %v1815
        %v2263 = vunpack.c.l.b16 %v1816
        %v2264 = vunpack.c.l.b16 %v1817
        %v2265 = vunpack.c.l.b16 %v1818
        %v2266 = vunpack.c.l.b16 %v1819
        %v2267 = vpack.c.b16 %v2252, %v2251
        %v2268 = vpack.c.b16 %v2254, %v2253
        %v2269 = vpack.c.b16 %v2256, %v2255
        %v2270 = vpack.c.b16 %v2258, %v2257
        %v2271 = vpack.c.b16 %v2260, %v2259
        %v2272 = vpack.c.b16 %v2262, %v2261
        %v2273 = vpack.c.b16 %v2264, %v2263
        %v2274 = vpack.c.b16 %v2266, %v2265
        %2283 = vmatprep.subr.bf16.mxu0 0
        %2284 = vmatpush1.bf16.msra.mxu0 %v2267
        %2285 = vmatprep.subr.bf16.mxu0 0
        %2286 = vmatpush1.bf16.msra.mxu0 %v2268
        %2287 = vmatprep.subr.bf16.mxu0 0
        %2288 = vmatpush1.bf16.msra.mxu0 %v2269
        %2289 = vmatprep.subr.bf16.mxu0 0
        %2290 = vmatpush1.bf16.msra.mxu0 %v2270
        %2291 = vmatprep.subr.bf16.mxu0 0
        %2292 = vmatpush1.bf16.msra.mxu0 %v2271
        %2293 = vmatprep.subr.bf16.mxu0 0
        %2294 = vmatpush1.bf16.msra.mxu0 %v2272
        %2295 = vmatprep.subr.bf16.mxu0 0
        %2296 = vmatpush1.bf16.msra.mxu0 %v2273
        %2297 = vmatprep.subr.bf16.mxu0 0
        %2298 = vmatpush1.bf16.msra.mxu0 %v2274
        %2299 = vmatprep.subr.bf16.mxu0 0
        %2300 = vmatpush1.bf16.msra.mxu0 0
        %2301 = vmatprep.subr.bf16.mxu0 0
        %2302 = vmatpush1.bf16.msra.mxu0 0
        %2303 = vmatprep.subr.bf16.mxu0 0
        %2304 = vmatpush1.bf16.msra.mxu0 0
        %2305 = vmatprep.subr.bf16.mxu0 0
        %2306 = vmatpush1.bf16.msra.mxu0 0
        %2307 = vmatprep.subr.bf16.mxu0 0
        %2308 = vmatpush1.bf16.msra.mxu0 0
        %2309 = vmatprep.subr.bf16.mxu0 0
        %2310 = vmatpush1.bf16.msra.mxu0 0
        %2311 = vmatprep.subr.bf16.mxu0 0
        %2312 = vmatpush1.bf16.msra.mxu0 0
        %2313 = vmatprep.subr.bf16.mxu0 0
        %2314 = vmatpush1.bf16.msra.mxu0 0
        %2315 = vmatprep.mubr.bf16.mxu0 0
        %2316 = vmatmul.mubr.bf16.gmra.mrb[0].mxu0 %v1772
        %v2317 = vpop.f32.mrb[0].mxu0
        %v2318 = vadd.f32 %v2233, %v2317
        %v2319 = vpop.f32.mrb[0].mxu0
        %v2320 = vpop.f32.mrb[0].mxu0
        %v2321 = vadd.f32 %v2233, %v2320
        %v2322 = vpop.f32.mrb[0].mxu0
        %2323 = vmatprep.mubr.bf16.mxu0 0
        %2324 = vmatmul.mubr.bf16.gmra.mrb[0].mxu0 %v1773
        %v2325 = vpop.f32.mrb[0].mxu0
        %v2326 = vadd.f32 %v2233, %v2325
        %v2327 = vpop.f32.mrb[0].mxu0
        %v2328 = vpop.f32.mrb[0].mxu0
        %v2329 = vadd.f32 %v2233, %v2328
        %v2330 = vpop.f32.mrb[0].mxu0
        %2331 = vmatprep.mubr.bf16.mxu0 0
        %2332 = vmatmul.mubr.bf16.gmra.mrb[0].mxu0 %v1774
        %v2333 = vpop.f32.mrb[0].mxu0
        %v2334 = vadd.f32 %v2233, %v2333
        %v2335 = vpop.f32.mrb[0].mxu0
        %v2336 = vpop.f32.mrb[0].mxu0
        %v2337 = vadd.f32 %v2233, %v2336
        %v2338 = vpop.f32.mrb[0].mxu0
        %2339 = vmatprep.mubr.bf16.mxu0 0
        %2340 = vmatmul.mubr.bf16.gmra.mrb[0].mxu0 %v1775
        %v2341 = vpop.f32.mrb[0].mxu0
        %v2342 = vadd.f32 %v2233, %v2341
        %v2343 = vpop.f32.mrb[0].mxu0
        %v2344 = vpop.f32.mrb[0].mxu0
        %v2345 = vadd.f32 %v2233, %v2344
        %v2346 = vpop.f32.mrb[0].mxu0
        %2347 = vmatprep.mubr.bf16.mxu0 0
        %2348 = vmatmul.mubr.bf16.gmra.mrb[0].mxu0 %v1776
        %v2349 = vpop.f32.mrb[0].mxu0
        %v2350 = vadd.f32 %v2233, %v2349
        %v2351 = vpop.f32.mrb[0].mxu0
        %v2352 = vpop.f32.mrb[0].mxu0
        %v2353 = vadd.f32 %v2233, %v2352
        %v2354 = vpop.f32.mrb[0].mxu0
        %2355 = vmatprep.mubr.bf16.mxu0 0
        %2356 = vmatmul.mubr.bf16.gmra.mrb[0].mxu0 %v1777
        %v2357 = vpop.f32.mrb[0].mxu0
        %v2358 = vadd.f32 %v2233, %v2357
        %v2359 = vpop.f32.mrb[0].mxu0
        %v2360 = vpop.f32.mrb[0].mxu0
        %v2361 = vadd.f32 %v2233, %v2360
        %v2362 = vpop.f32.mrb[0].mxu0
        %2363 = vmatprep.mubr.bf16.mxu0 0
        %2364 = vmatmul.mubr.bf16.gmra.mrb[0].mxu0 %v1778
        %v2365 = vpop.f32.mrb[0].mxu0
        %v2366 = vadd.f32 %v2233, %v2365
        %v2367 = vpop.f32.mrb[0].mxu0
        %v2368 = vpop.f32.mrb[0].mxu0
        %v2369 = vadd.f32 %v2233, %v2368
        %v2370 = vpop.f32.mrb[0].mxu0
        %2371 = vmatprep.mubr.bf16.mxu0 0
        %2372 = vmatmul.mubr.bf16.gmra.mrb[0].mxu0 %v1779
        %v2373 = vpop.f32.mrb[0].mxu0
        %v2374 = vadd.f32 %v2233, %v2373
        %v2375 = vpop.f32.mrb[0].mxu0
        %v2376 = vpop.f32.mrb[0].mxu0
        %v2377 = vadd.f32 %v2233, %v2376
        %v2378 = vpop.f32.mrb[0].mxu0
        %2379 = vmatprep.mubr.bf16.mxu0 0
        %2380 = vmatmul.mubr.bf16.gmra.mrb[0].mxu0 %v1780
        %v2381 = vpop.f32.mrb[0].mxu0
        %v2382 = vadd.f32 %v2233, %v2381
        %v2383 = vpop.f32.mrb[0].mxu0
        %v2384 = vpop.f32.mrb[0].mxu0
        %v2385 = vadd.f32 %v2233, %v2384
        %v2386 = vpop.f32.mrb[0].mxu0
        %2387 = vmatprep.mubr.bf16.mxu0 0
        %2388 = vmatmul.mubr.bf16.gmra.mrb[0].mxu0 %v1781
        %v2389 = vpop.f32.mrb[0].mxu0
        %v2390 = vadd.f32 %v2233, %v2389
        %v2391 = vpop.f32.mrb[0].mxu0
        %v2392 = vpop.f32.mrb[0].mxu0
        %v2393 = vadd.f32 %v2233, %v2392
        %v2394 = vpop.f32.mrb[0].mxu0
        %2395 = vmatprep.mubr.bf16.mxu0 0
        %2396 = vmatmul.mubr.bf16.gmra.mrb[0].mxu0 %v1782
        %v2397 = vpop.f32.mrb[0].mxu0
        %v2398 = vadd.f32 %v2233, %v2397
        %v2399 = vpop.f32.mrb[0].mxu0
        %v2400 = vpop.f32.mrb[0].mxu0
        %v2401 = vadd.f32 %v2233, %v2400
        %v2402 = vpop.f32.mrb[0].mxu0
        %2403 = vmatprep.mubr.bf16.mxu0 0
        %2404 = vmatmul.mubr.bf16.gmra.mrb[0].mxu0 %v1783
        %v2405 = vpop.f32.mrb[0].mxu0
        %v2406 = vadd.f32 %v2233, %v2405
        %v2407 = vpop.f32.mrb[0].mxu0
        %v2408 = vpop.f32.mrb[0].mxu0
        %v2409 = vadd.f32 %v2233, %v2408
        %v2410 = vpop.f32.mrb[0].mxu0
        %2411 = vmatprep.mubr.bf16.mxu0 0
        %2412 = vmatmul.mubr.bf16.gmra.mrb[0].mxu0 %v1784
        %v2413 = vpop.f32.mrb[0].mxu0
        %v2414 = vadd.f32 %v2233, %v2413
        %v2415 = vpop.f32.mrb[0].mxu0
        %v2416 = vpop.f32.mrb[0].mxu0
        %v2417 = vadd.f32 %v2233, %v2416
        %v2418 = vpop.f32.mrb[0].mxu0
        %2419 = vmatprep.mubr.bf16.mxu0 0
        %2420 = vmatmul.mubr.bf16.gmra.mrb[0].mxu0 %v1785
        %v2421 = vpop.f32.mrb[0].mxu0
        %v2422 = vadd.f32 %v2233, %v2421
        %v2423 = vpop.f32.mrb[0].mxu0
        %v2424 = vpop.f32.mrb[0].mxu0
        %v2425 = vadd.f32 %v2233, %v2424
        %v2426 = vpop.f32.mrb[0].mxu0
        %2427 = vmatprep.mubr.bf16.mxu0 0
        %2428 = vmatmul.mubr.bf16.gmra.mrb[0].mxu0 %v1786
        %v2429 = vpop.f32.mrb[0].mxu0
        %v2430 = vadd.f32 %v2233, %v2429
        %v2431 = vpop.f32.mrb[0].mxu0
        %v2432 = vpop.f32.mrb[0].mxu0
        %v2433 = vadd.f32 %v2233, %v2432
        %v2434 = vpop.f32.mrb[0].mxu0
        %2435 = vmatprep.mubr.bf16.mxu0 0
        %2436 = vmatmul.mubr.bf16.gmra.mrb[0].mxu0 %v1787
        %v2437 = vpop.f32.mrb[0].mxu0
        %v2438 = vadd.f32 %v2233, %v2437
        %v2439 = vpop.f32.mrb[0].mxu0
        %v2440 = vpop.f32.mrb[0].mxu0
        %v2441 = vadd.f32 %v2233, %v2440
        %v2442 = vpop.f32.mrb[0].mxu0
        %2443 = vmatprep.mubr.bf16.mxu0 0
        %2444 = vmatmul.mubr.bf16.gmra.mrb[0].mxu0 %v1788
        %v2445 = vpop.f32.mrb[0].mxu0
        %v2446 = vadd.f32 %v2233, %v2445
        %v2447 = vpop.f32.mrb[0].mxu0
        %v2448 = vpop.f32.mrb[0].mxu0
        %v2449 = vadd.f32 %v2233, %v2448
        %v2450 = vpop.f32.mrb[0].mxu0
        %2451 = vmatprep.mubr.bf16.mxu0 0
        %2452 = vmatmul.mubr.bf16.gmra.mrb[0].mxu0 %v1789
        %v2453 = vpop.f32.mrb[0].mxu0
        %v2454 = vadd.f32 %v2233, %v2453
        %v2455 = vpop.f32.mrb[0].mxu0
        %v2456 = vpop.f32.mrb[0].mxu0
        %v2457 = vadd.f32 %v2233, %v2456
        %v2458 = vpop.f32.mrb[0].mxu0
        %2459 = vmatprep.mubr.bf16.mxu0 0
        %2460 = vmatmul.mubr.bf16.gmra.mrb[0].mxu0 %v1790
        %v2461 = vpop.f32.mrb[0].mxu0
        %v2462 = vadd.f32 %v2233, %v2461
        %v2463 = vpop.f32.mrb[0].mxu0
        %v2464 = vpop.f32.mrb[0].mxu0
        %v2465 = vadd.f32 %v2233, %v2464
        %v2466 = vpop.f32.mrb[0].mxu0
        %2467 = vmatprep.mubr.bf16.mxu0 0
        %2468 = vmatmul.mubr.bf16.gmra.mrb[0].mxu0 %v1791
        %v2469 = vpop.f32.mrb[0].mxu0
        %v2470 = vadd.f32 %v2233, %v2469
        %v2471 = vpop.f32.mrb[0].mxu0
        %v2472 = vpop.f32.mrb[0].mxu0
        %v2473 = vadd.f32 %v2233, %v2472
        %v2474 = vpop.f32.mrb[0].mxu0
        %2475 = vmatprep.mubr.bf16.mxu0 0
        %2476 = vmatmul.mubr.bf16.gmra.mrb[0].mxu0 %v1792
        %v2477 = vpop.f32.mrb[0].mxu0
        %v2478 = vadd.f32 %v2233, %v2477
        %v2479 = vpop.f32.mrb[0].mxu0
        %v2480 = vpop.f32.mrb[0].mxu0
        %v2481 = vadd.f32 %v2233, %v2480
        %v2482 = vpop.f32.mrb[0].mxu0
        %2483 = vmatprep.mubr.bf16.mxu0 0
        %2484 = vmatmul.mubr.bf16.gmra.mrb[0].mxu0 %v1793
        %v2485 = vpop.f32.mrb[0].mxu0
        %v2486 = vadd.f32 %v2233, %v2485
        %v2487 = vpop.f32.mrb[0].mxu0
        %v2488 = vpop.f32.mrb[0].mxu0
        %v2489 = vadd.f32 %v2233, %v2488
        %v2490 = vpop.f32.mrb[0].mxu0
        %2491 = vmatprep.mubr.bf16.mxu0 0
        %2492 = vmatmul.mubr.bf16.gmra.mrb[0].mxu0 %v1794
        %v2493 = vpop.f32.mrb[0].mxu0
        %v2494 = vadd.f32 %v2233, %v2493
        %v2495 = vpop.f32.mrb[0].mxu0
        %v2496 = vpop.f32.mrb[0].mxu0
        %v2497 = vadd.f32 %v2233, %v2496
        %v2498 = vpop.f32.mrb[0].mxu0
        %2499 = vmatprep.mubr.bf16.mxu0 0
        %2500 = vmatmul.mubr.bf16.gmra.mrb[0].mxu0 %v1795
        %v2501 = vpop.f32.mrb[0].mxu0
        %v2502 = vadd.f32 %v2233, %v2501
        %v2503 = vpop.f32.mrb[0].mxu0
        %v2504 = vpop.f32.mrb[0].mxu0
        %v2505 = vadd.f32 %v2233, %v2504
        %v2506 = vpop.f32.mrb[0].mxu0
        %2507 = vmatprep.mubr.bf16.mxu0 0
        %2508 = vmatmul.mubr.bf16.gmra.mrb[0].mxu0 %v1796
        %v2509 = vpop.f32.mrb[0].mxu0
        %v2510 = vadd.f32 %v2233, %v2509
        %v2511 = vpop.f32.mrb[0].mxu0
        %v2512 = vpop.f32.mrb[0].mxu0
        %v2513 = vadd.f32 %v2233, %v2512
        %v2514 = vpop.f32.mrb[0].mxu0
        %2515 = vmatprep.mubr.bf16.mxu0 0
        %2516 = vmatmul.mubr.bf16.gmra.mrb[0].mxu0 %v1797
        %v2517 = vpop.f32.mrb[0].mxu0
        %v2518 = vadd.f32 %v2233, %v2517
        %v2519 = vpop.f32.mrb[0].mxu0
        %v2520 = vpop.f32.mrb[0].mxu0
        %v2521 = vadd.f32 %v2233, %v2520
        %v2522 = vpop.f32.mrb[0].mxu0
        %2523 = vmatprep.mubr.bf16.mxu0 0
        %2524 = vmatmul.mubr.bf16.gmra.mrb[0].mxu0 %v1798
        %v2525 = vpop.f32.mrb[0].mxu0
        %v2526 = vadd.f32 %v2233, %v2525
        %v2527 = vpop.f32.mrb[0].mxu0
        %v2528 = vpop.f32.mrb[0].mxu0
        %v2529 = vadd.f32 %v2233, %v2528
        %v2530 = vpop.f32.mrb[0].mxu0
        %2531 = vmatprep.mubr.bf16.mxu0 0
        %2532 = vmatmul.mubr.bf16.gmra.mrb[0].mxu0 %v1799
        %v2533 = vpop.f32.mrb[0].mxu0
        %v2534 = vadd.f32 %v2233, %v2533
        %v2535 = vpop.f32.mrb[0].mxu0
        %v2536 = vpop.f32.mrb[0].mxu0
        %v2537 = vadd.f32 %v2233, %v2536
        %v2538 = vpop.f32.mrb[0].mxu0
        %2539 = vmatprep.mubr.bf16.mxu0 0
        %2540 = vmatmul.mubr.bf16.gmra.mrb[0].mxu0 %v1800
        %v2541 = vpop.f32.mrb[0].mxu0
        %v2542 = vadd.f32 %v2233, %v2541
        %v2543 = vpop.f32.mrb[0].mxu0
        %v2544 = vpop.f32.mrb[0].mxu0
        %v2545 = vadd.f32 %v2233, %v2544
        %v2546 = vpop.f32.mrb[0].mxu0
        %2547 = vmatprep.mubr.bf16.mxu0 0
        %2548 = vmatmul.mubr.bf16.gmra.mrb[0].mxu0 %v1801
        %v2549 = vpop.f32.mrb[0].mxu0
        %v2550 = vadd.f32 %v2233, %v2549
        %v2551 = vpop.f32.mrb[0].mxu0
        %v2552 = vpop.f32.mrb[0].mxu0
        %v2553 = vadd.f32 %v2233, %v2552
        %v2554 = vpop.f32.mrb[0].mxu0
        %2555 = vmatprep.mubr.bf16.mxu0 0
        %2556 = vmatmul.mubr.bf16.gmra.mrb[0].mxu0 %v1802
        %v2557 = vpop.f32.mrb[0].mxu0
        %v2558 = vadd.f32 %v2233, %v2557
        %v2559 = vpop.f32.mrb[0].mxu0
        %v2560 = vpop.f32.mrb[0].mxu0
        %v2561 = vadd.f32 %v2233, %v2560
        %v2562 = vpop.f32.mrb[0].mxu0
        %2563 = vmatprep.mubr.bf16.mxu0 0
        %2564 = vmatmul.mubr.bf16.gmra.mrb[0].mxu0 %v1803
        %v2565 = vpop.f32.mrb[0].mxu0
        %v2566 = vadd.f32 %v2233, %v2565
        %v2567 = vpop.f32.mrb[0].mxu0
        %v2568 = vpop.f32.mrb[0].mxu0
        %v2569 = vadd.f32 %v2233, %v2568
        %v2570 = vpop.f32.mrb[0].mxu0
        %2571 = vdwg.mxu0
        %v2572 = vmax.f32 %v2318, 0.0
        %v2573 = vmax.f32 %v2321, 0.0
        %v2574 = vmax.f32 %v2326, 0.0
        %v2575 = vmax.f32 %v2329, 0.0
        %v2576 = vmax.f32 %v2334, 0.0
        %v2577 = vmax.f32 %v2337, 0.0
        %v2578 = vmax.f32 %v2342, 0.0
        %v2579 = vmax.f32 %v2345, 0.0
        %v2580 = vmax.f32 %v2350, 0.0
        %v2581 = vmax.f32 %v2353, 0.0
        %v2582 = vmax.f32 %v2358, 0.0
        %v2583 = vmax.f32 %v2361, 0.0
        %v2584 = vmax.f32 %v2366, 0.0
        %v2585 = vmax.f32 %v2369, 0.0
        %v2586 = vmax.f32 %v2374, 0.0
        %v2587 = vmax.f32 %v2377, 0.0
        %v2588 = vmax.f32 %v2382, 0.0
        %v2589 = vmax.f32 %v2385, 0.0
        %v2590 = vmax.f32 %v2390, 0.0
        %v2591 = vmax.f32 %v2393, 0.0
        %v2592 = vmax.f32 %v2398, 0.0
        %v2593 = vmax.f32 %v2401, 0.0
        %v2594 = vmax.f32 %v2406, 0.0
        %v2595 = vmax.f32 %v2409, 0.0
        %v2596 = vmax.f32 %v2414, 0.0
        %v2597 = vmax.f32 %v2417, 0.0
        %v2598 = vmax.f32 %v2422, 0.0
        %v2599 = vmax.f32 %v2425, 0.0
        %v2600 = vmax.f32 %v2430, 0.0
        %v2601 = vmax.f32 %v2433, 0.0
        %v2602 = vmax.f32 %v2438, 0.0
        %v2603 = vmax.f32 %v2441, 0.0
        %v2604 = vmax.f32 %v2446, 0.0
        %v2605 = vmax.f32 %v2449, 0.0
        %v2606 = vmax.f32 %v2454, 0.0
        %v2607 = vmax.f32 %v2457, 0.0
        %v2608 = vmax.f32 %v2462, 0.0
        %v2609 = vmax.f32 %v2465, 0.0
        %v2610 = vmax.f32 %v2470, 0.0
        %v2611 = vmax.f32 %v2473, 0.0
        %v2612 = vmax.f32 %v2478, 0.0
        %v2613 = vmax.f32 %v2481, 0.0
        %v2614 = vmax.f32 %v2486, 0.0
        %v2615 = vmax.f32 %v2489, 0.0
        %v2616 = vmax.f32 %v2494, 0.0
        %v2617 = vmax.f32 %v2497, 0.0
        %v2618 = vmax.f32 %v2502, 0.0
        %v2619 = vmax.f32 %v2505, 0.0
        %v2620 = vmax.f32 %v2510, 0.0
        %v2621 = vmax.f32 %v2513, 0.0
        %v2622 = vmax.f32 %v2518, 0.0
        %v2623 = vmax.f32 %v2521, 0.0
        %v2624 = vmax.f32 %v2526, 0.0
        %v2625 = vmax.f32 %v2529, 0.0
        %v2626 = vmax.f32 %v2534, 0.0
        %v2627 = vmax.f32 %v2537, 0.0
        %v2628 = vmax.f32 %v2542, 0.0
        %v2629 = vmax.f32 %v2545, 0.0
        %v2630 = vmax.f32 %v2550, 0.0
        %v2631 = vmax.f32 %v2553, 0.0
        %v2632 = vmax.f32 %v2558, 0.0
        %v2633 = vmax.f32 %v2561, 0.0
        %v2634 = vmax.f32 %v2566, 0.0
        %v2635 = vmax.f32 %v2569, 0.0
        %v2636 = vpack.c.bf16 %v2165, %v2164
        %v2637 = vpack.c.bf16 %v2167, %v2166
        %v2638 = vpack.c.bf16 %v2169, %v2168
        %v2639 = vpack.c.bf16 %v2171, %v2170
        %v2640 = vpack.c.bf16 %v2173, %v2172
        %v2641 = vpack.c.bf16 %v2175, %v2174
        %v2642 = vpack.c.bf16 %v2177, %v2176
        %v2643 = vpack.c.bf16 %v2179, %v2178
        %v2644 = vpack.c.bf16 %v2181, %v2180
        %v2645 = vpack.c.bf16 %v2183, %v2182
        %v2646 = vpack.c.bf16 %v2185, %v2184
        %v2647 = vpack.c.bf16 %v2187, %v2186
        %v2648 = vpack.c.bf16 %v2189, %v2188
        %v2649 = vpack.c.bf16 %v2191, %v2190
        %v2650 = vpack.c.bf16 %v2193, %v2192
        %v2651 = vpack.c.bf16 %v2195, %v2194
        %v2652 = vpack.c.bf16 %v2197, %v2196
        %v2653 = vpack.c.bf16 %v2199, %v2198
        %v2654 = vpack.c.bf16 %v2201, %v2200
        %v2655 = vpack.c.bf16 %v2203, %v2202
        %v2656 = vpack.c.bf16 %v2205, %v2204
        %v2657 = vpack.c.bf16 %v2207, %v2206
        %v2658 = vpack.c.bf16 %v2209, %v2208
        %v2659 = vpack.c.bf16 %v2211, %v2210
        %v2660 = vpack.c.bf16 %v2213, %v2212
        %v2661 = vpack.c.bf16 %v2215, %v2214
        %v2662 = vpack.c.bf16 %v2217, %v2216
        %v2663 = vpack.c.bf16 %v2219, %v2218
        %v2664 = vpack.c.bf16 %v2221, %v2220
        %v2665 = vpack.c.bf16 %v2223, %v2222
        %v2666 = vpack.c.bf16 %v2225, %v2224
        %v2667 = vpack.c.bf16 %v2227, %v2226
        %v2668 = vld [vmem:[#allocation13] sm:$0xf]
        %v2669 = vld [vmem:[#allocation13 + $0x4] sm:$0xf]
        %v2670 = vld [vmem:[#allocation13 + $0x8] sm:$0xf]
        %v2671 = vld [vmem:[#allocation13 + $0xc] sm:$0xf]
        %v2672 = vld [vmem:[#allocation13 + $0x10] sm:$0xf]
        %v2673 = vld [vmem:[#allocation13 + $0x14] sm:$0xf]
        %v2674 = vld [vmem:[#allocation13 + $0x18] sm:$0xf]
        %v2675 = vld [vmem:[#allocation13 + $0x1c] sm:$0xf]
        %v2676 = vld [vmem:[#allocation13 + $0x20] sm:$0xf]
        %v2677 = vld [vmem:[#allocation13 + $0x24] sm:$0xf]
        %v2678 = vld [vmem:[#allocation13 + $0x28] sm:$0xf]
        %v2679 = vld [vmem:[#allocation13 + $0x2c] sm:$0xf]
        %v2680 = vld [vmem:[#allocation13 + $0x30] sm:$0xf]
        %v2681 = vld [vmem:[#allocation13 + $0x34] sm:$0xf]
        %v2682 = vld [vmem:[#allocation13 + $0x38] sm:$0xf]
        %v2683 = vld [vmem:[#allocation13 + $0x3c] sm:$0xf]
        %v2684 = vpack.c.bf16 %v2573, %v2572
        %v2685 = vpack.c.bf16 %v2575, %v2574
        %v2686 = vpack.c.bf16 %v2577, %v2576
        %v2687 = vpack.c.bf16 %v2579, %v2578
        %v2688 = vpack.c.bf16 %v2581, %v2580
        %v2689 = vpack.c.bf16 %v2583, %v2582
        %v2690 = vpack.c.bf16 %v2585, %v2584
        %v2691 = vpack.c.bf16 %v2587, %v2586
        %v2692 = vpack.c.bf16 %v2589, %v2588
        %v2693 = vpack.c.bf16 %v2591, %v2590
        %v2694 = vpack.c.bf16 %v2593, %v2592
        %v2695 = vpack.c.bf16 %v2595, %v2594
        %v2696 = vpack.c.bf16 %v2597, %v2596
        %v2697 = vpack.c.bf16 %v2599, %v2598
        %v2698 = vpack.c.bf16 %v2601, %v2600
        %v2699 = vpack.c.bf16 %v2603, %v2602
        %v2700 = vpack.c.bf16 %v2605, %v2604
        %v2701 = vpack.c.bf16 %v2607, %v2606
        %v2702 = vpack.c.bf16 %v2609, %v2608
        %v2703 = vpack.c.bf16 %v2611, %v2610
        %v2704 = vpack.c.bf16 %v2613, %v2612
        %v2705 = vpack.c.bf16 %v2615, %v2614
        %v2706 = vpack.c.bf16 %v2617, %v2616
        %v2707 = vpack.c.bf16 %v2619, %v2618
        %v2708 = vpack.c.bf16 %v2621, %v2620
        %v2709 = vpack.c.bf16 %v2623, %v2622
        %v2710 = vpack.c.bf16 %v2625, %v2624
        %v2711 = vpack.c.bf16 %v2627, %v2626
        %v2712 = vpack.c.bf16 %v2629, %v2628
        %v2713 = vpack.c.bf16 %v2631, %v2630
        %v2714 = vpack.c.bf16 %v2633, %v2632
        %v2715 = vpack.c.bf16 %v2635, %v2634
        %v2716 = vld [vmem:[#allocation14] sm:$0xf]
        %v2717 = vld [vmem:[#allocation14 + $0x4] sm:$0xf]
        %v2718 = vld [vmem:[#allocation14 + $0x8] sm:$0xf]
        %v2719 = vld [vmem:[#allocation14 + $0xc] sm:$0xf]
        %v2720 = vld [vmem:[#allocation14 + $0x10] sm:$0xf]
        %v2721 = vld [vmem:[#allocation14 + $0x14] sm:$0xf]
        %v2722 = vld [vmem:[#allocation14 + $0x18] sm:$0xf]
        %v2723 = vld [vmem:[#allocation14 + $0x1c] sm:$0xf]
        %v2724 = vld [vmem:[#allocation14 + $0x20] sm:$0xf]
        %v2725 = vld [vmem:[#allocation14 + $0x24] sm:$0xf]
        %v2726 = vld [vmem:[#allocation14 + $0x28] sm:$0xf]
        %v2727 = vld [vmem:[#allocation14 + $0x2c] sm:$0xf]
        %v2728 = vld [vmem:[#allocation14 + $0x30] sm:$0xf]
        %v2729 = vld [vmem:[#allocation14 + $0x34] sm:$0xf]
        %v2730 = vld [vmem:[#allocation14 + $0x38] sm:$0xf]
        %v2731 = vld [vmem:[#allocation14 + $0x3c] sm:$0xf]
        %v2732 = vld [vmem:[%s11] sm:$0x1]
        %v2734 = vlaneseq
        %v2735 = vshrl.u32 %v2734, 7
        %v2736 = vsub.s32 0, %v2735
        %v2737 = vrot.slane %v2732, %v2736
        %v2755 = vunpack.c.l.b16 %v2668
        %v2756 = vunpack.c.l.b16 %v2669
        %v2757 = vunpack.c.l.b16 %v2670
        %v2758 = vunpack.c.l.b16 %v2671
        %v2759 = vunpack.c.l.b16 %v2672
        %v2760 = vunpack.c.l.b16 %v2673
        %v2761 = vunpack.c.l.b16 %v2674
        %v2762 = vunpack.c.l.b16 %v2675
        %v2763 = vunpack.c.l.b16 %v2676
        %v2764 = vunpack.c.l.b16 %v2677
        %v2765 = vunpack.c.l.b16 %v2678
        %v2766 = vunpack.c.l.b16 %v2679
        %v2767 = vunpack.c.l.b16 %v2680
        %v2768 = vunpack.c.l.b16 %v2681
        %v2769 = vunpack.c.l.b16 %v2682
        %v2770 = vunpack.c.l.b16 %v2683
        %v2771 = vpack.c.b16 %v2756, %v2755
        %v2772 = vpack.c.b16 %v2758, %v2757
        %v2773 = vpack.c.b16 %v2760, %v2759
        %v2774 = vpack.c.b16 %v2762, %v2761
        %v2775 = vpack.c.b16 %v2764, %v2763
        %v2776 = vpack.c.b16 %v2766, %v2765
        %v2777 = vpack.c.b16 %v2768, %v2767
        %v2778 = vpack.c.b16 %v2770, %v2769
        %2787 = vmatprep.subr.bf16.mxu0 0
        %2788 = vmatpush1.bf16.msra.mxu0 %v2771
        %2789 = vmatprep.subr.bf16.mxu0 0
        %2790 = vmatpush1.bf16.msra.mxu0 %v2772
        %2791 = vmatprep.subr.bf16.mxu0 0
        %2792 = vmatpush1.bf16.msra.mxu0 %v2773
        %2793 = vmatprep.subr.bf16.mxu0 0
        %2794 = vmatpush1.bf16.msra.mxu0 %v2774
        %2795 = vmatprep.subr.bf16.mxu0 0
        %2796 = vmatpush1.bf16.msra.mxu0 %v2775
        %2797 = vmatprep.subr.bf16.mxu0 0
        %2798 = vmatpush1.bf16.msra.mxu0 %v2776
        %2799 = vmatprep.subr.bf16.mxu0 0
        %2800 = vmatpush1.bf16.msra.mxu0 %v2777
        %2801 = vmatprep.subr.bf16.mxu0 0
        %2802 = vmatpush1.bf16.msra.mxu0 %v2778
        %2803 = vmatprep.subr.bf16.mxu0 0
        %2804 = vmatpush1.bf16.msra.mxu0 0
        %2805 = vmatprep.subr.bf16.mxu0 0
        %2806 = vmatpush1.bf16.msra.mxu0 0
        %2807 = vmatprep.subr.bf16.mxu0 0
        %2808 = vmatpush1.bf16.msra.mxu0 0
        %2809 = vmatprep.subr.bf16.mxu0 0
        %2810 = vmatpush1.bf16.msra.mxu0 0
        %2811 = vmatprep.subr.bf16.mxu0 0
        %2812 = vmatpush1.bf16.msra.mxu0 0
        %2813 = vmatprep.subr.bf16.mxu0 0
        %2814 = vmatpush1.bf16.msra.mxu0 0
        %2815 = vmatprep.subr.bf16.mxu0 0
        %2816 = vmatpush1.bf16.msra.mxu0 0
        %2817 = vmatprep.subr.bf16.mxu0 0
        %2818 = vmatpush1.bf16.msra.mxu0 0
        %2819 = vmatprep.mubr.bf16.mxu0 0
        %2820 = vmatmul.mubr.bf16.gmra.mrb[0].mxu0 %v2636
        %v2821 = vpop.f32.mrb[0].mxu0
        %v2822 = vadd.f32 %v2737, %v2821
        %v2823 = vpop.f32.mrb[0].mxu0
        %v2824 = vpop.f32.mrb[0].mxu0
        %v2825 = vadd.f32 %v2737, %v2824
        %v2826 = vpop.f32.mrb[0].mxu0
        %2827 = vmatprep.mubr.bf16.mxu0 0
        %2828 = vmatmul.mubr.bf16.gmra.mrb[0].mxu0 %v2637
        %v2829 = vpop.f32.mrb[0].mxu0
        %v2830 = vadd.f32 %v2737, %v2829
        %v2831 = vpop.f32.mrb[0].mxu0
        %v2832 = vpop.f32.mrb[0].mxu0
        %v2833 = vadd.f32 %v2737, %v2832
        %v2834 = vpop.f32.mrb[0].mxu0
        %2835 = vmatprep.mubr.bf16.mxu0 0
        %2836 = vmatmul.mubr.bf16.gmra.mrb[0].mxu0 %v2638
        %v2837 = vpop.f32.mrb[0].mxu0
        %v2838 = vadd.f32 %v2737, %v2837
        %v2839 = vpop.f32.mrb[0].mxu0
        %v2840 = vpop.f32.mrb[0].mxu0
        %v2841 = vadd.f32 %v2737, %v2840
        %v2842 = vpop.f32.mrb[0].mxu0
        %2843 = vmatprep.mubr.bf16.mxu0 0
        %2844 = vmatmul.mubr.bf16.gmra.mrb[0].mxu0 %v2639
        %v2845 = vpop.f32.mrb[0].mxu0
        %v2846 = vadd.f32 %v2737, %v2845
        %v2847 = vpop.f32.mrb[0].mxu0
        %v2848 = vpop.f32.mrb[0].mxu0
        %v2849 = vadd.f32 %v2737, %v2848
        %v2850 = vpop.f32.mrb[0].mxu0
        %2851 = vmatprep.mubr.bf16.mxu0 0
        %2852 = vmatmul.mubr.bf16.gmra.mrb[0].mxu0 %v2640
        %v2853 = vpop.f32.mrb[0].mxu0
        %v2854 = vadd.f32 %v2737, %v2853
        %v2855 = vpop.f32.mrb[0].mxu0
        %v2856 = vpop.f32.mrb[0].mxu0
        %v2857 = vadd.f32 %v2737, %v2856
        %v2858 = vpop.f32.mrb[0].mxu0
        %2859 = vmatprep.mubr.bf16.mxu0 0
        %2860 = vmatmul.mubr.bf16.gmra.mrb[0].mxu0 %v2641
        %v2861 = vpop.f32.mrb[0].mxu0
        %v2862 = vadd.f32 %v2737, %v2861
        %v2863 = vpop.f32.mrb[0].mxu0
        %v2864 = vpop.f32.mrb[0].mxu0
        %v2865 = vadd.f32 %v2737, %v2864
        %v2866 = vpop.f32.mrb[0].mxu0
        %2867 = vmatprep.mubr.bf16.mxu0 0
        %2868 = vmatmul.mubr.bf16.gmra.mrb[0].mxu0 %v2642
        %v2869 = vpop.f32.mrb[0].mxu0
        %v2870 = vadd.f32 %v2737, %v2869
        %v2871 = vpop.f32.mrb[0].mxu0
        %v2872 = vpop.f32.mrb[0].mxu0
        %v2873 = vadd.f32 %v2737, %v2872
        %v2874 = vpop.f32.mrb[0].mxu0
        %2875 = vmatprep.mubr.bf16.mxu0 0
        %2876 = vmatmul.mubr.bf16.gmra.mrb[0].mxu0 %v2643
        %v2877 = vpop.f32.mrb[0].mxu0
        %v2878 = vadd.f32 %v2737, %v2877
        %v2879 = vpop.f32.mrb[0].mxu0
        %v2880 = vpop.f32.mrb[0].mxu0
        %v2881 = vadd.f32 %v2737, %v2880
        %v2882 = vpop.f32.mrb[0].mxu0
        %2883 = vmatprep.mubr.bf16.mxu0 0
        %2884 = vmatmul.mubr.bf16.gmra.mrb[0].mxu0 %v2644
        %v2885 = vpop.f32.mrb[0].mxu0
        %v2886 = vadd.f32 %v2737, %v2885
        %v2887 = vpop.f32.mrb[0].mxu0
        %v2888 = vpop.f32.mrb[0].mxu0
        %v2889 = vadd.f32 %v2737, %v2888
        %v2890 = vpop.f32.mrb[0].mxu0
        %2891 = vmatprep.mubr.bf16.mxu0 0
        %2892 = vmatmul.mubr.bf16.gmra.mrb[0].mxu0 %v2645
        %v2893 = vpop.f32.mrb[0].mxu0
        %v2894 = vadd.f32 %v2737, %v2893
        %v2895 = vpop.f32.mrb[0].mxu0
        %v2896 = vpop.f32.mrb[0].mxu0
        %v2897 = vadd.f32 %v2737, %v2896
        %v2898 = vpop.f32.mrb[0].mxu0
        %2899 = vmatprep.mubr.bf16.mxu0 0
        %2900 = vmatmul.mubr.bf16.gmra.mrb[0].mxu0 %v2646
        %v2901 = vpop.f32.mrb[0].mxu0
        %v2902 = vadd.f32 %v2737, %v2901
        %v2903 = vpop.f32.mrb[0].mxu0
        %v2904 = vpop.f32.mrb[0].mxu0
        %v2905 = vadd.f32 %v2737, %v2904
        %v2906 = vpop.f32.mrb[0].mxu0
        %2907 = vmatprep.mubr.bf16.mxu0 0
        %2908 = vmatmul.mubr.bf16.gmra.mrb[0].mxu0 %v2647
        %v2909 = vpop.f32.mrb[0].mxu0
        %v2910 = vadd.f32 %v2737, %v2909
        %v2911 = vpop.f32.mrb[0].mxu0
        %v2912 = vpop.f32.mrb[0].mxu0
        %v2913 = vadd.f32 %v2737, %v2912
        %v2914 = vpop.f32.mrb[0].mxu0
        %2915 = vmatprep.mubr.bf16.mxu0 0
        %2916 = vmatmul.mubr.bf16.gmra.mrb[0].mxu0 %v2648
        %v2917 = vpop.f32.mrb[0].mxu0
        %v2918 = vadd.f32 %v2737, %v2917
        %v2919 = vpop.f32.mrb[0].mxu0
        %v2920 = vpop.f32.mrb[0].mxu0
        %v2921 = vadd.f32 %v2737, %v2920
        %v2922 = vpop.f32.mrb[0].mxu0
        %2923 = vmatprep.mubr.bf16.mxu0 0
        %2924 = vmatmul.mubr.bf16.gmra.mrb[0].mxu0 %v2649
        %v2925 = vpop.f32.mrb[0].mxu0
        %v2926 = vadd.f32 %v2737, %v2925
        %v2927 = vpop.f32.mrb[0].mxu0
        %v2928 = vpop.f32.mrb[0].mxu0
        %v2929 = vadd.f32 %v2737, %v2928
        %v2930 = vpop.f32.mrb[0].mxu0
        %2931 = vmatprep.mubr.bf16.mxu0 0
        %2932 = vmatmul.mubr.bf16.gmra.mrb[0].mxu0 %v2650
        %v2933 = vpop.f32.mrb[0].mxu0
        %v2934 = vadd.f32 %v2737, %v2933
        %v2935 = vpop.f32.mrb[0].mxu0
        %v2936 = vpop.f32.mrb[0].mxu0
        %v2937 = vadd.f32 %v2737, %v2936
        %v2938 = vpop.f32.mrb[0].mxu0
        %2939 = vmatprep.mubr.bf16.mxu0 0
        %2940 = vmatmul.mubr.bf16.gmra.mrb[0].mxu0 %v2651
        %v2941 = vpop.f32.mrb[0].mxu0
        %v2942 = vadd.f32 %v2737, %v2941
        %v2943 = vpop.f32.mrb[0].mxu0
        %v2944 = vpop.f32.mrb[0].mxu0
        %v2945 = vadd.f32 %v2737, %v2944
        %v2946 = vpop.f32.mrb[0].mxu0
        %2947 = vmatprep.mubr.bf16.mxu0 0
        %2948 = vmatmul.mubr.bf16.gmra.mrb[0].mxu0 %v2652
        %v2949 = vpop.f32.mrb[0].mxu0
        %v2950 = vadd.f32 %v2737, %v2949
        %v2951 = vpop.f32.mrb[0].mxu0
        %v2952 = vpop.f32.mrb[0].mxu0
        %v2953 = vadd.f32 %v2737, %v2952
        %v2954 = vpop.f32.mrb[0].mxu0
        %2955 = vmatprep.mubr.bf16.mxu0 0
        %2956 = vmatmul.mubr.bf16.gmra.mrb[0].mxu0 %v2653
        %v2957 = vpop.f32.mrb[0].mxu0
        %v2958 = vadd.f32 %v2737, %v2957
        %v2959 = vpop.f32.mrb[0].mxu0
        %v2960 = vpop.f32.mrb[0].mxu0
        %v2961 = vadd.f32 %v2737, %v2960
        %v2962 = vpop.f32.mrb[0].mxu0
        %2963 = vmatprep.mubr.bf16.mxu0 0
        %2964 = vmatmul.mubr.bf16.gmra.mrb[0].mxu0 %v2654
        %v2965 = vpop.f32.mrb[0].mxu0
        %v2966 = vadd.f32 %v2737, %v2965
        %v2967 = vpop.f32.mrb[0].mxu0
        %v2968 = vpop.f32.mrb[0].mxu0
        %v2969 = vadd.f32 %v2737, %v2968
        %v2970 = vpop.f32.mrb[0].mxu0
        %2971 = vmatprep.mubr.bf16.mxu0 0
        %2972 = vmatmul.mubr.bf16.gmra.mrb[0].mxu0 %v2655
        %v2973 = vpop.f32.mrb[0].mxu0
        %v2974 = vadd.f32 %v2737, %v2973
        %v2975 = vpop.f32.mrb[0].mxu0
        %v2976 = vpop.f32.mrb[0].mxu0
        %v2977 = vadd.f32 %v2737, %v2976
        %v2978 = vpop.f32.mrb[0].mxu0
        %2979 = vmatprep.mubr.bf16.mxu0 0
        %2980 = vmatmul.mubr.bf16.gmra.mrb[0].mxu0 %v2656
        %v2981 = vpop.f32.mrb[0].mxu0
        %v2982 = vadd.f32 %v2737, %v2981
        %v2983 = vpop.f32.mrb[0].mxu0
        %v2984 = vpop.f32.mrb[0].mxu0
        %v2985 = vadd.f32 %v2737, %v2984
        %v2986 = vpop.f32.mrb[0].mxu0
        %2987 = vmatprep.mubr.bf16.mxu0 0
        %2988 = vmatmul.mubr.bf16.gmra.mrb[0].mxu0 %v2657
        %v2989 = vpop.f32.mrb[0].mxu0
        %v2990 = vadd.f32 %v2737, %v2989
        %v2991 = vpop.f32.mrb[0].mxu0
        %v2992 = vpop.f32.mrb[0].mxu0
        %v2993 = vadd.f32 %v2737, %v2992
        %v2994 = vpop.f32.mrb[0].mxu0
        %2995 = vmatprep.mubr.bf16.mxu0 0
        %2996 = vmatmul.mubr.bf16.gmra.mrb[0].mxu0 %v2658
        %v2997 = vpop.f32.mrb[0].mxu0
        %v2998 = vadd.f32 %v2737, %v2997
        %v2999 = vpop.f32.mrb[0].mxu0
        %v3000 = vpop.f32.mrb[0].mxu0
        %v3001 = vadd.f32 %v2737, %v3000
        %v3002 = vpop.f32.mrb[0].mxu0
        %3003 = vmatprep.mubr.bf16.mxu0 0
        %3004 = vmatmul.mubr.bf16.gmra.mrb[0].mxu0 %v2659
        %v3005 = vpop.f32.mrb[0].mxu0
        %v3006 = vadd.f32 %v2737, %v3005
        %v3007 = vpop.f32.mrb[0].mxu0
        %v3008 = vpop.f32.mrb[0].mxu0
        %v3009 = vadd.f32 %v2737, %v3008
        %v3010 = vpop.f32.mrb[0].mxu0
        %3011 = vmatprep.mubr.bf16.mxu0 0
        %3012 = vmatmul.mubr.bf16.gmra.mrb[0].mxu0 %v2660
        %v3013 = vpop.f32.mrb[0].mxu0
        %v3014 = vadd.f32 %v2737, %v3013
        %v3015 = vpop.f32.mrb[0].mxu0
        %v3016 = vpop.f32.mrb[0].mxu0
        %v3017 = vadd.f32 %v2737, %v3016
        %v3018 = vpop.f32.mrb[0].mxu0
        %3019 = vmatprep.mubr.bf16.mxu0 0
        %3020 = vmatmul.mubr.bf16.gmra.mrb[0].mxu0 %v2661
        %v3021 = vpop.f32.mrb[0].mxu0
        %v3022 = vadd.f32 %v2737, %v3021
        %v3023 = vpop.f32.mrb[0].mxu0
        %v3024 = vpop.f32.mrb[0].mxu0
        %v3025 = vadd.f32 %v2737, %v3024
        %v3026 = vpop.f32.mrb[0].mxu0
        %3027 = vmatprep.mubr.bf16.mxu0 0
        %3028 = vmatmul.mubr.bf16.gmra.mrb[0].mxu0 %v2662
        %v3029 = vpop.f32.mrb[0].mxu0
        %v3030 = vadd.f32 %v2737, %v3029
        %v3031 = vpop.f32.mrb[0].mxu0
        %v3032 = vpop.f32.mrb[0].mxu0
        %v3033 = vadd.f32 %v2737, %v3032
        %v3034 = vpop.f32.mrb[0].mxu0
        %3035 = vmatprep.mubr.bf16.mxu0 0
        %3036 = vmatmul.mubr.bf16.gmra.mrb[0].mxu0 %v2663
        %v3037 = vpop.f32.mrb[0].mxu0
        %v3038 = vadd.f32 %v2737, %v3037
        %v3039 = vpop.f32.mrb[0].mxu0
        %v3040 = vpop.f32.mrb[0].mxu0
        %v3041 = vadd.f32 %v2737, %v3040
        %v3042 = vpop.f32.mrb[0].mxu0
        %3043 = vmatprep.mubr.bf16.mxu0 0
        %3044 = vmatmul.mubr.bf16.gmra.mrb[0].mxu0 %v2664
        %v3045 = vpop.f32.mrb[0].mxu0
        %v3046 = vadd.f32 %v2737, %v3045
        %v3047 = vpop.f32.mrb[0].mxu0
        %v3048 = vpop.f32.mrb[0].mxu0
        %v3049 = vadd.f32 %v2737, %v3048
        %v3050 = vpop.f32.mrb[0].mxu0
        %3051 = vmatprep.mubr.bf16.mxu0 0
        %3052 = vmatmul.mubr.bf16.gmra.mrb[0].mxu0 %v2665
        %v3053 = vpop.f32.mrb[0].mxu0
        %v3054 = vadd.f32 %v2737, %v3053
        %v3055 = vpop.f32.mrb[0].mxu0
        %v3056 = vpop.f32.mrb[0].mxu0
        %v3057 = vadd.f32 %v2737, %v3056
        %v3058 = vpop.f32.mrb[0].mxu0
        %3059 = vmatprep.mubr.bf16.mxu0 0
        %3060 = vmatmul.mubr.bf16.gmra.mrb[0].mxu0 %v2666
        %v3061 = vpop.f32.mrb[0].mxu0
        %v3062 = vadd.f32 %v2737, %v3061
        %v3063 = vpop.f32.mrb[0].mxu0
        %v3064 = vpop.f32.mrb[0].mxu0
        %v3065 = vadd.f32 %v2737, %v3064
        %v3066 = vpop.f32.mrb[0].mxu0
        %3067 = vmatprep.mubr.bf16.mxu0 0
        %3068 = vmatmul.mubr.bf16.gmra.mrb[0].mxu0 %v2667
        %v3069 = vpop.f32.mrb[0].mxu0
        %v3070 = vadd.f32 %v2737, %v3069
        %v3071 = vpop.f32.mrb[0].mxu0
        %v3072 = vpop.f32.mrb[0].mxu0
        %v3073 = vadd.f32 %v2737, %v3072
        %v3074 = vpop.f32.mrb[0].mxu0
        %3075 = vdwg.mxu0
        %v3076 = vmax.f32 %v2822, 0.0
        %v3077 = vmax.f32 %v2825, 0.0
        %v3078 = vmax.f32 %v2830, 0.0
        %v3079 = vmax.f32 %v2833, 0.0
        %v3080 = vmax.f32 %v2838, 0.0
        %v3081 = vmax.f32 %v2841, 0.0
        %v3082 = vmax.f32 %v2846, 0.0
        %v3083 = vmax.f32 %v2849, 0.0
        %v3084 = vmax.f32 %v2854, 0.0
        %v3085 = vmax.f32 %v2857, 0.0
        %v3086 = vmax.f32 %v2862, 0.0
        %v3087 = vmax.f32 %v2865, 0.0
        %v3088 = vmax.f32 %v2870, 0.0
        %v3089 = vmax.f32 %v2873, 0.0
        %v3090 = vmax.f32 %v2878, 0.0
        %v3091 = vmax.f32 %v2881, 0.0
        %v3092 = vmax.f32 %v2886, 0.0
        %v3093 = vmax.f32 %v2889, 0.0
        %v3094 = vmax.f32 %v2894, 0.0
        %v3095 = vmax.f32 %v2897, 0.0
        %v3096 = vmax.f32 %v2902, 0.0
        %v3097 = vmax.f32 %v2905, 0.0
        %v3098 = vmax.f32 %v2910, 0.0
        %v3099 = vmax.f32 %v2913, 0.0
        %v3100 = vmax.f32 %v2918, 0.0
        %v3101 = vmax.f32 %v2921, 0.0
        %v3102 = vmax.f32 %v2926, 0.0
        %v3103 = vmax.f32 %v2929, 0.0
        %v3104 = vmax.f32 %v2934, 0.0
        %v3105 = vmax.f32 %v2937, 0.0
        %v3106 = vmax.f32 %v2942, 0.0
        %v3107 = vmax.f32 %v2945, 0.0
        %v3108 = vmax.f32 %v2950, 0.0
        %v3109 = vmax.f32 %v2953, 0.0
        %v3110 = vmax.f32 %v2958, 0.0
        %v3111 = vmax.f32 %v2961, 0.0
        %v3112 = vmax.f32 %v2966, 0.0
        %v3113 = vmax.f32 %v2969, 0.0
        %v3114 = vmax.f32 %v2974, 0.0
        %v3115 = vmax.f32 %v2977, 0.0
        %v3116 = vmax.f32 %v2982, 0.0
        %v3117 = vmax.f32 %v2985, 0.0
        %v3118 = vmax.f32 %v2990, 0.0
        %v3119 = vmax.f32 %v2993, 0.0
        %v3120 = vmax.f32 %v2998, 0.0
        %v3121 = vmax.f32 %v3001, 0.0
        %v3122 = vmax.f32 %v3006, 0.0
        %v3123 = vmax.f32 %v3009, 0.0
        %v3124 = vmax.f32 %v3014, 0.0
        %v3125 = vmax.f32 %v3017, 0.0
        %v3126 = vmax.f32 %v3022, 0.0
        %v3127 = vmax.f32 %v3025, 0.0
        %v3128 = vmax.f32 %v3030, 0.0
        %v3129 = vmax.f32 %v3033, 0.0
        %v3130 = vmax.f32 %v3038, 0.0
        %v3131 = vmax.f32 %v3041, 0.0
        %v3132 = vmax.f32 %v3046, 0.0
        %v3133 = vmax.f32 %v3049, 0.0
        %v3134 = vmax.f32 %v3054, 0.0
        %v3135 = vmax.f32 %v3057, 0.0
        %v3136 = vmax.f32 %v3062, 0.0
        %v3137 = vmax.f32 %v3065, 0.0
        %v3138 = vmax.f32 %v3070, 0.0
        %v3139 = vmax.f32 %v3073, 0.0
        %v3140 = vld [vmem:[%s13] sm:$0x1]
        %v3142 = vlaneseq
        %v3143 = vshrl.u32 %v3142, 7
        %v3144 = vsub.s32 0, %v3143
        %v3145 = vrot.slane %v3140, %v3144
        %v3163 = vunpack.c.l.b16 %v2716
        %v3164 = vunpack.c.l.b16 %v2717
        %v3165 = vunpack.c.l.b16 %v2718
        %v3166 = vunpack.c.l.b16 %v2719
        %v3167 = vunpack.c.l.b16 %v2720
        %v3168 = vunpack.c.l.b16 %v2721
        %v3169 = vunpack.c.l.b16 %v2722
        %v3170 = vunpack.c.l.b16 %v2723
        %v3171 = vunpack.c.l.b16 %v2724
        %v3172 = vunpack.c.l.b16 %v2725
        %v3173 = vunpack.c.l.b16 %v2726
        %v3174 = vunpack.c.l.b16 %v2727
        %v3175 = vunpack.c.l.b16 %v2728
        %v3176 = vunpack.c.l.b16 %v2729
        %v3177 = vunpack.c.l.b16 %v2730
        %v3178 = vunpack.c.l.b16 %v2731
        %v3179 = vpack.c.b16 %v3164, %v3163
        %v3180 = vpack.c.b16 %v3166, %v3165
        %v3181 = vpack.c.b16 %v3168, %v3167
        %v3182 = vpack.c.b16 %v3170, %v3169
        %v3183 = vpack.c.b16 %v3172, %v3171
        %v3184 = vpack.c.b16 %v3174, %v3173
        %v3185 = vpack.c.b16 %v3176, %v3175
        %v3186 = vpack.c.b16 %v3178, %v3177
        %3195 = vmatprep.subr.bf16.mxu0 0
        %3196 = vmatpush1.bf16.msra.mxu0 %v3179
        %3197 = vmatprep.subr.bf16.mxu0 0
        %3198 = vmatpush1.bf16.msra.mxu0 %v3180
        %3199 = vmatprep.subr.bf16.mxu0 0
        %3200 = vmatpush1.bf16.msra.mxu0 %v3181
        %3201 = vmatprep.subr.bf16.mxu0 0
        %3202 = vmatpush1.bf16.msra.mxu0 %v3182
        %3203 = vmatprep.subr.bf16.mxu0 0
        %3204 = vmatpush1.bf16.msra.mxu0 %v3183
        %3205 = vmatprep.subr.bf16.mxu0 0
        %3206 = vmatpush1.bf16.msra.mxu0 %v3184
        %3207 = vmatprep.subr.bf16.mxu0 0
        %3208 = vmatpush1.bf16.msra.mxu0 %v3185
        %3209 = vmatprep.subr.bf16.mxu0 0
        %3210 = vmatpush1.bf16.msra.mxu0 %v3186
        %3211 = vmatprep.subr.bf16.mxu0 0
        %3212 = vmatpush1.bf16.msra.mxu0 0
        %3213 = vmatprep.subr.bf16.mxu0 0
        %3214 = vmatpush1.bf16.msra.mxu0 0
        %3215 = vmatprep.subr.bf16.mxu0 0
        %3216 = vmatpush1.bf16.msra.mxu0 0
        %3217 = vmatprep.subr.bf16.mxu0 0
        %3218 = vmatpush1.bf16.msra.mxu0 0
        %3219 = vmatprep.subr.bf16.mxu0 0
        %3220 = vmatpush1.bf16.msra.mxu0 0
        %3221 = vmatprep.subr.bf16.mxu0 0
        %3222 = vmatpush1.bf16.msra.mxu0 0
        %3223 = vmatprep.subr.bf16.mxu0 0
        %3224 = vmatpush1.bf16.msra.mxu0 0
        %3225 = vmatprep.subr.bf16.mxu0 0
        %3226 = vmatpush1.bf16.msra.mxu0 0
        %3227 = vmatprep.mubr.bf16.mxu0 0
        %3228 = vmatmul.mubr.bf16.gmra.mrb[0].mxu0 %v2684
        %v3229 = vpop.f32.mrb[0].mxu0
        %v3230 = vadd.f32 %v3145, %v3229
        %v3231 = vpop.f32.mrb[0].mxu0
        %v3232 = vpop.f32.mrb[0].mxu0
        %v3233 = vadd.f32 %v3145, %v3232
        %v3234 = vpop.f32.mrb[0].mxu0
        %3235 = vmatprep.mubr.bf16.mxu0 0
        %3236 = vmatmul.mubr.bf16.gmra.mrb[0].mxu0 %v2685
        %v3237 = vpop.f32.mrb[0].mxu0
        %v3238 = vadd.f32 %v3145, %v3237
        %v3239 = vpop.f32.mrb[0].mxu0
        %v3240 = vpop.f32.mrb[0].mxu0
        %v3241 = vadd.f32 %v3145, %v3240
        %v3242 = vpop.f32.mrb[0].mxu0
        %3243 = vmatprep.mubr.bf16.mxu0 0
        %3244 = vmatmul.mubr.bf16.gmra.mrb[0].mxu0 %v2686
        %v3245 = vpop.f32.mrb[0].mxu0
        %v3246 = vadd.f32 %v3145, %v3245
        %v3247 = vpop.f32.mrb[0].mxu0
        %v3248 = vpop.f32.mrb[0].mxu0
        %v3249 = vadd.f32 %v3145, %v3248
        %v3250 = vpop.f32.mrb[0].mxu0
        %3251 = vmatprep.mubr.bf16.mxu0 0
        %3252 = vmatmul.mubr.bf16.gmra.mrb[0].mxu0 %v2687
        %v3253 = vpop.f32.mrb[0].mxu0
        %v3254 = vadd.f32 %v3145, %v3253
        %v3255 = vpop.f32.mrb[0].mxu0
        %v3256 = vpop.f32.mrb[0].mxu0
        %v3257 = vadd.f32 %v3145, %v3256
        %v3258 = vpop.f32.mrb[0].mxu0
        %3259 = vmatprep.mubr.bf16.mxu0 0
        %3260 = vmatmul.mubr.bf16.gmra.mrb[0].mxu0 %v2688
        %v3261 = vpop.f32.mrb[0].mxu0
        %v3262 = vadd.f32 %v3145, %v3261
        %v3263 = vpop.f32.mrb[0].mxu0
        %v3264 = vpop.f32.mrb[0].mxu0
        %v3265 = vadd.f32 %v3145, %v3264
        %v3266 = vpop.f32.mrb[0].mxu0
        %3267 = vmatprep.mubr.bf16.mxu0 0
        %3268 = vmatmul.mubr.bf16.gmra.mrb[0].mxu0 %v2689
        %v3269 = vpop.f32.mrb[0].mxu0
        %v3270 = vadd.f32 %v3145, %v3269
        %v3271 = vpop.f32.mrb[0].mxu0
        %v3272 = vpop.f32.mrb[0].mxu0
        %v3273 = vadd.f32 %v3145, %v3272
        %v3274 = vpop.f32.mrb[0].mxu0
        %3275 = vmatprep.mubr.bf16.mxu0 0
        %3276 = vmatmul.mubr.bf16.gmra.mrb[0].mxu0 %v2690
        %v3277 = vpop.f32.mrb[0].mxu0
        %v3278 = vadd.f32 %v3145, %v3277
        %v3279 = vpop.f32.mrb[0].mxu0
        %v3280 = vpop.f32.mrb[0].mxu0
        %v3281 = vadd.f32 %v3145, %v3280
        %v3282 = vpop.f32.mrb[0].mxu0
        %3283 = vmatprep.mubr.bf16.mxu0 0
        %3284 = vmatmul.mubr.bf16.gmra.mrb[0].mxu0 %v2691
        %v3285 = vpop.f32.mrb[0].mxu0
        %v3286 = vadd.f32 %v3145, %v3285
        %v3287 = vpop.f32.mrb[0].mxu0
        %v3288 = vpop.f32.mrb[0].mxu0
        %v3289 = vadd.f32 %v3145, %v3288
        %v3290 = vpop.f32.mrb[0].mxu0
        %3291 = vmatprep.mubr.bf16.mxu0 0
        %3292 = vmatmul.mubr.bf16.gmra.mrb[0].mxu0 %v2692
        %v3293 = vpop.f32.mrb[0].mxu0
        %v3294 = vadd.f32 %v3145, %v3293
        %v3295 = vpop.f32.mrb[0].mxu0
        %v3296 = vpop.f32.mrb[0].mxu0
        %v3297 = vadd.f32 %v3145, %v3296
        %v3298 = vpop.f32.mrb[0].mxu0
        %3299 = vmatprep.mubr.bf16.mxu0 0
        %3300 = vmatmul.mubr.bf16.gmra.mrb[0].mxu0 %v2693
        %v3301 = vpop.f32.mrb[0].mxu0
        %v3302 = vadd.f32 %v3145, %v3301
        %v3303 = vpop.f32.mrb[0].mxu0
        %v3304 = vpop.f32.mrb[0].mxu0
        %v3305 = vadd.f32 %v3145, %v3304
        %v3306 = vpop.f32.mrb[0].mxu0
        %3307 = vmatprep.mubr.bf16.mxu0 0
        %3308 = vmatmul.mubr.bf16.gmra.mrb[0].mxu0 %v2694
        %v3309 = vpop.f32.mrb[0].mxu0
        %v3310 = vadd.f32 %v3145, %v3309
        %v3311 = vpop.f32.mrb[0].mxu0
        %v3312 = vpop.f32.mrb[0].mxu0
        %v3313 = vadd.f32 %v3145, %v3312
        %v3314 = vpop.f32.mrb[0].mxu0
        %3315 = vmatprep.mubr.bf16.mxu0 0
        %3316 = vmatmul.mubr.bf16.gmra.mrb[0].mxu0 %v2695
        %v3317 = vpop.f32.mrb[0].mxu0
        %v3318 = vadd.f32 %v3145, %v3317
        %v3319 = vpop.f32.mrb[0].mxu0
        %v3320 = vpop.f32.mrb[0].mxu0
        %v3321 = vadd.f32 %v3145, %v3320
        %v3322 = vpop.f32.mrb[0].mxu0
        %3323 = vmatprep.mubr.bf16.mxu0 0
        %3324 = vmatmul.mubr.bf16.gmra.mrb[0].mxu0 %v2696
        %v3325 = vpop.f32.mrb[0].mxu0
        %v3326 = vadd.f32 %v3145, %v3325
        %v3327 = vpop.f32.mrb[0].mxu0
        %v3328 = vpop.f32.mrb[0].mxu0
        %v3329 = vadd.f32 %v3145, %v3328
        %v3330 = vpop.f32.mrb[0].mxu0
        %3331 = vmatprep.mubr.bf16.mxu0 0
        %3332 = vmatmul.mubr.bf16.gmra.mrb[0].mxu0 %v2697
        %v3333 = vpop.f32.mrb[0].mxu0
        %v3334 = vadd.f32 %v3145, %v3333
        %v3335 = vpop.f32.mrb[0].mxu0
        %v3336 = vpop.f32.mrb[0].mxu0
        %v3337 = vadd.f32 %v3145, %v3336
        %v3338 = vpop.f32.mrb[0].mxu0
        %3339 = vmatprep.mubr.bf16.mxu0 0
        %3340 = vmatmul.mubr.bf16.gmra.mrb[0].mxu0 %v2698
        %v3341 = vpop.f32.mrb[0].mxu0
        %v3342 = vadd.f32 %v3145, %v3341
        %v3343 = vpop.f32.mrb[0].mxu0
        %v3344 = vpop.f32.mrb[0].mxu0
        %v3345 = vadd.f32 %v3145, %v3344
        %v3346 = vpop.f32.mrb[0].mxu0
        %3347 = vmatprep.mubr.bf16.mxu0 0
        %3348 = vmatmul.mubr.bf16.gmra.mrb[0].mxu0 %v2699
        %v3349 = vpop.f32.mrb[0].mxu0
        %v3350 = vadd.f32 %v3145, %v3349
        %v3351 = vpop.f32.mrb[0].mxu0
        %v3352 = vpop.f32.mrb[0].mxu0
        %v3353 = vadd.f32 %v3145, %v3352
        %v3354 = vpop.f32.mrb[0].mxu0
        %3355 = vmatprep.mubr.bf16.mxu0 0
        %3356 = vmatmul.mubr.bf16.gmra.mrb[0].mxu0 %v2700
        %v3357 = vpop.f32.mrb[0].mxu0
        %v3358 = vadd.f32 %v3145, %v3357
        %v3359 = vpop.f32.mrb[0].mxu0
        %v3360 = vpop.f32.mrb[0].mxu0
        %v3361 = vadd.f32 %v3145, %v3360
        %v3362 = vpop.f32.mrb[0].mxu0
        %3363 = vmatprep.mubr.bf16.mxu0 0
        %3364 = vmatmul.mubr.bf16.gmra.mrb[0].mxu0 %v2701
        %v3365 = vpop.f32.mrb[0].mxu0
        %v3366 = vadd.f32 %v3145, %v3365
        %v3367 = vpop.f32.mrb[0].mxu0
        %v3368 = vpop.f32.mrb[0].mxu0
        %v3369 = vadd.f32 %v3145, %v3368
        %v3370 = vpop.f32.mrb[0].mxu0
        %3371 = vmatprep.mubr.bf16.mxu0 0
        %3372 = vmatmul.mubr.bf16.gmra.mrb[0].mxu0 %v2702
        %v3373 = vpop.f32.mrb[0].mxu0
        %v3374 = vadd.f32 %v3145, %v3373
        %v3375 = vpop.f32.mrb[0].mxu0
        %v3376 = vpop.f32.mrb[0].mxu0
        %v3377 = vadd.f32 %v3145, %v3376
        %v3378 = vpop.f32.mrb[0].mxu0
        %3379 = vmatprep.mubr.bf16.mxu0 0
        %3380 = vmatmul.mubr.bf16.gmra.mrb[0].mxu0 %v2703
        %v3381 = vpop.f32.mrb[0].mxu0
        %v3382 = vadd.f32 %v3145, %v3381
        %v3383 = vpop.f32.mrb[0].mxu0
        %v3384 = vpop.f32.mrb[0].mxu0
        %v3385 = vadd.f32 %v3145, %v3384
        %v3386 = vpop.f32.mrb[0].mxu0
        %3387 = vmatprep.mubr.bf16.mxu0 0
        %3388 = vmatmul.mubr.bf16.gmra.mrb[0].mxu0 %v2704
        %v3389 = vpop.f32.mrb[0].mxu0
        %v3390 = vadd.f32 %v3145, %v3389
        %v3391 = vpop.f32.mrb[0].mxu0
        %v3392 = vpop.f32.mrb[0].mxu0
        %v3393 = vadd.f32 %v3145, %v3392
        %v3394 = vpop.f32.mrb[0].mxu0
        %3395 = vmatprep.mubr.bf16.mxu0 0
        %3396 = vmatmul.mubr.bf16.gmra.mrb[0].mxu0 %v2705
        %v3397 = vpop.f32.mrb[0].mxu0
        %v3398 = vadd.f32 %v3145, %v3397
        %v3399 = vpop.f32.mrb[0].mxu0
        %v3400 = vpop.f32.mrb[0].mxu0
        %v3401 = vadd.f32 %v3145, %v3400
        %v3402 = vpop.f32.mrb[0].mxu0
        %3403 = vmatprep.mubr.bf16.mxu0 0
        %3404 = vmatmul.mubr.bf16.gmra.mrb[0].mxu0 %v2706
        %v3405 = vpop.f32.mrb[0].mxu0
        %v3406 = vadd.f32 %v3145, %v3405
        %v3407 = vpop.f32.mrb[0].mxu0
        %v3408 = vpop.f32.mrb[0].mxu0
        %v3409 = vadd.f32 %v3145, %v3408
        %v3410 = vpop.f32.mrb[0].mxu0
        %3411 = vmatprep.mubr.bf16.mxu0 0
        %3412 = vmatmul.mubr.bf16.gmra.mrb[0].mxu0 %v2707
        %v3413 = vpop.f32.mrb[0].mxu0
        %v3414 = vadd.f32 %v3145, %v3413
        %v3415 = vpop.f32.mrb[0].mxu0
        %v3416 = vpop.f32.mrb[0].mxu0
        %v3417 = vadd.f32 %v3145, %v3416
        %v3418 = vpop.f32.mrb[0].mxu0
        %3419 = vmatprep.mubr.bf16.mxu0 0
        %3420 = vmatmul.mubr.bf16.gmra.mrb[0].mxu0 %v2708
        %v3421 = vpop.f32.mrb[0].mxu0
        %v3422 = vadd.f32 %v3145, %v3421
        %v3423 = vpop.f32.mrb[0].mxu0
        %v3424 = vpop.f32.mrb[0].mxu0
        %v3425 = vadd.f32 %v3145, %v3424
        %v3426 = vpop.f32.mrb[0].mxu0
        %3427 = vmatprep.mubr.bf16.mxu0 0
        %3428 = vmatmul.mubr.bf16.gmra.mrb[0].mxu0 %v2709
        %v3429 = vpop.f32.mrb[0].mxu0
        %v3430 = vadd.f32 %v3145, %v3429
        %v3431 = vpop.f32.mrb[0].mxu0
        %v3432 = vpop.f32.mrb[0].mxu0
        %v3433 = vadd.f32 %v3145, %v3432
        %v3434 = vpop.f32.mrb[0].mxu0
        %3435 = vmatprep.mubr.bf16.mxu0 0
        %3436 = vmatmul.mubr.bf16.gmra.mrb[0].mxu0 %v2710
        %v3437 = vpop.f32.mrb[0].mxu0
        %v3438 = vadd.f32 %v3145, %v3437
        %v3439 = vpop.f32.mrb[0].mxu0
        %v3440 = vpop.f32.mrb[0].mxu0
        %v3441 = vadd.f32 %v3145, %v3440
        %v3442 = vpop.f32.mrb[0].mxu0
        %3443 = vmatprep.mubr.bf16.mxu0 0
        %3444 = vmatmul.mubr.bf16.gmra.mrb[0].mxu0 %v2711
        %v3445 = vpop.f32.mrb[0].mxu0
        %v3446 = vadd.f32 %v3145, %v3445
        %v3447 = vpop.f32.mrb[0].mxu0
        %v3448 = vpop.f32.mrb[0].mxu0
        %v3449 = vadd.f32 %v3145, %v3448
        %v3450 = vpop.f32.mrb[0].mxu0
        %3451 = vmatprep.mubr.bf16.mxu0 0
        %3452 = vmatmul.mubr.bf16.gmra.mrb[0].mxu0 %v2712
        %v3453 = vpop.f32.mrb[0].mxu0
        %v3454 = vadd.f32 %v3145, %v3453
        %v3455 = vpop.f32.mrb[0].mxu0
        %v3456 = vpop.f32.mrb[0].mxu0
        %v3457 = vadd.f32 %v3145, %v3456
        %v3458 = vpop.f32.mrb[0].mxu0
        %3459 = vmatprep.mubr.bf16.mxu0 0
        %3460 = vmatmul.mubr.bf16.gmra.mrb[0].mxu0 %v2713
        %v3461 = vpop.f32.mrb[0].mxu0
        %v3462 = vadd.f32 %v3145, %v3461
        %v3463 = vpop.f32.mrb[0].mxu0
        %v3464 = vpop.f32.mrb[0].mxu0
        %v3465 = vadd.f32 %v3145, %v3464
        %v3466 = vpop.f32.mrb[0].mxu0
        %3467 = vmatprep.mubr.bf16.mxu0 0
        %3468 = vmatmul.mubr.bf16.gmra.mrb[0].mxu0 %v2714
        %v3469 = vpop.f32.mrb[0].mxu0
        %v3470 = vadd.f32 %v3145, %v3469
        %v3471 = vpop.f32.mrb[0].mxu0
        %v3472 = vpop.f32.mrb[0].mxu0
        %v3473 = vadd.f32 %v3145, %v3472
        %v3474 = vpop.f32.mrb[0].mxu0
        %3475 = vmatprep.mubr.bf16.mxu0 0
        %3476 = vmatmul.mubr.bf16.gmra.mrb[0].mxu0 %v2715
        %v3477 = vpop.f32.mrb[0].mxu0
        %v3478 = vadd.f32 %v3145, %v3477
        %v3479 = vpop.f32.mrb[0].mxu0
        %v3480 = vpop.f32.mrb[0].mxu0
        %v3481 = vadd.f32 %v3145, %v3480
        %v3482 = vpop.f32.mrb[0].mxu0
        %3483 = vdwg.mxu0
        %v3484 = vmax.f32 %v3230, 0.0
        %v3485 = vmax.f32 %v3233, 0.0
        %v3486 = vmax.f32 %v3238, 0.0
        %v3487 = vmax.f32 %v3241, 0.0
        %v3488 = vmax.f32 %v3246, 0.0
        %v3489 = vmax.f32 %v3249, 0.0
        %v3490 = vmax.f32 %v3254, 0.0
        %v3491 = vmax.f32 %v3257, 0.0
        %v3492 = vmax.f32 %v3262, 0.0
        %v3493 = vmax.f32 %v3265, 0.0
        %v3494 = vmax.f32 %v3270, 0.0
        %v3495 = vmax.f32 %v3273, 0.0
        %v3496 = vmax.f32 %v3278, 0.0
        %v3497 = vmax.f32 %v3281, 0.0
        %v3498 = vmax.f32 %v3286, 0.0
        %v3499 = vmax.f32 %v3289, 0.0
        %v3500 = vmax.f32 %v3294, 0.0
        %v3501 = vmax.f32 %v3297, 0.0
        %v3502 = vmax.f32 %v3302, 0.0
        %v3503 = vmax.f32 %v3305, 0.0
        %v3504 = vmax.f32 %v3310, 0.0
        %v3505 = vmax.f32 %v3313, 0.0
        %v3506 = vmax.f32 %v3318, 0.0
        %v3507 = vmax.f32 %v3321, 0.0
        %v3508 = vmax.f32 %v3326, 0.0
        %v3509 = vmax.f32 %v3329, 0.0
        %v3510 = vmax.f32 %v3334, 0.0
        %v3511 = vmax.f32 %v3337, 0.0
        %v3512 = vmax.f32 %v3342, 0.0
        %v3513 = vmax.f32 %v3345, 0.0
        %v3514 = vmax.f32 %v3350, 0.0
        %v3515 = vmax.f32 %v3353, 0.0
        %v3516 = vmax.f32 %v3358, 0.0
        %v3517 = vmax.f32 %v3361, 0.0
        %v3518 = vmax.f32 %v3366, 0.0
        %v3519 = vmax.f32 %v3369, 0.0
        %v3520 = vmax.f32 %v3374, 0.0
        %v3521 = vmax.f32 %v3377, 0.0
        %v3522 = vmax.f32 %v3382, 0.0
        %v3523 = vmax.f32 %v3385, 0.0
        %v3524 = vmax.f32 %v3390, 0.0
        %v3525 = vmax.f32 %v3393, 0.0
        %v3526 = vmax.f32 %v3398, 0.0
        %v3527 = vmax.f32 %v3401, 0.0
        %v3528 = vmax.f32 %v3406, 0.0
        %v3529 = vmax.f32 %v3409, 0.0
        %v3530 = vmax.f32 %v3414, 0.0
        %v3531 = vmax.f32 %v3417, 0.0
        %v3532 = vmax.f32 %v3422, 0.0
        %v3533 = vmax.f32 %v3425, 0.0
        %v3534 = vmax.f32 %v3430, 0.0
        %v3535 = vmax.f32 %v3433, 0.0
        %v3536 = vmax.f32 %v3438, 0.0
        %v3537 = vmax.f32 %v3441, 0.0
        %v3538 = vmax.f32 %v3446, 0.0
        %v3539 = vmax.f32 %v3449, 0.0
        %v3540 = vmax.f32 %v3454, 0.0
        %v3541 = vmax.f32 %v3457, 0.0
        %v3542 = vmax.f32 %v3462, 0.0
        %v3543 = vmax.f32 %v3465, 0.0
        %v3544 = vmax.f32 %v3470, 0.0
        %v3545 = vmax.f32 %v3473, 0.0
        %v3546 = vmax.f32 %v3478, 0.0
        %v3547 = vmax.f32 %v3481, 0.0
        %3548 = vst [vmem:[%s655] sm:$0xff] %v3076
        %3549 = vst [vmem:[%s655 + $0x8] sm:$0xff] %v3077
        %3550 = vst [vmem:[%s655 + $0x10] sm:$0xff] %v3078
        %3551 = vst [vmem:[%s655 + $0x18] sm:$0xff] %v3079
        %3552 = vst [vmem:[%s655 + $0x20] sm:$0xff] %v3080
        %3553 = vst [vmem:[%s655 + $0x28] sm:$0xff] %v3081
        %3554 = vst [vmem:[%s655 + $0x30] sm:$0xff] %v3082
        %3555 = vst [vmem:[%s655 + $0x38] sm:$0xff] %v3083
        %3556 = vst [vmem:[%s655 + $0x40] sm:$0xff] %v3084
        %3557 = vst [vmem:[%s655 + $0x48] sm:$0xff] %v3085
        %3558 = vst [vmem:[%s655 + $0x50] sm:$0xff] %v3086
        %3559 = vst [vmem:[%s655 + $0x58] sm:$0xff] %v3087
        %3560 = vst [vmem:[%s655 + $0x60] sm:$0xff] %v3088
        %3561 = vst [vmem:[%s655 + $0x68] sm:$0xff] %v3089
        %3562 = vst [vmem:[%s655 + $0x70] sm:$0xff] %v3090
        %3563 = vst [vmem:[%s655 + $0x78] sm:$0xff] %v3091
        %3564 = vst [vmem:[%s655 + $0x80] sm:$0xff] %v3092
        %3565 = vst [vmem:[%s655 + $0x88] sm:$0xff] %v3093
        %3566 = vst [vmem:[%s655 + $0x90] sm:$0xff] %v3094
        %3567 = vst [vmem:[%s655 + $0x98] sm:$0xff] %v3095
        %3568 = vst [vmem:[%s655 + $0xa0] sm:$0xff] %v3096
        %3569 = vst [vmem:[%s655 + $0xa8] sm:$0xff] %v3097
        %3570 = vst [vmem:[%s655 + $0xb0] sm:$0xff] %v3098
        %3571 = vst [vmem:[%s655 + $0xb8] sm:$0xff] %v3099
        %3572 = vst [vmem:[%s655 + $0xc0] sm:$0xff] %v3100
        %3573 = vst [vmem:[%s655 + $0xc8] sm:$0xff] %v3101
        %3574 = vst [vmem:[%s655 + $0xd0] sm:$0xff] %v3102
        %3575 = vst [vmem:[%s655 + $0xd8] sm:$0xff] %v3103
        %3576 = vst [vmem:[%s655 + $0xe0] sm:$0xff] %v3104
        %3577 = vst [vmem:[%s655 + $0xe8] sm:$0xff] %v3105
        %3578 = vst [vmem:[%s655 + $0xf0] sm:$0xff] %v3106
        %3579 = vst [vmem:[%s655 + $0xf8] sm:$0xff] %v3107
        %3580 = vst [vmem:[%s655 + $0x100] sm:$0xff] %v3108
        %3581 = vst [vmem:[%s655 + $0x108] sm:$0xff] %v3109
        %3582 = vst [vmem:[%s655 + $0x110] sm:$0xff] %v3110
        %3583 = vst [vmem:[%s655 + $0x118] sm:$0xff] %v3111
        %3584 = vst [vmem:[%s655 + $0x120] sm:$0xff] %v3112
        %3585 = vst [vmem:[%s655 + $0x128] sm:$0xff] %v3113
        %3586 = vst [vmem:[%s655 + $0x130] sm:$0xff] %v3114
        %3587 = vst [vmem:[%s655 + $0x138] sm:$0xff] %v3115
        %3588 = vst [vmem:[%s655 + $0x140] sm:$0xff] %v3116
        %3589 = vst [vmem:[%s655 + $0x148] sm:$0xff] %v3117
        %3590 = vst [vmem:[%s655 + $0x150] sm:$0xff] %v3118
        %3591 = vst [vmem:[%s655 + $0x158] sm:$0xff] %v3119
        %3592 = vst [vmem:[%s655 + $0x160] sm:$0xff] %v3120
        %3593 = vst [vmem:[%s655 + $0x168] sm:$0xff] %v3121
        %3594 = vst [vmem:[%s655 + $0x170] sm:$0xff] %v3122
        %3595 = vst [vmem:[%s655 + $0x178] sm:$0xff] %v3123
        %3596 = vst [vmem:[%s655 + $0x180] sm:$0xff] %v3124
        %3597 = vst [vmem:[%s655 + $0x188] sm:$0xff] %v3125
        %3598 = vst [vmem:[%s655 + $0x190] sm:$0xff] %v3126
        %3599 = vst [vmem:[%s655 + $0x198] sm:$0xff] %v3127
        %3600 = vst [vmem:[%s655 + $0x1a0] sm:$0xff] %v3128
        %3601 = vst [vmem:[%s655 + $0x1a8] sm:$0xff] %v3129
        %3602 = vst [vmem:[%s655 + $0x1b0] sm:$0xff] %v3130
        %3603 = vst [vmem:[%s655 + $0x1b8] sm:$0xff] %v3131
        %3604 = vst [vmem:[%s655 + $0x1c0] sm:$0xff] %v3132
        %3605 = vst [vmem:[%s655 + $0x1c8] sm:$0xff] %v3133
        %3606 = vst [vmem:[%s655 + $0x1d0] sm:$0xff] %v3134
        %3607 = vst [vmem:[%s655 + $0x1d8] sm:$0xff] %v3135
        %3608 = vst [vmem:[%s655 + $0x1e0] sm:$0xff] %v3136
        %3609 = vst [vmem:[%s655 + $0x1e8] sm:$0xff] %v3137
        %3610 = vst [vmem:[%s655 + $0x1f0] sm:$0xff] %v3138
        %3611 = vst [vmem:[%s655 + $0x1f8] sm:$0xff] %v3139
        %3612 = vst [vmem:[%s662] sm:$0xff] %v3484
        %3613 = vst [vmem:[%s662 + $0x8] sm:$0xff] %v3485
        %3614 = vst [vmem:[%s662 + $0x10] sm:$0xff] %v3486
        %3615 = vst [vmem:[%s662 + $0x18] sm:$0xff] %v3487
        %3616 = vst [vmem:[%s662 + $0x20] sm:$0xff] %v3488
        %3617 = vst [vmem:[%s662 + $0x28] sm:$0xff] %v3489
        %3618 = vst [vmem:[%s662 + $0x30] sm:$0xff] %v3490
        %3619 = vst [vmem:[%s662 + $0x38] sm:$0xff] %v3491
        %3620 = vst [vmem:[%s662 + $0x40] sm:$0xff] %v3492
        %3621 = vst [vmem:[%s662 + $0x48] sm:$0xff] %v3493
        %3622 = vst [vmem:[%s662 + $0x50] sm:$0xff] %v3494
        %3623 = vst [vmem:[%s662 + $0x58] sm:$0xff] %v3495
        %3624 = vst [vmem:[%s662 + $0x60] sm:$0xff] %v3496
        %3625 = vst [vmem:[%s662 + $0x68] sm:$0xff] %v3497
        %3626 = vst [vmem:[%s662 + $0x70] sm:$0xff] %v3498
        %3627 = vst [vmem:[%s662 + $0x78] sm:$0xff] %v3499
        %3628 = vst [vmem:[%s662 + $0x80] sm:$0xff] %v3500
        %3629 = vst [vmem:[%s662 + $0x88] sm:$0xff] %v3501
        %3630 = vst [vmem:[%s662 + $0x90] sm:$0xff] %v3502
        %3631 = vst [vmem:[%s662 + $0x98] sm:$0xff] %v3503
        %3632 = vst [vmem:[%s662 + $0xa0] sm:$0xff] %v3504
        %3633 = vst [vmem:[%s662 + $0xa8] sm:$0xff] %v3505
        %3634 = vst [vmem:[%s662 + $0xb0] sm:$0xff] %v3506
        %3635 = vst [vmem:[%s662 + $0xb8] sm:$0xff] %v3507
        %3636 = vst [vmem:[%s662 + $0xc0] sm:$0xff] %v3508
        %3637 = vst [vmem:[%s662 + $0xc8] sm:$0xff] %v3509
        %3638 = vst [vmem:[%s662 + $0xd0] sm:$0xff] %v3510
        %3639 = vst [vmem:[%s662 + $0xd8] sm:$0xff] %v3511
        %3640 = vst [vmem:[%s662 + $0xe0] sm:$0xff] %v3512
        %3641 = vst [vmem:[%s662 + $0xe8] sm:$0xff] %v3513
        %3642 = vst [vmem:[%s662 + $0xf0] sm:$0xff] %v3514
        %3643 = vst [vmem:[%s662 + $0xf8] sm:$0xff] %v3515
        %3644 = vst [vmem:[%s662 + $0x100] sm:$0xff] %v3516
        %3645 = vst [vmem:[%s662 + $0x108] sm:$0xff] %v3517
        %3646 = vst [vmem:[%s662 + $0x110] sm:$0xff] %v3518
        %3647 = vst [vmem:[%s662 + $0x118] sm:$0xff] %v3519
        %3648 = vst [vmem:[%s662 + $0x120] sm:$0xff] %v3520
        %3649 = vst [vmem:[%s662 + $0x128] sm:$0xff] %v3521
        %3650 = vst [vmem:[%s662 + $0x130] sm:$0xff] %v3522
        %3651 = vst [vmem:[%s662 + $0x138] sm:$0xff] %v3523
        %3652 = vst [vmem:[%s662 + $0x140] sm:$0xff] %v3524
        %3653 = vst [vmem:[%s662 + $0x148] sm:$0xff] %v3525
        %3654 = vst [vmem:[%s662 + $0x150] sm:$0xff] %v3526
        %3655 = vst [vmem:[%s662 + $0x158] sm:$0xff] %v3527
        %3656 = vst [vmem:[%s662 + $0x160] sm:$0xff] %v3528
        %3657 = vst [vmem:[%s662 + $0x168] sm:$0xff] %v3529
        %3658 = vst [vmem:[%s662 + $0x170] sm:$0xff] %v3530
        %3659 = vst [vmem:[%s662 + $0x178] sm:$0xff] %v3531
        %3660 = vst [vmem:[%s662 + $0x180] sm:$0xff] %v3532
        %3661 = vst [vmem:[%s662 + $0x188] sm:$0xff] %v3533
        %3662 = vst [vmem:[%s662 + $0x190] sm:$0xff] %v3534
        %3663 = vst [vmem:[%s662 + $0x198] sm:$0xff] %v3535
        %3664 = vst [vmem:[%s662 + $0x1a0] sm:$0xff] %v3536
        %3665 = vst [vmem:[%s662 + $0x1a8] sm:$0xff] %v3537
        %3666 = vst [vmem:[%s662 + $0x1b0] sm:$0xff] %v3538
        %3667 = vst [vmem:[%s662 + $0x1b8] sm:$0xff] %v3539
        %3668 = vst [vmem:[%s662 + $0x1c0] sm:$0xff] %v3540
        %3669 = vst [vmem:[%s662 + $0x1c8] sm:$0xff] %v3541
        %3670 = vst [vmem:[%s662 + $0x1d0] sm:$0xff] %v3542
        %3671 = vst [vmem:[%s662 + $0x1d8] sm:$0xff] %v3543
        %3672 = vst [vmem:[%s662 + $0x1e0] sm:$0xff] %v3544
        %3673 = vst [vmem:[%s662 + $0x1e8] sm:$0xff] %v3545
        %3674 = vst [vmem:[%s662 + $0x1f0] sm:$0xff] %v3546
        %3675 = vst [vmem:[%s662 + $0x1f8] sm:$0xff] %v3547
        %s3676 = sand.u32 %s354, 1
        %s3677 = scalar_lea.sflag [#allocation4], %s3676
        %s3678 = sand.u32 %s354, 1
        %s3679 = smul.addr %s3678, 512
        %s3680 = scalar_lea.vmem [#allocation16], %s3679
        %s3681 = sand.u32 %s380, 1
        %s3682 = scalar_lea.sflag [#allocation18], %s3681
        %s3683 = sand.u32 %s380, 1
        %s3684 = smul.addr %s3683, 512
        %s3685 = scalar_lea.vmem [#allocation17], %s3684
        // Predicated region
        $region109: #{mimo_sequential_fused.1} parent=75 // pred_check
          %p3686 = pneg %p364
        $region110: #{mimo_sequential_fused.1} parent=75 // pred_check_branch
          %3688 = sbr.rel (%p3686) target = $region112
        $region111: #{mimo_sequential_fused.1} parent=75 // pred_region
          %s3689 = smul.u32 64, %s42
          %s3690 = ssub.s32 75, %s3689
          %p3691 = scmp.lt.s32.totalorder %s3690, 64
          %s3692 = scalar_select %p3691, %s3690, 64
          %s3693 = smul.u32 128, %s3692
          %s3695 = ssub.s32 8192, %s3693
          %3696 = vsyncadd %s3677, %s3695
          %p3697 = scmp.ne.s32.totalorder 0, %s3693
          %s3698 = smul.addr %s3689, 128
          %s3699 = scalar_lea.hbm %s14, %s3698
          %s3700 = smul.u32 8, %s3692
          %s3701 = sshll.u32 %s3680, 4
          %s3702 = int_to_ptr.vmem [resolvable:$true] %s3701
          %s3703 = sshll.u32 %s3700, 4
          %3707 = dma.vmem_to_hbm [thread:$0]  (%p3697), %s3702, %s3703, %s3699, %s3677, 128, 128, 8
        $region112: #{mimo_sequential_fused.1} parent=75 // pred_fallthru
          _
        // Predicated region
        $region113: #{mimo_sequential_fused.1} parent=75 // pred_check
          %p3708 = pneg %p390
        $region114: #{mimo_sequential_fused.1} parent=75 // pred_check_branch
          %3710 = sbr.rel (%p3708) target = $region116
        $region115: #{mimo_sequential_fused.1} parent=75 // pred_region
          %s3711 = smul.u32 64, %s42
          %s3712 = ssub.s32 75, %s3711
          %p3713 = scmp.lt.s32.totalorder %s3712, 64
          %s3714 = scalar_select %p3713, %s3712, 64
          %s3715 = smul.u32 128, %s3714
          %s3717 = ssub.s32 8192, %s3715
          %3718 = vsyncadd %s3682, %s3717
          %p3719 = scmp.ne.s32.totalorder 0, %s3715
          %s3720 = smul.addr %s3711, 128
          %s3721 = scalar_lea.hbm %s15, %s3720
          %s3722 = smul.u32 8, %s3714
          %s3723 = sshll.u32 %s3685, 4
          %s3724 = int_to_ptr.vmem [resolvable:$true] %s3723
          %s3725 = sshll.u32 %s3722, 4
          %3729 = dma.vmem_to_hbm [thread:$0]  (%p3719), %s3724, %s3725, %s3721, %s3682, 128, 128, 8
        $region116: #{mimo_sequential_fused.1} parent=75 // pred_fallthru
          _
      $region76: #{mimo_sequential_fused.1} parent=5 // pred_fallthru
        _
      %p3730 = scmp.le.s32.totalorder 2, %s37
      // Predicated region
      $region117: #{mimo_sequential_fused.1} parent=5 // pred_check
        %p3731 = pneg %p3730
      $region118: #{mimo_sequential_fused.1} parent=5 // pred_check_branch
        %3733 = sbr.rel (%p3731) target = $region120
      $region119: #{mimo_sequential_fused.1} parent=5 // pred_region
        %s3734 = ssub.s32 %s37, 2
        // Predicated region
        $region121: #{mimo_sequential_fused.1} parent=119 // pred_check
          %p3735 = pneg %p370
        $region122: #{mimo_sequential_fused.1} parent=119 // pred_check_branch
          %3737 = sbr.rel (%p3735) target = $region124
        $region123: #{mimo_sequential_fused.1} parent=119 // pred_region
          %s3738 = sand.u32 %s355, 1
          %s3739 = scalar_lea.sflag [#allocation4], %s3738
          %s3740 = sand.u32 %s355, 1
          %s3741 = smul.addr %s3740, 512
          %s3742 = scalar_lea.vmem [#allocation16], %s3741
          %3743 = dma.done %s3739, 8192
        $region124: #{mimo_sequential_fused.1} parent=119 // pred_fallthru
          _
        // Predicated region
        $region125: #{mimo_sequential_fused.1} parent=119 // pred_check
          %p3744 = pneg %p396
        $region126: #{mimo_sequential_fused.1} parent=119 // pred_check_branch
          %3746 = sbr.rel (%p3744) target = $region128
        $region127: #{mimo_sequential_fused.1} parent=119 // pred_region
          %s3747 = sand.u32 %s381, 1
          %s3748 = scalar_lea.sflag [#allocation18], %s3747
          %s3749 = sand.u32 %s381, 1
          %s3750 = smul.addr %s3749, 512
          %s3751 = scalar_lea.vmem [#allocation17], %s3750
          %3752 = dma.done %s3748, 8192
        $region128: #{mimo_sequential_fused.1} parent=119 // pred_fallthru
          _
      $region120: #{mimo_sequential_fused.1} parent=5 // pred_fallthru
        _
    $region6: #{mimo_sequential_fused.1} parent=1 // loop_footer
      %s41 = sadd.s32 1, %s37
    $region7: #{mimo_sequential_fused.1} parent=1 // loop_footer_branch
      %36 = sbr.rel target = $region3
    $region8: #{mimo_sequential_fused.1} parent=1 // loop_exit
      _
    %3753 = vsyncpa [#allocation3], 1
    %s3754 = scalar_lea.sflag [#allocation3], 1
    %3755 = vsyncpa %s3754, 1
    %3756 = vsyncpa [#allocation6], 1
    %s3757 = scalar_lea.sflag [#allocation6], 1
    %3758 = vsyncpa %s3757, 1
    %3759 = vsyncpa [#allocation9], 1
    %3760 = vsyncpa [#allocation12], 1
    %3761 = vsyncpa [#allocation15], 1
    %3762 = vsyncpa [#allocation4], 1
    %s3763 = scalar_lea.sflag [#allocation4], 1
    %3764 = vsyncpa %s3763, 1
    %3765 = vsyncpa [#allocation18], 1
    %s3766 = scalar_lea.sflag [#allocation18], 1
    %3767 = vsyncpa %s3766, 1

</llo_original>
